<compile_context>
chip_gen: v7x
topology: tpu7x:2x2x1
jax: 0.10.0
libtpu: 0.0.40
codegen_flags: <defaults>
</compile_context>

<pallas_src>
import jax
import jax.numpy as jnp
from jax.experimental import pallas as pl

# ---- model hyper-params (small, consistent with the module) ----
VOCAB = 50
MAX_LEN = 16
EMBED = 32
HEADS = 4
HEAD_DIM = EMBED // HEADS            # 8
FWD_EXP = 4
HIDDEN = FWD_EXP * EMBED             # 128
NUM_LAYERS = 2
EPS = 1e-5                           # nn.LayerNorm default
LANES = 128                          # pad small params / fused QKV to 128 lanes


def _layer_norm(x, gamma, beta):
    mean = jnp.mean(x, axis=-1, keepdims=True)
    var = jnp.mean((x - mean) ** 2, axis=-1, keepdims=True)
    return (x - mean) * jax.lax.rsqrt(var + EPS) * gamma + beta


def encoder_layers_kernel(x_ref, bias_ref, wqkv_ref, wo_ref, w1_ref, w2_ref,
                          rows_ref, o_ref):
    """Runs both transformer blocks over the whole (N*S, E) activation slab."""
    x = x_ref[...]                    # (NS, E)   float32
    bias = bias_ref[...]              # (NS, NS)  additive mask bias (0 / -1e20)
    scale = 1.0 / jnp.sqrt(jnp.float32(EMBED))   # PyTorch uses 1/sqrt(embed_size)

    for l in range(NUM_LAYERS):       # static unroll over layers
        wqkv = wqkv_ref[l]            # (E, 128): [Wq_bd | Wk_bd | Wv_bd | pad]
        wo = wo_ref[l]                # (E, E)
        w1 = w1_ref[l]                # (E, H)
        w2 = w2_ref[l]                # (H, E)
        rows = rows_ref[l]            # (8, 128) packed row params

        bo = rows[0:1, :EMBED]
        g1 = rows[1:2, :EMBED]
        be1 = rows[2:3, :EMBED]
        b1 = rows[3:4, :HIDDEN]
        b2 = rows[4:5, :EMBED]
        g2 = rows[5:6, :EMBED]
        be2 = rows[6:7, :EMBED]

        # Fused, lane-dense Q/K/V projection: one matmul for all heads.
        qkv = jnp.dot(x, wqkv, preferred_element_type=jnp.float32)   # (NS, 128)

        head_outs = []
        for h in range(HEADS):        # static unroll; only tiny (S,S) work left
            lo = h * HEAD_DIM
            qh = qkv[:, lo:lo + HEAD_DIM]                            # (NS, D)
            kh = qkv[:, EMBED + lo:EMBED + lo + HEAD_DIM]            # (NS, D)
            vh = qkv[:, 2 * EMBED + lo:2 * EMBED + lo + HEAD_DIM]    # (NS, D)

            energy = jnp.dot(qh, kh.T, preferred_element_type=jnp.float32)
            att = (energy + bias) * scale                            # (NS, NS)
            att = att - jnp.max(att, axis=-1, keepdims=True)
            att = jnp.exp(att)
            att = att * pl.reciprocal(jnp.sum(att, axis=-1, keepdims=True),
                                      approx=True)
            head_outs.append(
                jnp.dot(att, vh, preferred_element_type=jnp.float32))  # (NS, D)

        concat = jnp.concatenate(head_outs, axis=-1)                 # (NS, E)

        # fc_out + residual + layernorm1
        fc = jnp.dot(concat, wo, preferred_element_type=jnp.float32) + bo
        y = _layer_norm(fc + x, g1, be1)

        # feed-forward + residual + layernorm2
        hidden = jnp.dot(y, w1, preferred_element_type=jnp.float32) + b1
        hidden = jnp.maximum(hidden, 0.0)
        ff = jnp.dot(hidden, w2, preferred_element_type=jnp.float32) + b2
        x = _layer_norm(ff + y, g2, be2)

    o_ref[...] = x.astype(o_ref.dtype)


def init_params(key):
    """Deterministic synthetic weights matching the PyTorch module shapes."""
    keys = jax.random.split(key, 2 + NUM_LAYERS)
    word_emb = 0.02 * jax.random.normal(keys[0], (VOCAB, EMBED), jnp.float32)
    pos_emb = 0.02 * jax.random.normal(keys[1], (MAX_LEN, EMBED), jnp.float32)

    layers = []
    for l in range(NUM_LAYERS):
        ks = jax.random.split(keys[2 + l], 8)
        D, E, H = HEAD_DIM, EMBED, HIDDEN
        # nn.Linear weights are (out, in).
        wv = 0.1 * jax.random.normal(ks[0], (D, D), jnp.float32)
        wk = 0.1 * jax.random.normal(ks[1], (D, D), jnp.float32)
        wq = 0.1 * jax.random.normal(ks[2], (D, D), jnp.float32)
        wo = 0.1 * jax.random.normal(ks[3], (E, E), jnp.float32)
        bo = 0.01 * jax.random.normal(ks[4], (E,), jnp.float32)
        w1 = 0.1 * jax.random.normal(ks[5], (H, E), jnp.float32)
        b1 = 0.01 * jax.random.normal(ks[6], (H,), jnp.float32)
        w2 = 0.1 * jax.random.normal(ks[7], (E, H), jnp.float32)
        b2 = jnp.zeros((E,), jnp.float32)
        layers.append(dict(
            wv=wv, wk=wk, wq=wq, wo=wo, bo=bo, w1=w1, b1=b1, w2=w2, b2=b2,
            g1=jnp.ones((E,), jnp.float32), be1=jnp.zeros((E,), jnp.float32),
            g2=jnp.ones((E,), jnp.float32), be2=jnp.zeros((E,), jnp.float32)))
    return word_emb, pos_emb, layers


def fuse_params(layers):
    """Build the kernel-friendly fused / stacked parameter arrays."""
    eye_h = jnp.eye(HEADS, dtype=jnp.float32)

    def pad_row(v):
        return jnp.pad(v.astype(jnp.float32), (0, LANES - v.shape[0]))

    wqkv_l, wo_l, w1_l, w2_l, rows_l = [], [], [], [], []
    for p in layers:
        # nn.Linear computes x @ W.T; the SAME (D,D) weight is applied to every
        # head, so the fused projection is block_diag(W.T,...) = kron(I_H, W.T).
        bd_q = jnp.kron(eye_h, p["wq"].T)
        bd_k = jnp.kron(eye_h, p["wk"].T)
        bd_v = jnp.kron(eye_h, p["wv"].T)
        wqkv = jnp.concatenate([bd_q, bd_k, bd_v], axis=1)            # (E, 3E)
        wqkv = jnp.pad(wqkv, ((0, 0), (0, LANES - 3 * EMBED)))        # (E, 128)
        wqkv_l.append(wqkv)
        wo_l.append(p["wo"].T)                                        # (E, E)
        w1_l.append(p["w1"].T)                                        # (E, H)
        w2_l.append(p["w2"].T)                                        # (H, E)
        rows_l.append(jnp.stack([
            pad_row(p["bo"]), pad_row(p["g1"]), pad_row(p["be1"]),
            pad_row(p["b1"]), pad_row(p["b2"]), pad_row(p["g2"]),
            pad_row(p["be2"]), jnp.zeros((LANES,), jnp.float32)], axis=0))
    return dict(wqkv=jnp.stack(wqkv_l), wo=jnp.stack(wo_l),
                w1=jnp.stack(w1_l), w2=jnp.stack(w2_l),
                rows=jnp.stack(rows_l))


@jax.jit
def encoder_forward(tokens, mask, word_emb, pos_emb, fused):
    N, S = tokens.shape
    # Embedding lookups are gather glue (plain JAX); dropout is identity (eval).
    positions = jnp.broadcast_to(jnp.arange(S, dtype=jnp.int32), (N, S))
    x = jnp.take(word_emb, tokens, axis=0) + jnp.take(pos_emb, positions, axis=0)
    x2d = x.reshape(N * S, EMBED).astype(jnp.float32)

    # Additive attention bias: block-diagonal over samples (prevents
    # cross-sample attention after folding batch onto sublanes) and -1e20 on
    # masked keys (matches masked_fill(mask == 0, -1e20) before the 1/sqrt(E)).
    sample_id = jnp.repeat(jnp.arange(N, dtype=jnp.int32), S)          # (N*S,)
    same = sample_id[:, None] == sample_id[None, :]
    key_keep = mask.reshape(N * S) != 0.0
    bias = jnp.where(same & key_keep[None, :], 0.0, -1e20).astype(jnp.float32)

    out2d = pl.pallas_call(
        encoder_layers_kernel,
        out_shape=jax.ShapeDtypeStruct((N * S, EMBED), jnp.float32),
    )(x2d, bias, fused["wqkv"], fused["wo"], fused["w1"], fused["w2"],
      fused["rows"])
    return out2d.reshape(N, S, EMBED)


if __name__ == "__main__":
    key = jax.random.PRNGKey(0)
    k_param, k_tok = jax.random.split(key)

    N, S = 2, 8
    word_emb, pos_emb, layers = init_params(k_param)
    fused = fuse_params(layers)
    tokens = jax.random.randint(k_tok, (N, S), 0, VOCAB, dtype=jnp.int32)
    mask = jnp.ones((N, S), jnp.float32).at[1, -2:].set(0.0)  # mask last 2 keys of sample 1

    out = encoder_forward(tokens, mask, word_emb, pos_emb, fused)
    jax.block_until_ready(out)
    assert out.shape == (N, S, EMBED) and out.dtype == jnp.float32
    print("KERNEL_OK")
</pallas_src>

<mosaic_0001>
module attributes {stable_mosaic.version = 11 : i64} {
  func.func @encoder_layers_kernel(%arg0: memref<16x32xf32, #tpu.memory_space<vmem>>, %arg1: memref<16x16xf32, #tpu.memory_space<vmem>>, %arg2: memref<2x32x128xf32, #tpu.memory_space<vmem>>, %arg3: memref<2x32x32xf32, #tpu.memory_space<vmem>>, %arg4: memref<2x32x128xf32, #tpu.memory_space<vmem>>, %arg5: memref<2x128x32xf32, #tpu.memory_space<vmem>>, %arg6: memref<2x8x128xf32, #tpu.memory_space<vmem>>, %arg7: memref<16x32xf32, #tpu.memory_space<vmem>>) attributes {dimension_semantics = [], scalar_prefetch = 0 : i64, scratch_operands = 0 : i64, tpu.core_type = #tpu.core_type<tc>} {
    %c0 = arith.constant 0 : index
    %c0_0 = arith.constant 0 : index
    %0 = vector.load %arg0[%c0, %c0_0] : memref<16x32xf32, #tpu.memory_space<vmem>>, vector<16x32xf32>
    %c0_1 = arith.constant 0 : index
    %c0_2 = arith.constant 0 : index
    %1 = vector.load %arg1[%c0_1, %c0_2] : memref<16x16xf32, #tpu.memory_space<vmem>>, vector<16x16xf32>
    %cst = arith.constant 3.200000e+01 : f32
    %2 = math.sqrt %cst : f32
    %cst_3 = arith.constant 1.000000e+00 : f32
    %3 = arith.divf %cst_3, %2 : f32
    %c0_4 = arith.constant 0 : index
    %c0_5 = arith.constant 0 : index
    %c0_6 = arith.constant 0 : index
    %4 = vector.load %arg2[%c0_4, %c0_5, %c0_6] : memref<2x32x128xf32, #tpu.memory_space<vmem>>, vector<1x32x128xf32>
    %5 = vector.shape_cast %4 : vector<1x32x128xf32> to vector<32x128xf32>
    %c0_7 = arith.constant 0 : index
    %c0_8 = arith.constant 0 : index
    %c0_9 = arith.constant 0 : index
    %6 = vector.load %arg3[%c0_7, %c0_8, %c0_9] : memref<2x32x32xf32, #tpu.memory_space<vmem>>, vector<1x32x32xf32>
    %7 = vector.shape_cast %6 : vector<1x32x32xf32> to vector<32x32xf32>
    %c0_10 = arith.constant 0 : index
    %c0_11 = arith.constant 0 : index
    %c0_12 = arith.constant 0 : index
    %8 = vector.load %arg4[%c0_10, %c0_11, %c0_12] : memref<2x32x128xf32, #tpu.memory_space<vmem>>, vector<1x32x128xf32>
    %9 = vector.shape_cast %8 : vector<1x32x128xf32> to vector<32x128xf32>
    %c0_13 = arith.constant 0 : index
    %c0_14 = arith.constant 0 : index
    %c0_15 = arith.constant 0 : index
    %10 = vector.load %arg5[%c0_13, %c0_14, %c0_15] : memref<2x128x32xf32, #tpu.memory_space<vmem>>, vector<1x128x32xf32>
    %11 = vector.shape_cast %10 : vector<1x128x32xf32> to vector<128x32xf32>
    %c0_16 = arith.constant 0 : index
    %c0_17 = arith.constant 0 : index
    %c0_18 = arith.constant 0 : index
    %12 = vector.load %arg6[%c0_16, %c0_17, %c0_18] : memref<2x8x128xf32, #tpu.memory_space<vmem>>, vector<1x8x128xf32>
    %13 = vector.shape_cast %12 : vector<1x8x128xf32> to vector<8x128xf32>
    %14 = vector.extract_strided_slice %13 {offsets = [0, 0], sizes = [1, 32], strides = [1, 1]} : vector<8x128xf32> to vector<1x32xf32>
    %15 = vector.extract_strided_slice %13 {offsets = [1, 0], sizes = [1, 32], strides = [1, 1]} : vector<8x128xf32> to vector<1x32xf32>
    %16 = vector.extract_strided_slice %13 {offsets = [2, 0], sizes = [1, 32], strides = [1, 1]} : vector<8x128xf32> to vector<1x32xf32>
    %17 = vector.extract_strided_slice %13 {offsets = [3, 0], sizes = [1, 128], strides = [1, 1]} : vector<8x128xf32> to vector<1x128xf32>
    %18 = vector.extract_strided_slice %13 {offsets = [4, 0], sizes = [1, 32], strides = [1, 1]} : vector<8x128xf32> to vector<1x32xf32>
    %19 = vector.extract_strided_slice %13 {offsets = [5, 0], sizes = [1, 32], strides = [1, 1]} : vector<8x128xf32> to vector<1x32xf32>
    %20 = vector.extract_strided_slice %13 {offsets = [6, 0], sizes = [1, 32], strides = [1, 1]} : vector<8x128xf32> to vector<1x32xf32>
    %cst_19 = arith.constant dense<0.000000e+00> : vector<16x128xf32>
    %21 = tpu.matmul %0, %5, %cst_19 {dimension_numbers = #tpu.dot_dimension_numbers<[1], [0], [0], [1], [0, 0, 1, 1], [], []>} : vector<16x32xf32>, vector<32x128xf32>, vector<16x128xf32> -> vector<16x128xf32>
    %22 = vector.extract_strided_slice %21 {offsets = [0, 0], sizes = [16, 8], strides = [1, 1]} : vector<16x128xf32> to vector<16x8xf32>
    %23 = vector.extract_strided_slice %21 {offsets = [0, 32], sizes = [16, 8], strides = [1, 1]} : vector<16x128xf32> to vector<16x8xf32>
    %24 = vector.extract_strided_slice %21 {offsets = [0, 64], sizes = [16, 8], strides = [1, 1]} : vector<16x128xf32> to vector<16x8xf32>
    %25 = tpu.transpose %23, [1, 0] : vector<16x8xf32> -> vector<8x16xf32>
    %cst_20 = arith.constant dense<0.000000e+00> : vector<16x16xf32>
    %26 = tpu.matmul %22, %25, %cst_20 {dimension_numbers = #tpu.dot_dimension_numbers<[1], [0], [0], [1], [0, 0, 1, 1], [], []>} : vector<16x8xf32>, vector<8x16xf32>, vector<16x16xf32> -> vector<16x16xf32>
    %27 = arith.addf %26, %1 : vector<16x16xf32>
    %28 = vector.broadcast %3 : f32 to vector<16x16xf32>
    %29 = arith.mulf %27, %28 : vector<16x16xf32>
    %cst_21 = arith.constant dense<0xFF800000> : vector<16xf32>
    %30 = vector.multi_reduction <maximumf>, %29, %cst_21 [1] : vector<16x16xf32> to vector<16xf32>
    %31 = vector.shape_cast %30 : vector<16xf32> to vector<16x1xf32>
    %32 = vector.broadcast %31 : vector<16x1xf32> to vector<16x16xf32>
    %33 = arith.subf %29, %32 : vector<16x16xf32>
    %34 = math.exp %33 : vector<16x16xf32>
    %cst_22 = arith.constant dense<0.000000e+00> : vector<16xf32>
    %35 = vector.multi_reduction <add>, %34, %cst_22 [1] : vector<16x16xf32> to vector<16xf32>
    %36 = vector.shape_cast %35 : vector<16xf32> to vector<16x1xf32>
    %37 = tpu.reciprocal %36 {approx = true} : vector<16x1xf32> -> vector<16x1xf32>
    %38 = vector.broadcast %37 : vector<16x1xf32> to vector<16x16xf32>
    %39 = arith.mulf %34, %38 : vector<16x16xf32>
    %cst_23 = arith.constant dense<0.000000e+00> : vector<16x8xf32>
    %40 = tpu.matmul %39, %24, %cst_23 {dimension_numbers = #tpu.dot_dimension_numbers<[1], [0], [0], [1], [0, 0, 1, 1], [], []>} : vector<16x16xf32>, vector<16x8xf32>, vector<16x8xf32> -> vector<16x8xf32>
    %41 = vector.extract_strided_slice %21 {offsets = [0, 8], sizes = [16, 8], strides = [1, 1]} : vector<16x128xf32> to vector<16x8xf32>
    %42 = vector.extract_strided_slice %21 {offsets = [0, 40], sizes = [16, 8], strides = [1, 1]} : vector<16x128xf32> to vector<16x8xf32>
    %43 = vector.extract_strided_slice %21 {offsets = [0, 72], sizes = [16, 8], strides = [1, 1]} : vector<16x128xf32> to vector<16x8xf32>
    %44 = tpu.transpose %42, [1, 0] : vector<16x8xf32> -> vector<8x16xf32>
    %cst_24 = arith.constant dense<0.000000e+00> : vector<16x16xf32>
    %45 = tpu.matmul %41, %44, %cst_24 {dimension_numbers = #tpu.dot_dimension_numbers<[1], [0], [0], [1], [0, 0, 1, 1], [], []>} : vector<16x8xf32>, vector<8x16xf32>, vector<16x16xf32> -> vector<16x16xf32>
    %46 = arith.addf %45, %1 : vector<16x16xf32>
    %47 = vector.broadcast %3 : f32 to vector<16x16xf32>
    %48 = arith.mulf %46, %47 : vector<16x16xf32>
    %cst_25 = arith.constant dense<0xFF800000> : vector<16xf32>
    %49 = vector.multi_reduction <maximumf>, %48, %cst_25 [1] : vector<16x16xf32> to vector<16xf32>
    %50 = vector.shape_cast %49 : vector<16xf32> to vector<16x1xf32>
    %51 = vector.broadcast %50 : vector<16x1xf32> to vector<16x16xf32>
    %52 = arith.subf %48, %51 : vector<16x16xf32>
    %53 = math.exp %52 : vector<16x16xf32>
    %cst_26 = arith.constant dense<0.000000e+00> : vector<16xf32>
    %54 = vector.multi_reduction <add>, %53, %cst_26 [1] : vector<16x16xf32> to vector<16xf32>
    %55 = vector.shape_cast %54 : vector<16xf32> to vector<16x1xf32>
    %56 = tpu.reciprocal %55 {approx = true} : vector<16x1xf32> -> vector<16x1xf32>
    %57 = vector.broadcast %56 : vector<16x1xf32> to vector<16x16xf32>
    %58 = arith.mulf %53, %57 : vector<16x16xf32>
    %cst_27 = arith.constant dense<0.000000e+00> : vector<16x8xf32>
    %59 = tpu.matmul %58, %43, %cst_27 {dimension_numbers = #tpu.dot_dimension_numbers<[1], [0], [0], [1], [0, 0, 1, 1], [], []>} : vector<16x16xf32>, vector<16x8xf32>, vector<16x8xf32> -> vector<16x8xf32>
    %60 = vector.extract_strided_slice %21 {offsets = [0, 16], sizes = [16, 8], strides = [1, 1]} : vector<16x128xf32> to vector<16x8xf32>
    %61 = vector.extract_strided_slice %21 {offsets = [0, 48], sizes = [16, 8], strides = [1, 1]} : vector<16x128xf32> to vector<16x8xf32>
    %62 = vector.extract_strided_slice %21 {offsets = [0, 80], sizes = [16, 8], strides = [1, 1]} : vector<16x128xf32> to vector<16x8xf32>
    %63 = tpu.transpose %61, [1, 0] : vector<16x8xf32> -> vector<8x16xf32>
    %cst_28 = arith.constant dense<0.000000e+00> : vector<16x16xf32>
    %64 = tpu.matmul %60, %63, %cst_28 {dimension_numbers = #tpu.dot_dimension_numbers<[1], [0], [0], [1], [0, 0, 1, 1], [], []>} : vector<16x8xf32>, vector<8x16xf32>, vector<16x16xf32> -> vector<16x16xf32>
    %65 = arith.addf %64, %1 : vector<16x16xf32>
    %66 = vector.broadcast %3 : f32 to vector<16x16xf32>
    %67 = arith.mulf %65, %66 : vector<16x16xf32>
    %cst_29 = arith.constant dense<0xFF800000> : vector<16xf32>
    %68 = vector.multi_reduction <maximumf>, %67, %cst_29 [1] : vector<16x16xf32> to vector<16xf32>
    %69 = vector.shape_cast %68 : vector<16xf32> to vector<16x1xf32>
    %70 = vector.broadcast %69 : vector<16x1xf32> to vector<16x16xf32>
    %71 = arith.subf %67, %70 : vector<16x16xf32>
    %72 = math.exp %71 : vector<16x16xf32>
    %cst_30 = arith.constant dense<0.000000e+00> : vector<16xf32>
    %73 = vector.multi_reduction <add>, %72, %cst_30 [1] : vector<16x16xf32> to vector<16xf32>
    %74 = vector.shape_cast %73 : vector<16xf32> to vector<16x1xf32>
    %75 = tpu.reciprocal %74 {approx = true} : vector<16x1xf32> -> vector<16x1xf32>
    %76 = vector.broadcast %75 : vector<16x1xf32> to vector<16x16xf32>
    %77 = arith.mulf %72, %76 : vector<16x16xf32>
    %cst_31 = arith.constant dense<0.000000e+00> : vector<16x8xf32>
    %78 = tpu.matmul %77, %62, %cst_31 {dimension_numbers = #tpu.dot_dimension_numbers<[1], [0], [0], [1], [0, 0, 1, 1], [], []>} : vector<16x16xf32>, vector<16x8xf32>, vector<16x8xf32> -> vector<16x8xf32>
    %79 = vector.extract_strided_slice %21 {offsets = [0, 24], sizes = [16, 8], strides = [1, 1]} : vector<16x128xf32> to vector<16x8xf32>
    %80 = vector.extract_strided_slice %21 {offsets = [0, 56], sizes = [16, 8], strides = [1, 1]} : vector<16x128xf32> to vector<16x8xf32>
    %81 = vector.extract_strided_slice %21 {offsets = [0, 88], sizes = [16, 8], strides = [1, 1]} : vector<16x128xf32> to vector<16x8xf32>
    %82 = tpu.transpose %80, [1, 0] : vector<16x8xf32> -> vector<8x16xf32>
    %cst_32 = arith.constant dense<0.000000e+00> : vector<16x16xf32>
    %83 = tpu.matmul %79, %82, %cst_32 {dimension_numbers = #tpu.dot_dimension_numbers<[1], [0], [0], [1], [0, 0, 1, 1], [], []>} : vector<16x8xf32>, vector<8x16xf32>, vector<16x16xf32> -> vector<16x16xf32>
    %84 = arith.addf %83, %1 : vector<16x16xf32>
    %85 = vector.broadcast %3 : f32 to vector<16x16xf32>
    %86 = arith.mulf %84, %85 : vector<16x16xf32>
    %cst_33 = arith.constant dense<0xFF800000> : vector<16xf32>
    %87 = vector.multi_reduction <maximumf>, %86, %cst_33 [1] : vector<16x16xf32> to vector<16xf32>
    %88 = vector.shape_cast %87 : vector<16xf32> to vector<16x1xf32>
    %89 = vector.broadcast %88 : vector<16x1xf32> to vector<16x16xf32>
    %90 = arith.subf %86, %89 : vector<16x16xf32>
    %91 = math.exp %90 : vector<16x16xf32>
    %cst_34 = arith.constant dense<0.000000e+00> : vector<16xf32>
    %92 = vector.multi_reduction <add>, %91, %cst_34 [1] : vector<16x16xf32> to vector<16xf32>
    %93 = vector.shape_cast %92 : vector<16xf32> to vector<16x1xf32>
    %94 = tpu.reciprocal %93 {approx = true} : vector<16x1xf32> -> vector<16x1xf32>
    %95 = vector.broadcast %94 : vector<16x1xf32> to vector<16x16xf32>
    %96 = arith.mulf %91, %95 : vector<16x16xf32>
    %cst_35 = arith.constant dense<0.000000e+00> : vector<16x8xf32>
    %97 = tpu.matmul %96, %81, %cst_35 {dimension_numbers = #tpu.dot_dimension_numbers<[1], [0], [0], [1], [0, 0, 1, 1], [], []>} : vector<16x16xf32>, vector<16x8xf32>, vector<16x8xf32> -> vector<16x8xf32>
    %98 = tpu.concatenate %40, %59, %78, %97 in 1 : vector<16x8xf32>, vector<16x8xf32>, vector<16x8xf32>, vector<16x8xf32> -> vector<16x32xf32>
    %cst_36 = arith.constant dense<0.000000e+00> : vector<16x32xf32>
    %99 = tpu.matmul %98, %7, %cst_36 {dimension_numbers = #tpu.dot_dimension_numbers<[1], [0], [0], [1], [0, 0, 1, 1], [], []>} : vector<16x32xf32>, vector<32x32xf32>, vector<16x32xf32> -> vector<16x32xf32>
    %100 = vector.broadcast %14 : vector<1x32xf32> to vector<16x32xf32>
    %101 = arith.addf %99, %100 : vector<16x32xf32>
    %102 = arith.addf %101, %0 : vector<16x32xf32>
    %cst_37 = arith.constant dense<0.000000e+00> : vector<16xf32>
    %103 = vector.multi_reduction <add>, %102, %cst_37 [1] : vector<16x32xf32> to vector<16xf32>
    %104 = vector.shape_cast %103 : vector<16xf32> to vector<16x1xf32>
    %cst_38 = arith.constant 3.200000e+01 : f32
    %105 = vector.broadcast %cst_38 : f32 to vector<16x1xf32>
    %106 = arith.divf %104, %105 : vector<16x1xf32>
    %107 = vector.broadcast %106 : vector<16x1xf32> to vector<16x32xf32>
    %108 = arith.subf %102, %107 : vector<16x32xf32>
    %109 = arith.mulf %108, %108 : vector<16x32xf32>
    %cst_39 = arith.constant dense<0.000000e+00> : vector<16xf32>
    %110 = vector.multi_reduction <add>, %109, %cst_39 [1] : vector<16x32xf32> to vector<16xf32>
    %111 = vector.shape_cast %110 : vector<16xf32> to vector<16x1xf32>
    %cst_40 = arith.constant 3.200000e+01 : f32
    %112 = vector.broadcast %cst_40 : f32 to vector<16x1xf32>
    %113 = arith.divf %111, %112 : vector<16x1xf32>
    %114 = vector.broadcast %106 : vector<16x1xf32> to vector<16x32xf32>
    %115 = arith.subf %102, %114 : vector<16x32xf32>
    %cst_41 = arith.constant 9.99999974E-6 : f32
    %116 = vector.broadcast %cst_41 : f32 to vector<16x1xf32>
    %117 = arith.addf %113, %116 : vector<16x1xf32>
    %118 = math.rsqrt %117 : vector<16x1xf32>
    %119 = vector.broadcast %118 : vector<16x1xf32> to vector<16x32xf32>
    %120 = arith.mulf %115, %119 : vector<16x32xf32>
    %121 = vector.broadcast %15 : vector<1x32xf32> to vector<16x32xf32>
    %122 = arith.mulf %120, %121 : vector<16x32xf32>
    %123 = vector.broadcast %16 : vector<1x32xf32> to vector<16x32xf32>
    %124 = arith.addf %122, %123 : vector<16x32xf32>
    %cst_42 = arith.constant dense<0.000000e+00> : vector<16x128xf32>
    %125 = tpu.matmul %124, %9, %cst_42 {dimension_numbers = #tpu.dot_dimension_numbers<[1], [0], [0], [1], [0, 0, 1, 1], [], []>} : vector<16x32xf32>, vector<32x128xf32>, vector<16x128xf32> -> vector<16x128xf32>
    %126 = vector.broadcast %17 : vector<1x128xf32> to vector<16x128xf32>
    %127 = arith.addf %125, %126 : vector<16x128xf32>
    %cst_43 = arith.constant 0.000000e+00 : f32
    %128 = vector.broadcast %cst_43 : f32 to vector<16x128xf32>
    %129 = arith.maximumf %127, %128 : vector<16x128xf32>
    %cst_44 = arith.constant dense<0.000000e+00> : vector<16x32xf32>
    %130 = tpu.matmul %129, %11, %cst_44 {dimension_numbers = #tpu.dot_dimension_numbers<[1], [0], [0], [1], [0, 0, 1, 1], [], []>} : vector<16x128xf32>, vector<128x32xf32>, vector<16x32xf32> -> vector<16x32xf32>
    %131 = vector.broadcast %18 : vector<1x32xf32> to vector<16x32xf32>
    %132 = arith.addf %130, %131 : vector<16x32xf32>
    %133 = arith.addf %132, %124 : vector<16x32xf32>
    %cst_45 = arith.constant dense<0.000000e+00> : vector<16xf32>
    %134 = vector.multi_reduction <add>, %133, %cst_45 [1] : vector<16x32xf32> to vector<16xf32>
    %135 = vector.shape_cast %134 : vector<16xf32> to vector<16x1xf32>
    %cst_46 = arith.constant 3.200000e+01 : f32
    %136 = vector.broadcast %cst_46 : f32 to vector<16x1xf32>
    %137 = arith.divf %135, %136 : vector<16x1xf32>
    %138 = vector.broadcast %137 : vector<16x1xf32> to vector<16x32xf32>
    %139 = arith.subf %133, %138 : vector<16x32xf32>
    %140 = arith.mulf %139, %139 : vector<16x32xf32>
    %cst_47 = arith.constant dense<0.000000e+00> : vector<16xf32>
    %141 = vector.multi_reduction <add>, %140, %cst_47 [1] : vector<16x32xf32> to vector<16xf32>
    %142 = vector.shape_cast %141 : vector<16xf32> to vector<16x1xf32>
    %cst_48 = arith.constant 3.200000e+01 : f32
    %143 = vector.broadcast %cst_48 : f32 to vector<16x1xf32>
    %144 = arith.divf %142, %143 : vector<16x1xf32>
    %145 = vector.broadcast %137 : vector<16x1xf32> to vector<16x32xf32>
    %146 = arith.subf %133, %145 : vector<16x32xf32>
    %cst_49 = arith.constant 9.99999974E-6 : f32
    %147 = vector.broadcast %cst_49 : f32 to vector<16x1xf32>
    %148 = arith.addf %144, %147 : vector<16x1xf32>
    %149 = math.rsqrt %148 : vector<16x1xf32>
    %150 = vector.broadcast %149 : vector<16x1xf32> to vector<16x32xf32>
    %151 = arith.mulf %146, %150 : vector<16x32xf32>
    %152 = vector.broadcast %19 : vector<1x32xf32> to vector<16x32xf32>
    %153 = arith.mulf %151, %152 : vector<16x32xf32>
    %154 = vector.broadcast %20 : vector<1x32xf32> to vector<16x32xf32>
    %155 = arith.addf %153, %154 : vector<16x32xf32>
    %c1 = arith.constant 1 : index
    %c0_50 = arith.constant 0 : index
    %c0_51 = arith.constant 0 : index
    %156 = vector.load %arg2[%c1, %c0_50, %c0_51] : memref<2x32x128xf32, #tpu.memory_space<vmem>>, vector<1x32x128xf32>
    %157 = vector.shape_cast %156 : vector<1x32x128xf32> to vector<32x128xf32>
    %c1_52 = arith.constant 1 : index
    %c0_53 = arith.constant 0 : index
    %c0_54 = arith.constant 0 : index
    %158 = vector.load %arg3[%c1_52, %c0_53, %c0_54] : memref<2x32x32xf32, #tpu.memory_space<vmem>>, vector<1x32x32xf32>
    %159 = vector.shape_cast %158 : vector<1x32x32xf32> to vector<32x32xf32>
    %c1_55 = arith.constant 1 : index
    %c0_56 = arith.constant 0 : index
    %c0_57 = arith.constant 0 : index
    %160 = vector.load %arg4[%c1_55, %c0_56, %c0_57] : memref<2x32x128xf32, #tpu.memory_space<vmem>>, vector<1x32x128xf32>
    %161 = vector.shape_cast %160 : vector<1x32x128xf32> to vector<32x128xf32>
    %c1_58 = arith.constant 1 : index
    %c0_59 = arith.constant 0 : index
    %c0_60 = arith.constant 0 : index
    %162 = vector.load %arg5[%c1_58, %c0_59, %c0_60] : memref<2x128x32xf32, #tpu.memory_space<vmem>>, vector<1x128x32xf32>
    %163 = vector.shape_cast %162 : vector<1x128x32xf32> to vector<128x32xf32>
    %c1_61 = arith.constant 1 : index
    %c0_62 = arith.constant 0 : index
    %c0_63 = arith.constant 0 : index
    %164 = vector.load %arg6[%c1_61, %c0_62, %c0_63] : memref<2x8x128xf32, #tpu.memory_space<vmem>>, vector<1x8x128xf32>
    %165 = vector.shape_cast %164 : vector<1x8x128xf32> to vector<8x128xf32>
    %166 = vector.extract_strided_slice %165 {offsets = [0, 0], sizes = [1, 32], strides = [1, 1]} : vector<8x128xf32> to vector<1x32xf32>
    %167 = vector.extract_strided_slice %165 {offsets = [1, 0], sizes = [1, 32], strides = [1, 1]} : vector<8x128xf32> to vector<1x32xf32>
    %168 = vector.extract_strided_slice %165 {offsets = [2, 0], sizes = [1, 32], strides = [1, 1]} : vector<8x128xf32> to vector<1x32xf32>
    %169 = vector.extract_strided_slice %165 {offsets = [3, 0], sizes = [1, 128], strides = [1, 1]} : vector<8x128xf32> to vector<1x128xf32>
    %170 = vector.extract_strided_slice %165 {offsets = [4, 0], sizes = [1, 32], strides = [1, 1]} : vector<8x128xf32> to vector<1x32xf32>
    %171 = vector.extract_strided_slice %165 {offsets = [5, 0], sizes = [1, 32], strides = [1, 1]} : vector<8x128xf32> to vector<1x32xf32>
    %172 = vector.extract_strided_slice %165 {offsets = [6, 0], sizes = [1, 32], strides = [1, 1]} : vector<8x128xf32> to vector<1x32xf32>
    %cst_64 = arith.constant dense<0.000000e+00> : vector<16x128xf32>
    %173 = tpu.matmul %155, %157, %cst_64 {dimension_numbers = #tpu.dot_dimension_numbers<[1], [0], [0], [1], [0, 0, 1, 1], [], []>} : vector<16x32xf32>, vector<32x128xf32>, vector<16x128xf32> -> vector<16x128xf32>
    %174 = vector.extract_strided_slice %173 {offsets = [0, 0], sizes = [16, 8], strides = [1, 1]} : vector<16x128xf32> to vector<16x8xf32>
    %175 = vector.extract_strided_slice %173 {offsets = [0, 32], sizes = [16, 8], strides = [1, 1]} : vector<16x128xf32> to vector<16x8xf32>
    %176 = vector.extract_strided_slice %173 {offsets = [0, 64], sizes = [16, 8], strides = [1, 1]} : vector<16x128xf32> to vector<16x8xf32>
    %177 = tpu.transpose %175, [1, 0] : vector<16x8xf32> -> vector<8x16xf32>
    %cst_65 = arith.constant dense<0.000000e+00> : vector<16x16xf32>
    %178 = tpu.matmul %174, %177, %cst_65 {dimension_numbers = #tpu.dot_dimension_numbers<[1], [0], [0], [1], [0, 0, 1, 1], [], []>} : vector<16x8xf32>, vector<8x16xf32>, vector<16x16xf32> -> vector<16x16xf32>
    %179 = arith.addf %178, %1 : vector<16x16xf32>
    %180 = vector.broadcast %3 : f32 to vector<16x16xf32>
    %181 = arith.mulf %179, %180 : vector<16x16xf32>
    %cst_66 = arith.constant dense<0xFF800000> : vector<16xf32>
    %182 = vector.multi_reduction <maximumf>, %181, %cst_66 [1] : vector<16x16xf32> to vector<16xf32>
    %183 = vector.shape_cast %182 : vector<16xf32> to vector<16x1xf32>
    %184 = vector.broadcast %183 : vector<16x1xf32> to vector<16x16xf32>
    %185 = arith.subf %181, %184 : vector<16x16xf32>
    %186 = math.exp %185 : vector<16x16xf32>
    %cst_67 = arith.constant dense<0.000000e+00> : vector<16xf32>
    %187 = vector.multi_reduction <add>, %186, %cst_67 [1] : vector<16x16xf32> to vector<16xf32>
    %188 = vector.shape_cast %187 : vector<16xf32> to vector<16x1xf32>
    %189 = tpu.reciprocal %188 {approx = true} : vector<16x1xf32> -> vector<16x1xf32>
    %190 = vector.broadcast %189 : vector<16x1xf32> to vector<16x16xf32>
    %191 = arith.mulf %186, %190 : vector<16x16xf32>
    %cst_68 = arith.constant dense<0.000000e+00> : vector<16x8xf32>
    %192 = tpu.matmul %191, %176, %cst_68 {dimension_numbers = #tpu.dot_dimension_numbers<[1], [0], [0], [1], [0, 0, 1, 1], [], []>} : vector<16x16xf32>, vector<16x8xf32>, vector<16x8xf32> -> vector<16x8xf32>
    %193 = vector.extract_strided_slice %173 {offsets = [0, 8], sizes = [16, 8], strides = [1, 1]} : vector<16x128xf32> to vector<16x8xf32>
    %194 = vector.extract_strided_slice %173 {offsets = [0, 40], sizes = [16, 8], strides = [1, 1]} : vector<16x128xf32> to vector<16x8xf32>
    %195 = vector.extract_strided_slice %173 {offsets = [0, 72], sizes = [16, 8], strides = [1, 1]} : vector<16x128xf32> to vector<16x8xf32>
    %196 = tpu.transpose %194, [1, 0] : vector<16x8xf32> -> vector<8x16xf32>
    %cst_69 = arith.constant dense<0.000000e+00> : vector<16x16xf32>
    %197 = tpu.matmul %193, %196, %cst_69 {dimension_numbers = #tpu.dot_dimension_numbers<[1], [0], [0], [1], [0, 0, 1, 1], [], []>} : vector<16x8xf32>, vector<8x16xf32>, vector<16x16xf32> -> vector<16x16xf32>
    %198 = arith.addf %197, %1 : vector<16x16xf32>
    %199 = vector.broadcast %3 : f32 to vector<16x16xf32>
    %200 = arith.mulf %198, %199 : vector<16x16xf32>
    %cst_70 = arith.constant dense<0xFF800000> : vector<16xf32>
    %201 = vector.multi_reduction <maximumf>, %200, %cst_70 [1] : vector<16x16xf32> to vector<16xf32>
    %202 = vector.shape_cast %201 : vector<16xf32> to vector<16x1xf32>
    %203 = vector.broadcast %202 : vector<16x1xf32> to vector<16x16xf32>
    %204 = arith.subf %200, %203 : vector<16x16xf32>
    %205 = math.exp %204 : vector<16x16xf32>
    %cst_71 = arith.constant dense<0.000000e+00> : vector<16xf32>
    %206 = vector.multi_reduction <add>, %205, %cst_71 [1] : vector<16x16xf32> to vector<16xf32>
    %207 = vector.shape_cast %206 : vector<16xf32> to vector<16x1xf32>
    %208 = tpu.reciprocal %207 {approx = true} : vector<16x1xf32> -> vector<16x1xf32>
    %209 = vector.broadcast %208 : vector<16x1xf32> to vector<16x16xf32>
    %210 = arith.mulf %205, %209 : vector<16x16xf32>
    %cst_72 = arith.constant dense<0.000000e+00> : vector<16x8xf32>
    %211 = tpu.matmul %210, %195, %cst_72 {dimension_numbers = #tpu.dot_dimension_numbers<[1], [0], [0], [1], [0, 0, 1, 1], [], []>} : vector<16x16xf32>, vector<16x8xf32>, vector<16x8xf32> -> vector<16x8xf32>
    %212 = vector.extract_strided_slice %173 {offsets = [0, 16], sizes = [16, 8], strides = [1, 1]} : vector<16x128xf32> to vector<16x8xf32>
    %213 = vector.extract_strided_slice %173 {offsets = [0, 48], sizes = [16, 8], strides = [1, 1]} : vector<16x128xf32> to vector<16x8xf32>
    %214 = vector.extract_strided_slice %173 {offsets = [0, 80], sizes = [16, 8], strides = [1, 1]} : vector<16x128xf32> to vector<16x8xf32>
    %215 = tpu.transpose %213, [1, 0] : vector<16x8xf32> -> vector<8x16xf32>
    %cst_73 = arith.constant dense<0.000000e+00> : vector<16x16xf32>
    %216 = tpu.matmul %212, %215, %cst_73 {dimension_numbers = #tpu.dot_dimension_numbers<[1], [0], [0], [1], [0, 0, 1, 1], [], []>} : vector<16x8xf32>, vector<8x16xf32>, vector<16x16xf32> -> vector<16x16xf32>
    %217 = arith.addf %216, %1 : vector<16x16xf32>
    %218 = vector.broadcast %3 : f32 to vector<16x16xf32>
    %219 = arith.mulf %217, %218 : vector<16x16xf32>
    %cst_74 = arith.constant dense<0xFF800000> : vector<16xf32>
    %220 = vector.multi_reduction <maximumf>, %219, %cst_74 [1] : vector<16x16xf32> to vector<16xf32>
    %221 = vector.shape_cast %220 : vector<16xf32> to vector<16x1xf32>
    %222 = vector.broadcast %221 : vector<16x1xf32> to vector<16x16xf32>
    %223 = arith.subf %219, %222 : vector<16x16xf32>
    %224 = math.exp %223 : vector<16x16xf32>
    %cst_75 = arith.constant dense<0.000000e+00> : vector<16xf32>
    %225 = vector.multi_reduction <add>, %224, %cst_75 [1] : vector<16x16xf32> to vector<16xf32>
    %226 = vector.shape_cast %225 : vector<16xf32> to vector<16x1xf32>
    %227 = tpu.reciprocal %226 {approx = true} : vector<16x1xf32> -> vector<16x1xf32>
    %228 = vector.broadcast %227 : vector<16x1xf32> to vector<16x16xf32>
    %229 = arith.mulf %224, %228 : vector<16x16xf32>
    %cst_76 = arith.constant dense<0.000000e+00> : vector<16x8xf32>
    %230 = tpu.matmul %229, %214, %cst_76 {dimension_numbers = #tpu.dot_dimension_numbers<[1], [0], [0], [1], [0, 0, 1, 1], [], []>} : vector<16x16xf32>, vector<16x8xf32>, vector<16x8xf32> -> vector<16x8xf32>
    %231 = vector.extract_strided_slice %173 {offsets = [0, 24], sizes = [16, 8], strides = [1, 1]} : vector<16x128xf32> to vector<16x8xf32>
    %232 = vector.extract_strided_slice %173 {offsets = [0, 56], sizes = [16, 8], strides = [1, 1]} : vector<16x128xf32> to vector<16x8xf32>
    %233 = vector.extract_strided_slice %173 {offsets = [0, 88], sizes = [16, 8], strides = [1, 1]} : vector<16x128xf32> to vector<16x8xf32>
    %234 = tpu.transpose %232, [1, 0] : vector<16x8xf32> -> vector<8x16xf32>
    %cst_77 = arith.constant dense<0.000000e+00> : vector<16x16xf32>
    %235 = tpu.matmul %231, %234, %cst_77 {dimension_numbers = #tpu.dot_dimension_numbers<[1], [0], [0], [1], [0, 0, 1, 1], [], []>} : vector<16x8xf32>, vector<8x16xf32>, vector<16x16xf32> -> vector<16x16xf32>
    %236 = arith.addf %235, %1 : vector<16x16xf32>
    %237 = vector.broadcast %3 : f32 to vector<16x16xf32>
    %238 = arith.mulf %236, %237 : vector<16x16xf32>
    %cst_78 = arith.constant dense<0xFF800000> : vector<16xf32>
    %239 = vector.multi_reduction <maximumf>, %238, %cst_78 [1] : vector<16x16xf32> to vector<16xf32>
    %240 = vector.shape_cast %239 : vector<16xf32> to vector<16x1xf32>
    %241 = vector.broadcast %240 : vector<16x1xf32> to vector<16x16xf32>
    %242 = arith.subf %238, %241 : vector<16x16xf32>
    %243 = math.exp %242 : vector<16x16xf32>
    %cst_79 = arith.constant dense<0.000000e+00> : vector<16xf32>
    %244 = vector.multi_reduction <add>, %243, %cst_79 [1] : vector<16x16xf32> to vector<16xf32>
    %245 = vector.shape_cast %244 : vector<16xf32> to vector<16x1xf32>
    %246 = tpu.reciprocal %245 {approx = true} : vector<16x1xf32> -> vector<16x1xf32>
    %247 = vector.broadcast %246 : vector<16x1xf32> to vector<16x16xf32>
    %248 = arith.mulf %243, %247 : vector<16x16xf32>
    %cst_80 = arith.constant dense<0.000000e+00> : vector<16x8xf32>
    %249 = tpu.matmul %248, %233, %cst_80 {dimension_numbers = #tpu.dot_dimension_numbers<[1], [0], [0], [1], [0, 0, 1, 1], [], []>} : vector<16x16xf32>, vector<16x8xf32>, vector<16x8xf32> -> vector<16x8xf32>
    %250 = tpu.concatenate %192, %211, %230, %249 in 1 : vector<16x8xf32>, vector<16x8xf32>, vector<16x8xf32>, vector<16x8xf32> -> vector<16x32xf32>
    %cst_81 = arith.constant dense<0.000000e+00> : vector<16x32xf32>
    %251 = tpu.matmul %250, %159, %cst_81 {dimension_numbers = #tpu.dot_dimension_numbers<[1], [0], [0], [1], [0, 0, 1, 1], [], []>} : vector<16x32xf32>, vector<32x32xf32>, vector<16x32xf32> -> vector<16x32xf32>
    %252 = vector.broadcast %166 : vector<1x32xf32> to vector<16x32xf32>
    %253 = arith.addf %251, %252 : vector<16x32xf32>
    %254 = arith.addf %253, %155 : vector<16x32xf32>
    %cst_82 = arith.constant dense<0.000000e+00> : vector<16xf32>
    %255 = vector.multi_reduction <add>, %254, %cst_82 [1] : vector<16x32xf32> to vector<16xf32>
    %256 = vector.shape_cast %255 : vector<16xf32> to vector<16x1xf32>
    %cst_83 = arith.constant 3.200000e+01 : f32
    %257 = vector.broadcast %cst_83 : f32 to vector<16x1xf32>
    %258 = arith.divf %256, %257 : vector<16x1xf32>
    %259 = vector.broadcast %258 : vector<16x1xf32> to vector<16x32xf32>
    %260 = arith.subf %254, %259 : vector<16x32xf32>
    %261 = arith.mulf %260, %260 : vector<16x32xf32>
    %cst_84 = arith.constant dense<0.000000e+00> : vector<16xf32>
    %262 = vector.multi_reduction <add>, %261, %cst_84 [1] : vector<16x32xf32> to vector<16xf32>
    %263 = vector.shape_cast %262 : vector<16xf32> to vector<16x1xf32>
    %cst_85 = arith.constant 3.200000e+01 : f32
    %264 = vector.broadcast %cst_85 : f32 to vector<16x1xf32>
    %265 = arith.divf %263, %264 : vector<16x1xf32>
    %266 = vector.broadcast %258 : vector<16x1xf32> to vector<16x32xf32>
    %267 = arith.subf %254, %266 : vector<16x32xf32>
    %cst_86 = arith.constant 9.99999974E-6 : f32
    %268 = vector.broadcast %cst_86 : f32 to vector<16x1xf32>
    %269 = arith.addf %265, %268 : vector<16x1xf32>
    %270 = math.rsqrt %269 : vector<16x1xf32>
    %271 = vector.broadcast %270 : vector<16x1xf32> to vector<16x32xf32>
    %272 = arith.mulf %267, %271 : vector<16x32xf32>
    %273 = vector.broadcast %167 : vector<1x32xf32> to vector<16x32xf32>
    %274 = arith.mulf %272, %273 : vector<16x32xf32>
    %275 = vector.broadcast %168 : vector<1x32xf32> to vector<16x32xf32>
    %276 = arith.addf %274, %275 : vector<16x32xf32>
    %cst_87 = arith.constant dense<0.000000e+00> : vector<16x128xf32>
    %277 = tpu.matmul %276, %161, %cst_87 {dimension_numbers = #tpu.dot_dimension_numbers<[1], [0], [0], [1], [0, 0, 1, 1], [], []>} : vector<16x32xf32>, vector<32x128xf32>, vector<16x128xf32> -> vector<16x128xf32>
    %278 = vector.broadcast %169 : vector<1x128xf32> to vector<16x128xf32>
    %279 = arith.addf %277, %278 : vector<16x128xf32>
    %cst_88 = arith.constant 0.000000e+00 : f32
    %280 = vector.broadcast %cst_88 : f32 to vector<16x128xf32>
    %281 = arith.maximumf %279, %280 : vector<16x128xf32>
    %cst_89 = arith.constant dense<0.000000e+00> : vector<16x32xf32>
    %282 = tpu.matmul %281, %163, %cst_89 {dimension_numbers = #tpu.dot_dimension_numbers<[1], [0], [0], [1], [0, 0, 1, 1], [], []>} : vector<16x128xf32>, vector<128x32xf32>, vector<16x32xf32> -> vector<16x32xf32>
    %283 = vector.broadcast %170 : vector<1x32xf32> to vector<16x32xf32>
    %284 = arith.addf %282, %283 : vector<16x32xf32>
    %285 = arith.addf %284, %276 : vector<16x32xf32>
    %cst_90 = arith.constant dense<0.000000e+00> : vector<16xf32>
    %286 = vector.multi_reduction <add>, %285, %cst_90 [1] : vector<16x32xf32> to vector<16xf32>
    %287 = vector.shape_cast %286 : vector<16xf32> to vector<16x1xf32>
    %cst_91 = arith.constant 3.200000e+01 : f32
    %288 = vector.broadcast %cst_91 : f32 to vector<16x1xf32>
    %289 = arith.divf %287, %288 : vector<16x1xf32>
    %290 = vector.broadcast %289 : vector<16x1xf32> to vector<16x32xf32>
    %291 = arith.subf %285, %290 : vector<16x32xf32>
    %292 = arith.mulf %291, %291 : vector<16x32xf32>
    %cst_92 = arith.constant dense<0.000000e+00> : vector<16xf32>
    %293 = vector.multi_reduction <add>, %292, %cst_92 [1] : vector<16x32xf32> to vector<16xf32>
    %294 = vector.shape_cast %293 : vector<16xf32> to vector<16x1xf32>
    %cst_93 = arith.constant 3.200000e+01 : f32
    %295 = vector.broadcast %cst_93 : f32 to vector<16x1xf32>
    %296 = arith.divf %294, %295 : vector<16x1xf32>
    %297 = vector.broadcast %289 : vector<16x1xf32> to vector<16x32xf32>
    %298 = arith.subf %285, %297 : vector<16x32xf32>
    %cst_94 = arith.constant 9.99999974E-6 : f32
    %299 = vector.broadcast %cst_94 : f32 to vector<16x1xf32>
    %300 = arith.addf %296, %299 : vector<16x1xf32>
    %301 = math.rsqrt %300 : vector<16x1xf32>
    %302 = vector.broadcast %301 : vector<16x1xf32> to vector<16x32xf32>
    %303 = arith.mulf %298, %302 : vector<16x32xf32>
    %304 = vector.broadcast %171 : vector<1x32xf32> to vector<16x32xf32>
    %305 = arith.mulf %303, %304 : vector<16x32xf32>
    %306 = vector.broadcast %172 : vector<1x32xf32> to vector<16x32xf32>
    %307 = arith.addf %305, %306 : vector<16x32xf32>
    %c0_95 = arith.constant 0 : index
    %c0_96 = arith.constant 0 : index
    %308 = vector.load %arg7[%c0_95, %c0_96] : memref<16x32xf32, #tpu.memory_space<vmem>>, vector<16x32xf32>
    tpu.vector_store %arg7[%c0_95, %c0_96], %307 {strides = array<i32>} : memref<16x32xf32, #tpu.memory_space<vmem>>, vector<16x32xf32>,
    return
  }
}

</mosaic_0001>

<llo_original>
// kernel: encoder_forward.1
$region0: #{encoder_forward.1}
  #allocation0 [shape = 'u32[]', space=smem, size = 0x4, offset = 0x4, fixed_abs, tag = 'smem constant byte address 0x4 - core index']
  #allocation1 [shape = 'u32[144,128]{1,0:T(1,128)}', space=vmem, size = 0x12000, scoped, tag = 'internal scratch']
  %s0 = inlined_call_operand.vmem [shape: f32[16,32], index: 0, kind: input, shape index: {}]
  %s1 = inlined_call_operand.vmem [shape: f32[16,16], index: 1, kind: input, shape index: {}]
  %s2 = inlined_call_operand.vmem [shape: f32[2,32,128], index: 2, kind: input, shape index: {}]
  %s3 = inlined_call_operand.vmem [shape: f32[2,32,32], index: 3, kind: input, shape index: {}]
  %s4 = inlined_call_operand.vmem [shape: f32[2,32,128], index: 4, kind: input, shape index: {}]
  %s5 = inlined_call_operand.vmem [shape: f32[2,128,32], index: 5, kind: input, shape index: {}]
  %s6 = inlined_call_operand.vmem [shape: f32[2,8,128], index: 6, kind: input, shape index: {}]
  %s7 = inlined_call_operand.hbm [shape: f32[16,32], index: 7, kind: output, shape index: {}]
  %s8 = sld [smem:[#allocation0]]
  $region38: #{encoder_forward.1} parent=0
    _
  %s10 = ssub.s32 1, %s8
  %s11 = scalar_select 0, %s10, %s8
  $region1: #{encoder_forward.1} parent=0
    #allocation2 [shape = 'u8[8192]{0}', space=vmem, size = 0x2000, scoped, tag = 'output window, operand 0, single buffered']
    #allocation3 [shape = 's32[1]{0}', space=sflag, size = 0x4, scoped, tag = 'scoped memory for encoder_forward.1']
    %12 = vsyncpa [#allocation3], 0
    // Predicated region
    $region2: #{encoder_forward.1} parent=1 // pred_check
      _
    $region3: #{encoder_forward.1} parent=1 // pred_check_branch
      %14 = sbr.rel (0) target = $region5
    $region4: #{encoder_forward.1} parent=1 // pred_region
      _
    $region5: #{encoder_forward.1} parent=1 // pred_fallthru
      _
    // Predicated region
    $region6: #{encoder_forward.1} parent=1 // pred_check
      _
    $region7: #{encoder_forward.1} parent=1 // pred_check_branch
      %16 = sbr.rel (0) target = $region9
    $region8: #{encoder_forward.1} parent=1 // pred_region
      _
    $region9: #{encoder_forward.1} parent=1 // pred_fallthru
      _
    // Predicated region
    $region10: #{encoder_forward.1} parent=1 // pred_check
      _
    $region11: #{encoder_forward.1} parent=1 // pred_check_branch
      %18 = sbr.rel (0) target = $region13
    $region12: #{encoder_forward.1} parent=1 // pred_region
      _
    $region13: #{encoder_forward.1} parent=1 // pred_fallthru
      _
    // Predicated region
    $region14: #{encoder_forward.1} parent=1 // pred_check
      _
    $region15: #{encoder_forward.1} parent=1 // pred_check_branch
      %20 = sbr.rel (0) target = $region17
    $region16: #{encoder_forward.1} parent=1 // pred_region
      _
    $region17: #{encoder_forward.1} parent=1 // pred_fallthru
      _
    // Predicated region
    $region18: #{encoder_forward.1} parent=1 // pred_check
      _
    $region19: #{encoder_forward.1} parent=1 // pred_check_branch
      %22 = sbr.rel (0) target = $region21
    $region20: #{encoder_forward.1} parent=1 // pred_region
      _
    $region21: #{encoder_forward.1} parent=1 // pred_fallthru
      _
    // Predicated region
    $region22: #{encoder_forward.1} parent=1 // pred_check
      _
    $region23: #{encoder_forward.1} parent=1 // pred_check_branch
      %24 = sbr.rel (0) target = $region25
    $region24: #{encoder_forward.1} parent=1 // pred_region
      _
    $region25: #{encoder_forward.1} parent=1 // pred_fallthru
      _
    // Predicated region
    $region26: #{encoder_forward.1} parent=1 // pred_check
      _
    $region27: #{encoder_forward.1} parent=1 // pred_check_branch
      %26 = sbr.rel (0) target = $region29
    $region28: #{encoder_forward.1} parent=1 // pred_region
      _
    $region29: #{encoder_forward.1} parent=1 // pred_fallthru
      _
    %v27 = vld [vmem:[%s0] sm:$0xff]
    %v28 = vld [vmem:[%s0 + $0x8] sm:$0xff]
    %v29 = vld [vmem:[%s1] sm:$0xff]
    %v30 = vld [vmem:[%s1 + $0x8] sm:$0xff]
    %v31 = vld [vmem:[%s2] sm:$0xff]
    %v32 = vld [vmem:[%s2 + $0x8] sm:$0xff]
    %v33 = vld [vmem:[%s2 + $0x10] sm:$0xff]
    %v34 = vld [vmem:[%s2 + $0x18] sm:$0xff]
    %v35 = vld [vmem:[%s3] sm:$0xff]
    %v36 = vld [vmem:[%s3 + $0x8] sm:$0xff]
    %v37 = vld [vmem:[%s3 + $0x10] sm:$0xff]
    %v38 = vld [vmem:[%s3 + $0x18] sm:$0xff]
    %v39 = vld [vmem:[%s4] sm:$0xff]
    %v40 = vld [vmem:[%s4 + $0x8] sm:$0xff]
    %v41 = vld [vmem:[%s4 + $0x10] sm:$0xff]
    %v42 = vld [vmem:[%s4 + $0x18] sm:$0xff]
    %v43 = vld [vmem:[%s5] sm:$0xff]
    %v44 = vld [vmem:[%s5 + $0x8] sm:$0xff]
    %v45 = vld [vmem:[%s5 + $0x10] sm:$0xff]
    %v46 = vld [vmem:[%s5 + $0x18] sm:$0xff]
    %v47 = vld [vmem:[%s5 + $0x20] sm:$0xff]
    %v48 = vld [vmem:[%s5 + $0x28] sm:$0xff]
    %v49 = vld [vmem:[%s5 + $0x30] sm:$0xff]
    %v50 = vld [vmem:[%s5 + $0x38] sm:$0xff]
    %v51 = vld [vmem:[%s5 + $0x40] sm:$0xff]
    %v52 = vld [vmem:[%s5 + $0x48] sm:$0xff]
    %v53 = vld [vmem:[%s5 + $0x50] sm:$0xff]
    %v54 = vld [vmem:[%s5 + $0x58] sm:$0xff]
    %v55 = vld [vmem:[%s5 + $0x60] sm:$0xff]
    %v56 = vld [vmem:[%s5 + $0x68] sm:$0xff]
    %v57 = vld [vmem:[%s5 + $0x70] sm:$0xff]
    %v58 = vld [vmem:[%s5 + $0x78] sm:$0xff]
    %v59 = vld [vmem:[%s6] sm:$0xff]
    %vm60 = vcmask 261120
    %v62 = vsel %vm60, %v27, 0
    %v65 = vsel %vm60, %v28, 0
    %67 = vmatprep.subr.mxu0 0.0
    %68 = vmatpush1.msra.mxu0 %v31
    %69 = vmatprep.subr.mxu0 0.0
    %70 = vmatpush1.msra.mxu0 %v32
    %71 = vmatprep.subr.mxu0 0.0
    %72 = vmatpush1.msra.mxu0 %v33
    %73 = vmatprep.subr.mxu0 0.0
    %74 = vmatpush1.msra.mxu0 %v34
    %75 = vmatprep.subr.mxu0 0.0
    %76 = vmatpush1.msra.mxu0 0.0
    %77 = vmatprep.subr.mxu0 0.0
    %78 = vmatpush1.msra.mxu0 0.0
    %79 = vmatprep.subr.mxu0 0.0
    %80 = vmatpush1.msra.mxu0 0.0
    %81 = vmatprep.subr.mxu0 0.0
    %82 = vmatpush1.msra.mxu0 0.0
    %83 = vmatprep.subr.mxu0 0.0
    %84 = vmatpush1.msra.mxu0 0.0
    %85 = vmatprep.subr.mxu0 0.0
    %86 = vmatpush1.msra.mxu0 0.0
    %87 = vmatprep.subr.mxu0 0.0
    %88 = vmatpush1.msra.mxu0 0.0
    %89 = vmatprep.subr.mxu0 0.0
    %90 = vmatpush1.msra.mxu0 0.0
    %91 = vmatprep.subr.mxu0 0.0
    %92 = vmatpush1.msra.mxu0 0.0
    %93 = vmatprep.subr.mxu0 0.0
    %94 = vmatpush1.msra.mxu0 0.0
    %95 = vmatprep.subr.mxu0 0.0
    %96 = vmatpush1.msra.mxu0 0.0
    %97 = vmatprep.subr.mxu0 0.0
    %98 = vmatpush1.msra.mxu0 0.0
    %99 = vmatprep.subr.mxu0 0.0
    %100 = vmatpush1.msra.mxu0 0.0
    %101 = vmatprep.subr.mxu0 0.0
    %102 = vmatpush1.msra.mxu0 0.0
    %103 = vmatprep.subr.mxu0 0.0
    %104 = vmatpush1.msra.mxu0 0.0
    %105 = vmatprep.subr.mxu0 0.0
    %106 = vmatpush1.msra.mxu0 0.0
    %107 = vmatprep.subr.mxu0 0.0
    %108 = vmatpush1.msra.mxu0 0.0
    %109 = vmatprep.subr.mxu0 0.0
    %110 = vmatpush1.msra.mxu0 0.0
    %111 = vmatprep.subr.mxu0 0.0
    %112 = vmatpush1.msra.mxu0 0.0
    %113 = vmatprep.subr.mxu0 0.0
    %114 = vmatpush1.msra.mxu0 0.0
    %115 = vmatprep.subr.mxu0 0.0
    %116 = vmatpush1.msra.mxu0 0.0
    %117 = vmatprep.subr.mxu0 0.0
    %118 = vmatpush1.msra.mxu0 0.0
    %119 = vmatprep.subr.mxu0 0.0
    %120 = vmatpush1.msra.mxu0 0.0
    %121 = vmatprep.subr.mxu0 0.0
    %122 = vmatpush1.msra.mxu0 0.0
    %123 = vmatprep.subr.mxu0 0.0
    %124 = vmatpush1.msra.mxu0 0.0
    %125 = vmatprep.subr.mxu0 0.0
    %126 = vmatpush1.msra.mxu0 0.0
    %127 = vmatprep.subr.mxu0 0.0
    %128 = vmatpush1.msra.mxu0 0.0
    %129 = vmatprep.subr.mxu0 0.0
    %130 = vmatpush1.msra.mxu0 0.0
    %131 = vmatprep.mubr.f32.mxu0 0.0
    %132 = vmatmul.mubr.f32.gmra.mrb[0].mxu0 %v62
    %v133 = vpop.f32.mrb[0].mxu0
    %v134 = vadd.f32 0.0, %v133
    %v135 = vpop.f32.mrb[0].mxu0
    %136 = vmatprep.mubr.f32.mxu0 0.0
    %137 = vmatmul.mubr.f32.gmra.mrb[0].mxu0 %v65
    %v138 = vpop.f32.mrb[0].mxu0
    %v139 = vadd.f32 0.0, %v138
    %v140 = vpop.f32.mrb[0].mxu0
    %141 = vdwg.mxu0
    %144 = vrot.lane.b32.xlu0 %v134, 96
    %v145 = vpop.permute.xlu0 %144
    %146 = vrot.lane.b32.xlu0 %v139, 96
    %v147 = vpop.permute.xlu0 %146
    %vm148 = vcmask 64512
    %v149 = vsel %vm148, %v134, 0
    %v151 = vsel %vm148, %v139, 0
    %v153 = vsel %vm148, %v145, 0
    %v155 = vsel %vm148, %v147, 0
    %157 = vmatprep.subr.mxu0 0.0
    %158 = vmatpush1.xpose.msra.mxu0 %v153
    %159 = vmatprep.subr.mxu0 0.0
    %160 = vmatpush1.xpose.msra.mxu0 %v155
    %161 = vmatprep.subr.mxu0 0.0
    %162 = vmatpush1.xpose.msra.mxu0 0.0
    %163 = vmatprep.subr.mxu0 0.0
    %164 = vmatpush1.xpose.msra.mxu0 0.0
    %165 = vmatprep.subr.mxu0 0.0
    %166 = vmatpush1.xpose.msra.mxu0 0.0
    %167 = vmatprep.subr.mxu0 0.0
    %168 = vmatpush1.xpose.msra.mxu0 0.0
    %169 = vmatprep.subr.mxu0 0.0
    %170 = vmatpush1.xpose.msra.mxu0 0.0
    %171 = vmatprep.subr.mxu0 0.0
    %172 = vmatpush1.xpose.msra.mxu0 0.0
    %173 = vmatprep.subr.mxu0 0.0
    %174 = vmatpush1.xpose.msra.mxu0 0.0
    %175 = vmatprep.subr.mxu0 0.0
    %176 = vmatpush1.xpose.msra.mxu0 0.0
    %177 = vmatprep.subr.mxu0 0.0
    %178 = vmatpush1.xpose.msra.mxu0 0.0
    %179 = vmatprep.subr.mxu0 0.0
    %180 = vmatpush1.xpose.msra.mxu0 0.0
    %181 = vmatprep.subr.mxu0 0.0
    %182 = vmatpush1.xpose.msra.mxu0 0.0
    %183 = vmatprep.subr.mxu0 0.0
    %184 = vmatpush1.xpose.msra.mxu0 0.0
    %185 = vmatprep.subr.mxu0 0.0
    %186 = vmatpush1.xpose.msra.mxu0 0.0
    %187 = vmatprep.subr.mxu0 0.0
    %188 = vmatpush1.xpose.msra.mxu0 0.0
    %189 = vmatprep.subr.mxu0 0.0
    %190 = vmatpush1.xpose.msra.mxu0 0.0
    %191 = vmatprep.subr.mxu0 0.0
    %192 = vmatpush1.xpose.msra.mxu0 0.0
    %193 = vmatprep.subr.mxu0 0.0
    %194 = vmatpush1.xpose.msra.mxu0 0.0
    %195 = vmatprep.subr.mxu0 0.0
    %196 = vmatpush1.xpose.msra.mxu0 0.0
    %197 = vmatprep.subr.mxu0 0.0
    %198 = vmatpush1.xpose.msra.mxu0 0.0
    %199 = vmatprep.subr.mxu0 0.0
    %200 = vmatpush1.xpose.msra.mxu0 0.0
    %201 = vmatprep.subr.mxu0 0.0
    %202 = vmatpush1.xpose.msra.mxu0 0.0
    %203 = vmatprep.subr.mxu0 0.0
    %204 = vmatpush1.xpose.msra.mxu0 0.0
    %205 = vmatprep.subr.mxu0 0.0
    %206 = vmatpush1.xpose.msra.mxu0 0.0
    %207 = vmatprep.subr.mxu0 0.0
    %208 = vmatpush1.xpose.msra.mxu0 0.0
    %209 = vmatprep.subr.mxu0 0.0
    %210 = vmatpush1.xpose.msra.mxu0 0.0
    %211 = vmatprep.subr.mxu0 0.0
    %212 = vmatpush1.xpose.msra.mxu0 0.0
    %213 = vmatprep.subr.mxu0 0.0
    %214 = vmatpush1.xpose.msra.mxu0 0.0
    %215 = vmatprep.subr.mxu0 0.0
    %216 = vmatpush1.xpose.msra.mxu0 0.0
    %217 = vmatprep.subr.mxu0 0.0
    %218 = vmatpush1.xpose.msra.mxu0 0.0
    %219 = vmatprep.subr.mxu0 0.0
    %220 = vmatpush1.xpose.msra.mxu0 0.0
    %221 = vmatprep.mubr.f32.mxu0 0.0
    %222 = vmatmul.mubr.f32.gmra.mrb[0].mxu0 %v149
    %v223 = vpop.f32.mrb[0].mxu0
    %v224 = vadd.f32 %v29, %v223
    %v225 = vpop.f32.mrb[0].mxu0
    %226 = vmatprep.mubr.f32.mxu0 0.0
    %227 = vmatmul.mubr.f32.gmra.mrb[0].mxu0 %v151
    %v228 = vpop.f32.mrb[0].mxu0
    %v229 = vadd.f32 %v30, %v228
    %v230 = vpop.f32.mrb[0].mxu0
    %231 = vdwg.mxu0
    %v232 = vmul.f32 %v224, 0.17677669
    %v233 = vmul.f32 %v229, 0.17677669
    %vm234 = vcmask 130048
    %v235 = vsel %vm234, %v232, -inf
    %236 = vmax.xlane.f32.xlu0 %v235
    %v237 = vpop.xlane.xlu0 %236
    %v238 = vsel %vm234, %v233, -inf
    %239 = vmax.xlane.f32.xlu0 %v238
    %v240 = vpop.xlane.xlu0 %239
    %v241 = vsub.f32 %v232, %v237
    %v242 = vsub.f32 %v233, %v240
    %v243 = vmul.f32 %v241, 1.442695
    %v244 = vpow.pop %v243
    %v245 = vmul.f32 %v242, 1.442695
    %v246 = vpow.pop %v245
    %v247 = vsel %vm234, %v244, 0.0
    %248 = vadd.xlane.f32.xlu0 %v247
    %v249 = vpop.xlane.xlu0 %248
    %v250 = vsel %vm234, %v246, 0.0
    %251 = vadd.xlane.f32.xlu0 %v250
    %v252 = vpop.xlane.xlu0 %251
    %v253 = vrcp.pop %v249
    %v254 = vrcp.pop %v252
    %v255 = vmul.f32 %v244, %v253
    %v256 = vmul.f32 %v246, %v254
    %257 = vrot.lane.b32.xlu0 %v134, 64
    %v258 = vpop.permute.xlu0 %257
    %259 = vrot.lane.b32.xlu0 %v139, 64
    %v260 = vpop.permute.xlu0 %259
    %v264 = vsel %vm234, %v255, 0
    %v267 = vsel %vm234, %v256, 0
    %269 = vmatprep.subr.mxu0 0.0
    %270 = vmatpush1.msra.mxu0 %v258
    %271 = vmatprep.subr.mxu0 0.0
    %272 = vmatpush1.msra.mxu0 %v260
    %273 = vmatprep.subr.mxu0 0.0
    %274 = vmatpush1.msra.mxu0 0.0
    %275 = vmatprep.subr.mxu0 0.0
    %276 = vmatpush1.msra.mxu0 0.0
    %277 = vmatprep.subr.mxu0 0.0
    %278 = vmatpush1.msra.mxu0 0.0
    %279 = vmatprep.subr.mxu0 0.0
    %280 = vmatpush1.msra.mxu0 0.0
    %281 = vmatprep.subr.mxu0 0.0
    %282 = vmatpush1.msra.mxu0 0.0
    %283 = vmatprep.subr.mxu0 0.0
    %284 = vmatpush1.msra.mxu0 0.0
    %285 = vmatprep.subr.mxu0 0.0
    %286 = vmatpush1.msra.mxu0 0.0
    %287 = vmatprep.subr.mxu0 0.0
    %288 = vmatpush1.msra.mxu0 0.0
    %289 = vmatprep.subr.mxu0 0.0
    %290 = vmatpush1.msra.mxu0 0.0
    %291 = vmatprep.subr.mxu0 0.0
    %292 = vmatpush1.msra.mxu0 0.0
    %293 = vmatprep.subr.mxu0 0.0
    %294 = vmatpush1.msra.mxu0 0.0
    %295 = vmatprep.subr.mxu0 0.0
    %296 = vmatpush1.msra.mxu0 0.0
    %297 = vmatprep.subr.mxu0 0.0
    %298 = vmatpush1.msra.mxu0 0.0
    %299 = vmatprep.subr.mxu0 0.0
    %300 = vmatpush1.msra.mxu0 0.0
    %301 = vmatprep.subr.mxu0 0.0
    %302 = vmatpush1.msra.mxu0 0.0
    %303 = vmatprep.subr.mxu0 0.0
    %304 = vmatpush1.msra.mxu0 0.0
    %305 = vmatprep.subr.mxu0 0.0
    %306 = vmatpush1.msra.mxu0 0.0
    %307 = vmatprep.subr.mxu0 0.0
    %308 = vmatpush1.msra.mxu0 0.0
    %309 = vmatprep.subr.mxu0 0.0
    %310 = vmatpush1.msra.mxu0 0.0
    %311 = vmatprep.subr.mxu0 0.0
    %312 = vmatpush1.msra.mxu0 0.0
    %313 = vmatprep.subr.mxu0 0.0
    %314 = vmatpush1.msra.mxu0 0.0
    %315 = vmatprep.subr.mxu0 0.0
    %316 = vmatpush1.msra.mxu0 0.0
    %317 = vmatprep.subr.mxu0 0.0
    %318 = vmatpush1.msra.mxu0 0.0
    %319 = vmatprep.subr.mxu0 0.0
    %320 = vmatpush1.msra.mxu0 0.0
    %321 = vmatprep.subr.mxu0 0.0
    %322 = vmatpush1.msra.mxu0 0.0
    %323 = vmatprep.subr.mxu0 0.0
    %324 = vmatpush1.msra.mxu0 0.0
    %325 = vmatprep.subr.mxu0 0.0
    %326 = vmatpush1.msra.mxu0 0.0
    %327 = vmatprep.subr.mxu0 0.0
    %328 = vmatpush1.msra.mxu0 0.0
    %329 = vmatprep.subr.mxu0 0.0
    %330 = vmatpush1.msra.mxu0 0.0
    %331 = vmatprep.subr.mxu0 0.0
    %332 = vmatpush1.msra.mxu0 0.0
    %333 = vmatprep.mubr.f32.mxu0 0.0
    %334 = vmatmul.mubr.f32.gmra.mrb[0].mxu0 %v264
    %v335 = vpop.f32.mrb[0].mxu0
    %v336 = vadd.f32 0.0, %v335
    %v337 = vpop.f32.mrb[0].mxu0
    %338 = vmatprep.mubr.f32.mxu0 0.0
    %339 = vmatmul.mubr.f32.gmra.mrb[0].mxu0 %v267
    %v340 = vpop.f32.mrb[0].mxu0
    %v341 = vadd.f32 0.0, %v340
    %v342 = vpop.f32.mrb[0].mxu0
    %343 = vdwg.mxu0
    %344 = vrot.lane.b32.xlu0 %v134, 120
    %v345 = vpop.permute.xlu0 %344
    %346 = vrot.lane.b32.xlu0 %v139, 120
    %v347 = vpop.permute.xlu0 %346
    %348 = vrot.lane.b32.xlu0 %v134, 88
    %v349 = vpop.permute.xlu0 %348
    %350 = vrot.lane.b32.xlu0 %v139, 88
    %v351 = vpop.permute.xlu0 %350
    %v352 = vsel %vm148, %v345, 0
    %v354 = vsel %vm148, %v347, 0
    %v356 = vsel %vm148, %v349, 0
    %v358 = vsel %vm148, %v351, 0
    %360 = vmatprep.subr.mxu0 0.0
    %361 = vmatpush1.xpose.msra.mxu0 %v356
    %362 = vmatprep.subr.mxu0 0.0
    %363 = vmatpush1.xpose.msra.mxu0 %v358
    %364 = vmatprep.subr.mxu0 0.0
    %365 = vmatpush1.xpose.msra.mxu0 0.0
    %366 = vmatprep.subr.mxu0 0.0
    %367 = vmatpush1.xpose.msra.mxu0 0.0
    %368 = vmatprep.subr.mxu0 0.0
    %369 = vmatpush1.xpose.msra.mxu0 0.0
    %370 = vmatprep.subr.mxu0 0.0
    %371 = vmatpush1.xpose.msra.mxu0 0.0
    %372 = vmatprep.subr.mxu0 0.0
    %373 = vmatpush1.xpose.msra.mxu0 0.0
    %374 = vmatprep.subr.mxu0 0.0
    %375 = vmatpush1.xpose.msra.mxu0 0.0
    %376 = vmatprep.subr.mxu0 0.0
    %377 = vmatpush1.xpose.msra.mxu0 0.0
    %378 = vmatprep.subr.mxu0 0.0
    %379 = vmatpush1.xpose.msra.mxu0 0.0
    %380 = vmatprep.subr.mxu0 0.0
    %381 = vmatpush1.xpose.msra.mxu0 0.0
    %382 = vmatprep.subr.mxu0 0.0
    %383 = vmatpush1.xpose.msra.mxu0 0.0
    %384 = vmatprep.subr.mxu0 0.0
    %385 = vmatpush1.xpose.msra.mxu0 0.0
    %386 = vmatprep.subr.mxu0 0.0
    %387 = vmatpush1.xpose.msra.mxu0 0.0
    %388 = vmatprep.subr.mxu0 0.0
    %389 = vmatpush1.xpose.msra.mxu0 0.0
    %390 = vmatprep.subr.mxu0 0.0
    %391 = vmatpush1.xpose.msra.mxu0 0.0
    %392 = vmatprep.subr.mxu0 0.0
    %393 = vmatpush1.xpose.msra.mxu0 0.0
    %394 = vmatprep.subr.mxu0 0.0
    %395 = vmatpush1.xpose.msra.mxu0 0.0
    %396 = vmatprep.subr.mxu0 0.0
    %397 = vmatpush1.xpose.msra.mxu0 0.0
    %398 = vmatprep.subr.mxu0 0.0
    %399 = vmatpush1.xpose.msra.mxu0 0.0
    %400 = vmatprep.subr.mxu0 0.0
    %401 = vmatpush1.xpose.msra.mxu0 0.0
    %402 = vmatprep.subr.mxu0 0.0
    %403 = vmatpush1.xpose.msra.mxu0 0.0
    %404 = vmatprep.subr.mxu0 0.0
    %405 = vmatpush1.xpose.msra.mxu0 0.0
    %406 = vmatprep.subr.mxu0 0.0
    %407 = vmatpush1.xpose.msra.mxu0 0.0
    %408 = vmatprep.subr.mxu0 0.0
    %409 = vmatpush1.xpose.msra.mxu0 0.0
    %410 = vmatprep.subr.mxu0 0.0
    %411 = vmatpush1.xpose.msra.mxu0 0.0
    %412 = vmatprep.subr.mxu0 0.0
    %413 = vmatpush1.xpose.msra.mxu0 0.0
    %414 = vmatprep.subr.mxu0 0.0
    %415 = vmatpush1.xpose.msra.mxu0 0.0
    %416 = vmatprep.subr.mxu0 0.0
    %417 = vmatpush1.xpose.msra.mxu0 0.0
    %418 = vmatprep.subr.mxu0 0.0
    %419 = vmatpush1.xpose.msra.mxu0 0.0
    %420 = vmatprep.subr.mxu0 0.0
    %421 = vmatpush1.xpose.msra.mxu0 0.0
    %422 = vmatprep.subr.mxu0 0.0
    %423 = vmatpush1.xpose.msra.mxu0 0.0
    %424 = vmatprep.mubr.f32.mxu0 0.0
    %425 = vmatmul.mubr.f32.gmra.mrb[0].mxu0 %v352
    %v426 = vpop.f32.mrb[0].mxu0
    %v427 = vadd.f32 %v29, %v426
    %v428 = vpop.f32.mrb[0].mxu0
    %429 = vmatprep.mubr.f32.mxu0 0.0
    %430 = vmatmul.mubr.f32.gmra.mrb[0].mxu0 %v354
    %v431 = vpop.f32.mrb[0].mxu0
    %v432 = vadd.f32 %v30, %v431
    %v433 = vpop.f32.mrb[0].mxu0
    %434 = vdwg.mxu0
    %v435 = vmul.f32 %v427, 0.17677669
    %v436 = vmul.f32 %v432, 0.17677669
    %v437 = vsel %vm234, %v435, -inf
    %438 = vmax.xlane.f32.xlu0 %v437
    %v439 = vpop.xlane.xlu0 %438
    %v440 = vsel %vm234, %v436, -inf
    %441 = vmax.xlane.f32.xlu0 %v440
    %v442 = vpop.xlane.xlu0 %441
    %v443 = vsub.f32 %v435, %v439
    %v444 = vsub.f32 %v436, %v442
    %v445 = vmul.f32 %v443, 1.442695
    %v446 = vpow.pop %v445
    %v447 = vmul.f32 %v444, 1.442695
    %v448 = vpow.pop %v447
    %v449 = vsel %vm234, %v446, 0.0
    %450 = vadd.xlane.f32.xlu0 %v449
    %v451 = vpop.xlane.xlu0 %450
    %v452 = vsel %vm234, %v448, 0.0
    %453 = vadd.xlane.f32.xlu0 %v452
    %v454 = vpop.xlane.xlu0 %453
    %v455 = vrcp.pop %v451
    %v456 = vrcp.pop %v454
    %v457 = vmul.f32 %v446, %v455
    %v458 = vmul.f32 %v448, %v456
    %459 = vrot.lane.b32.xlu0 %v134, 56
    %v460 = vpop.permute.xlu0 %459
    %461 = vrot.lane.b32.xlu0 %v139, 56
    %v462 = vpop.permute.xlu0 %461
    %v466 = vsel %vm234, %v457, 0
    %v469 = vsel %vm234, %v458, 0
    %471 = vmatprep.subr.mxu0 0.0
    %472 = vmatpush1.msra.mxu0 %v460
    %473 = vmatprep.subr.mxu0 0.0
    %474 = vmatpush1.msra.mxu0 %v462
    %475 = vmatprep.subr.mxu0 0.0
    %476 = vmatpush1.msra.mxu0 0.0
    %477 = vmatprep.subr.mxu0 0.0
    %478 = vmatpush1.msra.mxu0 0.0
    %479 = vmatprep.subr.mxu0 0.0
    %480 = vmatpush1.msra.mxu0 0.0
    %481 = vmatprep.subr.mxu0 0.0
    %482 = vmatpush1.msra.mxu0 0.0
    %483 = vmatprep.subr.mxu0 0.0
    %484 = vmatpush1.msra.mxu0 0.0
    %485 = vmatprep.subr.mxu0 0.0
    %486 = vmatpush1.msra.mxu0 0.0
    %487 = vmatprep.subr.mxu0 0.0
    %488 = vmatpush1.msra.mxu0 0.0
    %489 = vmatprep.subr.mxu0 0.0
    %490 = vmatpush1.msra.mxu0 0.0
    %491 = vmatprep.subr.mxu0 0.0
    %492 = vmatpush1.msra.mxu0 0.0
    %493 = vmatprep.subr.mxu0 0.0
    %494 = vmatpush1.msra.mxu0 0.0
    %495 = vmatprep.subr.mxu0 0.0
    %496 = vmatpush1.msra.mxu0 0.0
    %497 = vmatprep.subr.mxu0 0.0
    %498 = vmatpush1.msra.mxu0 0.0
    %499 = vmatprep.subr.mxu0 0.0
    %500 = vmatpush1.msra.mxu0 0.0
    %501 = vmatprep.subr.mxu0 0.0
    %502 = vmatpush1.msra.mxu0 0.0
    %503 = vmatprep.subr.mxu0 0.0
    %504 = vmatpush1.msra.mxu0 0.0
    %505 = vmatprep.subr.mxu0 0.0
    %506 = vmatpush1.msra.mxu0 0.0
    %507 = vmatprep.subr.mxu0 0.0
    %508 = vmatpush1.msra.mxu0 0.0
    %509 = vmatprep.subr.mxu0 0.0
    %510 = vmatpush1.msra.mxu0 0.0
    %511 = vmatprep.subr.mxu0 0.0
    %512 = vmatpush1.msra.mxu0 0.0
    %513 = vmatprep.subr.mxu0 0.0
    %514 = vmatpush1.msra.mxu0 0.0
    %515 = vmatprep.subr.mxu0 0.0
    %516 = vmatpush1.msra.mxu0 0.0
    %517 = vmatprep.subr.mxu0 0.0
    %518 = vmatpush1.msra.mxu0 0.0
    %519 = vmatprep.subr.mxu0 0.0
    %520 = vmatpush1.msra.mxu0 0.0
    %521 = vmatprep.subr.mxu0 0.0
    %522 = vmatpush1.msra.mxu0 0.0
    %523 = vmatprep.subr.mxu0 0.0
    %524 = vmatpush1.msra.mxu0 0.0
    %525 = vmatprep.subr.mxu0 0.0
    %526 = vmatpush1.msra.mxu0 0.0
    %527 = vmatprep.subr.mxu0 0.0
    %528 = vmatpush1.msra.mxu0 0.0
    %529 = vmatprep.subr.mxu0 0.0
    %530 = vmatpush1.msra.mxu0 0.0
    %531 = vmatprep.subr.mxu0 0.0
    %532 = vmatpush1.msra.mxu0 0.0
    %533 = vmatprep.subr.mxu0 0.0
    %534 = vmatpush1.msra.mxu0 0.0
    %535 = vmatprep.mubr.f32.mxu0 0.0
    %536 = vmatmul.mubr.f32.gmra.mrb[0].mxu0 %v466
    %v537 = vpop.f32.mrb[0].mxu0
    %v538 = vadd.f32 0.0, %v537
    %v539 = vpop.f32.mrb[0].mxu0
    %540 = vmatprep.mubr.f32.mxu0 0.0
    %541 = vmatmul.mubr.f32.gmra.mrb[0].mxu0 %v469
    %v542 = vpop.f32.mrb[0].mxu0
    %v543 = vadd.f32 0.0, %v542
    %v544 = vpop.f32.mrb[0].mxu0
    %545 = vdwg.mxu0
    %546 = vrot.lane.b32.xlu0 %v134, 112
    %v547 = vpop.permute.xlu0 %546
    %548 = vrot.lane.b32.xlu0 %v139, 112
    %v549 = vpop.permute.xlu0 %548
    %550 = vrot.lane.b32.xlu0 %v134, 80
    %v551 = vpop.permute.xlu0 %550
    %552 = vrot.lane.b32.xlu0 %v139, 80
    %v553 = vpop.permute.xlu0 %552
    %v554 = vsel %vm148, %v547, 0
    %v556 = vsel %vm148, %v549, 0
    %v558 = vsel %vm148, %v551, 0
    %v560 = vsel %vm148, %v553, 0
    %562 = vmatprep.subr.mxu0 0.0
    %563 = vmatpush1.xpose.msra.mxu0 %v558
    %564 = vmatprep.subr.mxu0 0.0
    %565 = vmatpush1.xpose.msra.mxu0 %v560
    %566 = vmatprep.subr.mxu0 0.0
    %567 = vmatpush1.xpose.msra.mxu0 0.0
    %568 = vmatprep.subr.mxu0 0.0
    %569 = vmatpush1.xpose.msra.mxu0 0.0
    %570 = vmatprep.subr.mxu0 0.0
    %571 = vmatpush1.xpose.msra.mxu0 0.0
    %572 = vmatprep.subr.mxu0 0.0
    %573 = vmatpush1.xpose.msra.mxu0 0.0
    %574 = vmatprep.subr.mxu0 0.0
    %575 = vmatpush1.xpose.msra.mxu0 0.0
    %576 = vmatprep.subr.mxu0 0.0
    %577 = vmatpush1.xpose.msra.mxu0 0.0
    %578 = vmatprep.subr.mxu0 0.0
    %579 = vmatpush1.xpose.msra.mxu0 0.0
    %580 = vmatprep.subr.mxu0 0.0
    %581 = vmatpush1.xpose.msra.mxu0 0.0
    %582 = vmatprep.subr.mxu0 0.0
    %583 = vmatpush1.xpose.msra.mxu0 0.0
    %584 = vmatprep.subr.mxu0 0.0
    %585 = vmatpush1.xpose.msra.mxu0 0.0
    %586 = vmatprep.subr.mxu0 0.0
    %587 = vmatpush1.xpose.msra.mxu0 0.0
    %588 = vmatprep.subr.mxu0 0.0
    %589 = vmatpush1.xpose.msra.mxu0 0.0
    %590 = vmatprep.subr.mxu0 0.0
    %591 = vmatpush1.xpose.msra.mxu0 0.0
    %592 = vmatprep.subr.mxu0 0.0
    %593 = vmatpush1.xpose.msra.mxu0 0.0
    %594 = vmatprep.subr.mxu0 0.0
    %595 = vmatpush1.xpose.msra.mxu0 0.0
    %596 = vmatprep.subr.mxu0 0.0
    %597 = vmatpush1.xpose.msra.mxu0 0.0
    %598 = vmatprep.subr.mxu0 0.0
    %599 = vmatpush1.xpose.msra.mxu0 0.0
    %600 = vmatprep.subr.mxu0 0.0
    %601 = vmatpush1.xpose.msra.mxu0 0.0
    %602 = vmatprep.subr.mxu0 0.0
    %603 = vmatpush1.xpose.msra.mxu0 0.0
    %604 = vmatprep.subr.mxu0 0.0
    %605 = vmatpush1.xpose.msra.mxu0 0.0
    %606 = vmatprep.subr.mxu0 0.0
    %607 = vmatpush1.xpose.msra.mxu0 0.0
    %608 = vmatprep.subr.mxu0 0.0
    %609 = vmatpush1.xpose.msra.mxu0 0.0
    %610 = vmatprep.subr.mxu0 0.0
    %611 = vmatpush1.xpose.msra.mxu0 0.0
    %612 = vmatprep.subr.mxu0 0.0
    %613 = vmatpush1.xpose.msra.mxu0 0.0
    %614 = vmatprep.subr.mxu0 0.0
    %615 = vmatpush1.xpose.msra.mxu0 0.0
    %616 = vmatprep.subr.mxu0 0.0
    %617 = vmatpush1.xpose.msra.mxu0 0.0
    %618 = vmatprep.subr.mxu0 0.0
    %619 = vmatpush1.xpose.msra.mxu0 0.0
    %620 = vmatprep.subr.mxu0 0.0
    %621 = vmatpush1.xpose.msra.mxu0 0.0
    %622 = vmatprep.subr.mxu0 0.0
    %623 = vmatpush1.xpose.msra.mxu0 0.0
    %624 = vmatprep.subr.mxu0 0.0
    %625 = vmatpush1.xpose.msra.mxu0 0.0
    %626 = vmatprep.mubr.f32.mxu0 0.0
    %627 = vmatmul.mubr.f32.gmra.mrb[0].mxu0 %v554
    %v628 = vpop.f32.mrb[0].mxu0
    %v629 = vadd.f32 %v29, %v628
    %v630 = vpop.f32.mrb[0].mxu0
    %631 = vmatprep.mubr.f32.mxu0 0.0
    %632 = vmatmul.mubr.f32.gmra.mrb[0].mxu0 %v556
    %v633 = vpop.f32.mrb[0].mxu0
    %v634 = vadd.f32 %v30, %v633
    %v635 = vpop.f32.mrb[0].mxu0
    %636 = vdwg.mxu0
    %v637 = vmul.f32 %v629, 0.17677669
    %v638 = vmul.f32 %v634, 0.17677669
    %v639 = vsel %vm234, %v637, -inf
    %640 = vmax.xlane.f32.xlu0 %v639
    %v641 = vpop.xlane.xlu0 %640
    %v642 = vsel %vm234, %v638, -inf
    %643 = vmax.xlane.f32.xlu0 %v642
    %v644 = vpop.xlane.xlu0 %643
    %v645 = vsub.f32 %v637, %v641
    %v646 = vsub.f32 %v638, %v644
    %v647 = vmul.f32 %v645, 1.442695
    %v648 = vpow.pop %v647
    %v649 = vmul.f32 %v646, 1.442695
    %v650 = vpow.pop %v649
    %v651 = vsel %vm234, %v648, 0.0
    %652 = vadd.xlane.f32.xlu0 %v651
    %v653 = vpop.xlane.xlu0 %652
    %v654 = vsel %vm234, %v650, 0.0
    %655 = vadd.xlane.f32.xlu0 %v654
    %v656 = vpop.xlane.xlu0 %655
    %v657 = vrcp.pop %v653
    %v658 = vrcp.pop %v656
    %v659 = vmul.f32 %v648, %v657
    %v660 = vmul.f32 %v650, %v658
    %661 = vrot.lane.b32.xlu0 %v134, 48
    %v662 = vpop.permute.xlu0 %661
    %663 = vrot.lane.b32.xlu0 %v139, 48
    %v664 = vpop.permute.xlu0 %663
    %v668 = vsel %vm234, %v659, 0
    %v671 = vsel %vm234, %v660, 0
    %673 = vmatprep.subr.mxu0 0.0
    %674 = vmatpush1.msra.mxu0 %v662
    %675 = vmatprep.subr.mxu0 0.0
    %676 = vmatpush1.msra.mxu0 %v664
    %677 = vmatprep.subr.mxu0 0.0
    %678 = vmatpush1.msra.mxu0 0.0
    %679 = vmatprep.subr.mxu0 0.0
    %680 = vmatpush1.msra.mxu0 0.0
    %681 = vmatprep.subr.mxu0 0.0
    %682 = vmatpush1.msra.mxu0 0.0
    %683 = vmatprep.subr.mxu0 0.0
    %684 = vmatpush1.msra.mxu0 0.0
    %685 = vmatprep.subr.mxu0 0.0
    %686 = vmatpush1.msra.mxu0 0.0
    %687 = vmatprep.subr.mxu0 0.0
    %688 = vmatpush1.msra.mxu0 0.0
    %689 = vmatprep.subr.mxu0 0.0
    %690 = vmatpush1.msra.mxu0 0.0
    %691 = vmatprep.subr.mxu0 0.0
    %692 = vmatpush1.msra.mxu0 0.0
    %693 = vmatprep.subr.mxu0 0.0
    %694 = vmatpush1.msra.mxu0 0.0
    %695 = vmatprep.subr.mxu0 0.0
    %696 = vmatpush1.msra.mxu0 0.0
    %697 = vmatprep.subr.mxu0 0.0
    %698 = vmatpush1.msra.mxu0 0.0
    %699 = vmatprep.subr.mxu0 0.0
    %700 = vmatpush1.msra.mxu0 0.0
    %701 = vmatprep.subr.mxu0 0.0
    %702 = vmatpush1.msra.mxu0 0.0
    %703 = vmatprep.subr.mxu0 0.0
    %704 = vmatpush1.msra.mxu0 0.0
    %705 = vmatprep.subr.mxu0 0.0
    %706 = vmatpush1.msra.mxu0 0.0
    %707 = vmatprep.subr.mxu0 0.0
    %708 = vmatpush1.msra.mxu0 0.0
    %709 = vmatprep.subr.mxu0 0.0
    %710 = vmatpush1.msra.mxu0 0.0
    %711 = vmatprep.subr.mxu0 0.0
    %712 = vmatpush1.msra.mxu0 0.0
    %713 = vmatprep.subr.mxu0 0.0
    %714 = vmatpush1.msra.mxu0 0.0
    %715 = vmatprep.subr.mxu0 0.0
    %716 = vmatpush1.msra.mxu0 0.0
    %717 = vmatprep.subr.mxu0 0.0
    %718 = vmatpush1.msra.mxu0 0.0
    %719 = vmatprep.subr.mxu0 0.0
    %720 = vmatpush1.msra.mxu0 0.0
    %721 = vmatprep.subr.mxu0 0.0
    %722 = vmatpush1.msra.mxu0 0.0
    %723 = vmatprep.subr.mxu0 0.0
    %724 = vmatpush1.msra.mxu0 0.0
    %725 = vmatprep.subr.mxu0 0.0
    %726 = vmatpush1.msra.mxu0 0.0
    %727 = vmatprep.subr.mxu0 0.0
    %728 = vmatpush1.msra.mxu0 0.0
    %729 = vmatprep.subr.mxu0 0.0
    %730 = vmatpush1.msra.mxu0 0.0
    %731 = vmatprep.subr.mxu0 0.0
    %732 = vmatpush1.msra.mxu0 0.0
    %733 = vmatprep.subr.mxu0 0.0
    %734 = vmatpush1.msra.mxu0 0.0
    %735 = vmatprep.subr.mxu0 0.0
    %736 = vmatpush1.msra.mxu0 0.0
    %737 = vmatprep.mubr.f32.mxu0 0.0
    %738 = vmatmul.mubr.f32.gmra.mrb[0].mxu0 %v668
    %v739 = vpop.f32.mrb[0].mxu0
    %v740 = vadd.f32 0.0, %v739
    %v741 = vpop.f32.mrb[0].mxu0
    %742 = vmatprep.mubr.f32.mxu0 0.0
    %743 = vmatmul.mubr.f32.gmra.mrb[0].mxu0 %v671
    %v744 = vpop.f32.mrb[0].mxu0
    %v745 = vadd.f32 0.0, %v744
    %v746 = vpop.f32.mrb[0].mxu0
    %747 = vdwg.mxu0
    %748 = vrot.lane.b32.xlu0 %v134, 104
    %v749 = vpop.permute.xlu0 %748
    %750 = vrot.lane.b32.xlu0 %v139, 104
    %v751 = vpop.permute.xlu0 %750
    %752 = vrot.lane.b32.xlu0 %v134, 72
    %v753 = vpop.permute.xlu0 %752
    %754 = vrot.lane.b32.xlu0 %v139, 72
    %v755 = vpop.permute.xlu0 %754
    %v756 = vsel %vm148, %v749, 0
    %v758 = vsel %vm148, %v751, 0
    %v760 = vsel %vm148, %v753, 0
    %v762 = vsel %vm148, %v755, 0
    %764 = vmatprep.subr.mxu0 0.0
    %765 = vmatpush1.xpose.msra.mxu0 %v760
    %766 = vmatprep.subr.mxu0 0.0
    %767 = vmatpush1.xpose.msra.mxu0 %v762
    %768 = vmatprep.subr.mxu0 0.0
    %769 = vmatpush1.xpose.msra.mxu0 0.0
    %770 = vmatprep.subr.mxu0 0.0
    %771 = vmatpush1.xpose.msra.mxu0 0.0
    %772 = vmatprep.subr.mxu0 0.0
    %773 = vmatpush1.xpose.msra.mxu0 0.0
    %774 = vmatprep.subr.mxu0 0.0
    %775 = vmatpush1.xpose.msra.mxu0 0.0
    %776 = vmatprep.subr.mxu0 0.0
    %777 = vmatpush1.xpose.msra.mxu0 0.0
    %778 = vmatprep.subr.mxu0 0.0
    %779 = vmatpush1.xpose.msra.mxu0 0.0
    %780 = vmatprep.subr.mxu0 0.0
    %781 = vmatpush1.xpose.msra.mxu0 0.0
    %782 = vmatprep.subr.mxu0 0.0
    %783 = vmatpush1.xpose.msra.mxu0 0.0
    %784 = vmatprep.subr.mxu0 0.0
    %785 = vmatpush1.xpose.msra.mxu0 0.0
    %786 = vmatprep.subr.mxu0 0.0
    %787 = vmatpush1.xpose.msra.mxu0 0.0
    %788 = vmatprep.subr.mxu0 0.0
    %789 = vmatpush1.xpose.msra.mxu0 0.0
    %790 = vmatprep.subr.mxu0 0.0
    %791 = vmatpush1.xpose.msra.mxu0 0.0
    %792 = vmatprep.subr.mxu0 0.0
    %793 = vmatpush1.xpose.msra.mxu0 0.0
    %794 = vmatprep.subr.mxu0 0.0
    %795 = vmatpush1.xpose.msra.mxu0 0.0
    %796 = vmatprep.subr.mxu0 0.0
    %797 = vmatpush1.xpose.msra.mxu0 0.0
    %798 = vmatprep.subr.mxu0 0.0
    %799 = vmatpush1.xpose.msra.mxu0 0.0
    %800 = vmatprep.subr.mxu0 0.0
    %801 = vmatpush1.xpose.msra.mxu0 0.0
    %802 = vmatprep.subr.mxu0 0.0
    %803 = vmatpush1.xpose.msra.mxu0 0.0
    %804 = vmatprep.subr.mxu0 0.0
    %805 = vmatpush1.xpose.msra.mxu0 0.0
    %806 = vmatprep.subr.mxu0 0.0
    %807 = vmatpush1.xpose.msra.mxu0 0.0
    %808 = vmatprep.subr.mxu0 0.0
    %809 = vmatpush1.xpose.msra.mxu0 0.0
    %810 = vmatprep.subr.mxu0 0.0
    %811 = vmatpush1.xpose.msra.mxu0 0.0
    %812 = vmatprep.subr.mxu0 0.0
    %813 = vmatpush1.xpose.msra.mxu0 0.0
    %814 = vmatprep.subr.mxu0 0.0
    %815 = vmatpush1.xpose.msra.mxu0 0.0
    %816 = vmatprep.subr.mxu0 0.0
    %817 = vmatpush1.xpose.msra.mxu0 0.0
    %818 = vmatprep.subr.mxu0 0.0
    %819 = vmatpush1.xpose.msra.mxu0 0.0
    %820 = vmatprep.subr.mxu0 0.0
    %821 = vmatpush1.xpose.msra.mxu0 0.0
    %822 = vmatprep.subr.mxu0 0.0
    %823 = vmatpush1.xpose.msra.mxu0 0.0
    %824 = vmatprep.subr.mxu0 0.0
    %825 = vmatpush1.xpose.msra.mxu0 0.0
    %826 = vmatprep.subr.mxu0 0.0
    %827 = vmatpush1.xpose.msra.mxu0 0.0
    %828 = vmatprep.mubr.f32.mxu0 0.0
    %829 = vmatmul.mubr.f32.gmra.mrb[0].mxu0 %v756
    %v830 = vpop.f32.mrb[0].mxu0
    %v831 = vadd.f32 %v29, %v830
    %v832 = vpop.f32.mrb[0].mxu0
    %833 = vmatprep.mubr.f32.mxu0 0.0
    %834 = vmatmul.mubr.f32.gmra.mrb[0].mxu0 %v758
    %v835 = vpop.f32.mrb[0].mxu0
    %v836 = vadd.f32 %v30, %v835
    %v837 = vpop.f32.mrb[0].mxu0
    %838 = vdwg.mxu0
    %v839 = vmul.f32 %v831, 0.17677669
    %v840 = vmul.f32 %v836, 0.17677669
    %v841 = vsel %vm234, %v839, -inf
    %842 = vmax.xlane.f32.xlu0 %v841
    %v843 = vpop.xlane.xlu0 %842
    %v844 = vsel %vm234, %v840, -inf
    %845 = vmax.xlane.f32.xlu0 %v844
    %v846 = vpop.xlane.xlu0 %845
    %v847 = vsub.f32 %v839, %v843
    %v848 = vsub.f32 %v840, %v846
    %v849 = vmul.f32 %v847, 1.442695
    %v850 = vpow.pop %v849
    %v851 = vmul.f32 %v848, 1.442695
    %v852 = vpow.pop %v851
    %v853 = vsel %vm234, %v850, 0.0
    %854 = vadd.xlane.f32.xlu0 %v853
    %v855 = vpop.xlane.xlu0 %854
    %v856 = vsel %vm234, %v852, 0.0
    %857 = vadd.xlane.f32.xlu0 %v856
    %v858 = vpop.xlane.xlu0 %857
    %v859 = vrcp.pop %v855
    %v860 = vrcp.pop %v858
    %v861 = vmul.f32 %v850, %v859
    %v862 = vmul.f32 %v852, %v860
    %863 = vrot.lane.b32.xlu0 %v134, 40
    %v864 = vpop.permute.xlu0 %863
    %865 = vrot.lane.b32.xlu0 %v139, 40
    %v866 = vpop.permute.xlu0 %865
    %v870 = vsel %vm234, %v861, 0
    %v873 = vsel %vm234, %v862, 0
    %875 = vmatprep.subr.mxu0 0.0
    %876 = vmatpush1.msra.mxu0 %v864
    %877 = vmatprep.subr.mxu0 0.0
    %878 = vmatpush1.msra.mxu0 %v866
    %879 = vmatprep.subr.mxu0 0.0
    %880 = vmatpush1.msra.mxu0 0.0
    %881 = vmatprep.subr.mxu0 0.0
    %882 = vmatpush1.msra.mxu0 0.0
    %883 = vmatprep.subr.mxu0 0.0
    %884 = vmatpush1.msra.mxu0 0.0
    %885 = vmatprep.subr.mxu0 0.0
    %886 = vmatpush1.msra.mxu0 0.0
    %887 = vmatprep.subr.mxu0 0.0
    %888 = vmatpush1.msra.mxu0 0.0
    %889 = vmatprep.subr.mxu0 0.0
    %890 = vmatpush1.msra.mxu0 0.0
    %891 = vmatprep.subr.mxu0 0.0
    %892 = vmatpush1.msra.mxu0 0.0
    %893 = vmatprep.subr.mxu0 0.0
    %894 = vmatpush1.msra.mxu0 0.0
    %895 = vmatprep.subr.mxu0 0.0
    %896 = vmatpush1.msra.mxu0 0.0
    %897 = vmatprep.subr.mxu0 0.0
    %898 = vmatpush1.msra.mxu0 0.0
    %899 = vmatprep.subr.mxu0 0.0
    %900 = vmatpush1.msra.mxu0 0.0
    %901 = vmatprep.subr.mxu0 0.0
    %902 = vmatpush1.msra.mxu0 0.0
    %903 = vmatprep.subr.mxu0 0.0
    %904 = vmatpush1.msra.mxu0 0.0
    %905 = vmatprep.subr.mxu0 0.0
    %906 = vmatpush1.msra.mxu0 0.0
    %907 = vmatprep.subr.mxu0 0.0
    %908 = vmatpush1.msra.mxu0 0.0
    %909 = vmatprep.subr.mxu0 0.0
    %910 = vmatpush1.msra.mxu0 0.0
    %911 = vmatprep.subr.mxu0 0.0
    %912 = vmatpush1.msra.mxu0 0.0
    %913 = vmatprep.subr.mxu0 0.0
    %914 = vmatpush1.msra.mxu0 0.0
    %915 = vmatprep.subr.mxu0 0.0
    %916 = vmatpush1.msra.mxu0 0.0
    %917 = vmatprep.subr.mxu0 0.0
    %918 = vmatpush1.msra.mxu0 0.0
    %919 = vmatprep.subr.mxu0 0.0
    %920 = vmatpush1.msra.mxu0 0.0
    %921 = vmatprep.subr.mxu0 0.0
    %922 = vmatpush1.msra.mxu0 0.0
    %923 = vmatprep.subr.mxu0 0.0
    %924 = vmatpush1.msra.mxu0 0.0
    %925 = vmatprep.subr.mxu0 0.0
    %926 = vmatpush1.msra.mxu0 0.0
    %927 = vmatprep.subr.mxu0 0.0
    %928 = vmatpush1.msra.mxu0 0.0
    %929 = vmatprep.subr.mxu0 0.0
    %930 = vmatpush1.msra.mxu0 0.0
    %931 = vmatprep.subr.mxu0 0.0
    %932 = vmatpush1.msra.mxu0 0.0
    %933 = vmatprep.subr.mxu0 0.0
    %934 = vmatpush1.msra.mxu0 0.0
    %935 = vmatprep.subr.mxu0 0.0
    %936 = vmatpush1.msra.mxu0 0.0
    %937 = vmatprep.subr.mxu0 0.0
    %938 = vmatpush1.msra.mxu0 0.0
    %939 = vmatprep.mubr.f32.mxu0 0.0
    %940 = vmatmul.mubr.f32.gmra.mrb[0].mxu0 %v870
    %v941 = vpop.f32.mrb[0].mxu0
    %v942 = vadd.f32 0.0, %v941
    %v943 = vpop.f32.mrb[0].mxu0
    %944 = vmatprep.mubr.f32.mxu0 0.0
    %945 = vmatmul.mubr.f32.gmra.mrb[0].mxu0 %v873
    %v946 = vpop.f32.mrb[0].mxu0
    %v947 = vadd.f32 0.0, %v946
    %v948 = vpop.f32.mrb[0].mxu0
    %949 = vdwg.mxu0
    %952 = vrot.lane.b32.xlu0 %v538, 8
    %v953 = vpop.permute.xlu0 %952
    %954 = vrot.lane.b32.xlu0 %v543, 8
    %v955 = vpop.permute.xlu0 %954
    %960 = vrot.lane.b32.xlu0 %v740, 16
    %v961 = vpop.permute.xlu0 %960
    %962 = vrot.lane.b32.xlu0 %v745, 16
    %v963 = vpop.permute.xlu0 %962
    %968 = vrot.lane.b32.xlu0 %v942, 24
    %v969 = vpop.permute.xlu0 %968
    %970 = vrot.lane.b32.xlu0 %v947, 24
    %v971 = vpop.permute.xlu0 %970
    %v974 = vsel %vm148, %v336, %v953
    %v975 = vsel %vm148, %v341, %v955
    %v976 = vsel %vm234, %v974, %v961
    %v977 = vsel %vm234, %v975, %v963
    %vm978 = vcmask 195584
    %v979 = vsel %vm978, %v976, %v969
    %v980 = vsel %vm978, %v977, %v971
    %v981 = vlaneseq
    %v982 = vshrl.u32 %v981, 7
    %v983 = vsub.s32 0, %v982
    %v984 = vrot.slane %v59, %v983
    %v986 = vsel %vm60, %v979, 0
    %v989 = vsel %vm60, %v980, 0
    %991 = vmatprep.subr.mxu0 0.0
    %992 = vmatpush1.msra.mxu0 %v35
    %993 = vmatprep.subr.mxu0 0.0
    %994 = vmatpush1.msra.mxu0 %v36
    %995 = vmatprep.subr.mxu0 0.0
    %996 = vmatpush1.msra.mxu0 %v37
    %997 = vmatprep.subr.mxu0 0.0
    %998 = vmatpush1.msra.mxu0 %v38
    %999 = vmatprep.subr.mxu0 0.0
    %1000 = vmatpush1.msra.mxu0 0.0
    %1001 = vmatprep.subr.mxu0 0.0
    %1002 = vmatpush1.msra.mxu0 0.0
    %1003 = vmatprep.subr.mxu0 0.0
    %1004 = vmatpush1.msra.mxu0 0.0
    %1005 = vmatprep.subr.mxu0 0.0
    %1006 = vmatpush1.msra.mxu0 0.0
    %1007 = vmatprep.subr.mxu0 0.0
    %1008 = vmatpush1.msra.mxu0 0.0
    %1009 = vmatprep.subr.mxu0 0.0
    %1010 = vmatpush1.msra.mxu0 0.0
    %1011 = vmatprep.subr.mxu0 0.0
    %1012 = vmatpush1.msra.mxu0 0.0
    %1013 = vmatprep.subr.mxu0 0.0
    %1014 = vmatpush1.msra.mxu0 0.0
    %1015 = vmatprep.subr.mxu0 0.0
    %1016 = vmatpush1.msra.mxu0 0.0
    %1017 = vmatprep.subr.mxu0 0.0
    %1018 = vmatpush1.msra.mxu0 0.0
    %1019 = vmatprep.subr.mxu0 0.0
    %1020 = vmatpush1.msra.mxu0 0.0
    %1021 = vmatprep.subr.mxu0 0.0
    %1022 = vmatpush1.msra.mxu0 0.0
    %1023 = vmatprep.subr.mxu0 0.0
    %1024 = vmatpush1.msra.mxu0 0.0
    %1025 = vmatprep.subr.mxu0 0.0
    %1026 = vmatpush1.msra.mxu0 0.0
    %1027 = vmatprep.subr.mxu0 0.0
    %1028 = vmatpush1.msra.mxu0 0.0
    %1029 = vmatprep.subr.mxu0 0.0
    %1030 = vmatpush1.msra.mxu0 0.0
    %1031 = vmatprep.subr.mxu0 0.0
    %1032 = vmatpush1.msra.mxu0 0.0
    %1033 = vmatprep.subr.mxu0 0.0
    %1034 = vmatpush1.msra.mxu0 0.0
    %1035 = vmatprep.subr.mxu0 0.0
    %1036 = vmatpush1.msra.mxu0 0.0
    %1037 = vmatprep.subr.mxu0 0.0
    %1038 = vmatpush1.msra.mxu0 0.0
    %1039 = vmatprep.subr.mxu0 0.0
    %1040 = vmatpush1.msra.mxu0 0.0
    %1041 = vmatprep.subr.mxu0 0.0
    %1042 = vmatpush1.msra.mxu0 0.0
    %1043 = vmatprep.subr.mxu0 0.0
    %1044 = vmatpush1.msra.mxu0 0.0
    %1045 = vmatprep.subr.mxu0 0.0
    %1046 = vmatpush1.msra.mxu0 0.0
    %1047 = vmatprep.subr.mxu0 0.0
    %1048 = vmatpush1.msra.mxu0 0.0
    %1049 = vmatprep.subr.mxu0 0.0
    %1050 = vmatpush1.msra.mxu0 0.0
    %1051 = vmatprep.subr.mxu0 0.0
    %1052 = vmatpush1.msra.mxu0 0.0
    %1053 = vmatprep.subr.mxu0 0.0
    %1054 = vmatpush1.msra.mxu0 0.0
    %1055 = vmatprep.mubr.f32.mxu0 0.0
    %1056 = vmatmul.mubr.f32.gmra.mrb[0].mxu0 %v986
    %v1057 = vpop.f32.mrb[0].mxu0
    %v1058 = vadd.f32 %v984, %v1057
    %v1059 = vpop.f32.mrb[0].mxu0
    %1060 = vmatprep.mubr.f32.mxu0 0.0
    %1061 = vmatmul.mubr.f32.gmra.mrb[0].mxu0 %v989
    %v1062 = vpop.f32.mrb[0].mxu0
    %v1063 = vadd.f32 %v984, %v1062
    %v1064 = vpop.f32.mrb[0].mxu0
    %1065 = vdwg.mxu0
    %v1066 = vadd.f32 %v1058, %v27
    %v1067 = vadd.f32 %v1063, %v28
    %v1068 = vsel %vm60, %v1066, 0.0
    %1069 = vadd.xlane.f32.xlu0 %v1068
    %v1070 = vpop.xlane.xlu0 %1069
    %v1071 = vsel %vm60, %v1067, 0.0
    %1072 = vadd.xlane.f32.xlu0 %v1071
    %v1073 = vpop.xlane.xlu0 %1072
    %v1074 = vrcp.pop 32.0
    %v1075 = vmul.f32 %v1070, %v1074
    %v1076 = vmul.f32 %v1073, %v1074
    %v1077 = vsub.f32 %v1066, %v1075
    %v1078 = vsub.f32 %v1067, %v1076
    %v1079 = vmul.f32 %v1077, %v1077
    %v1080 = vmul.f32 %v1078, %v1078
    %v1081 = vsel %vm60, %v1079, 0.0
    %1082 = vadd.xlane.f32.xlu0 %v1081
    %v1083 = vpop.xlane.xlu0 %1082
    %v1084 = vsel %vm60, %v1080, 0.0
    %1085 = vadd.xlane.f32.xlu0 %v1084
    %v1086 = vpop.xlane.xlu0 %1085
    %v1087 = vmul.f32 %v1083, %v1074
    %v1088 = vmul.f32 %v1086, %v1074
    %v1089 = vadd.f32 %v1087, 1e-05
    %v1090 = vadd.f32 %v1088, 1e-05
    %v1091 = vrsqrt.pop %v1089
    %v1092 = vrsqrt.pop %v1090
    %v1093 = vmul.f32 %v1077, %v1091
    %v1094 = vmul.f32 %v1078, %v1092
    %v1095 = vlaneseq
    %v1096 = vshrl.u32 %v1095, 7
    %v1097 = vsub.s32 1, %v1096
    %v1098 = vrot.slane %v59, %v1097
    %v1099 = vmul.f32 %v1093, %v1098
    %v1100 = vmul.f32 %v1094, %v1098
    %v1101 = vlaneseq
    %v1102 = vshrl.u32 %v1101, 7
    %v1103 = vsub.s32 2, %v1102
    %v1104 = vrot.slane %v59, %v1103
    %v1105 = vadd.f32 %v1099, %v1104
    %v1106 = vadd.f32 %v1100, %v1104
    %v1107 = vlaneseq
    %v1108 = vshrl.u32 %v1107, 7
    %v1109 = vsub.s32 3, %v1108
    %v1110 = vrot.slane %v59, %v1109
    %v1112 = vsel %vm60, %v1105, 0
    %v1115 = vsel %vm60, %v1106, 0
    %1117 = vmatprep.subr.mxu0 0.0
    %1118 = vmatpush1.msra.mxu0 %v39
    %1119 = vmatprep.subr.mxu0 0.0
    %1120 = vmatpush1.msra.mxu0 %v40
    %1121 = vmatprep.subr.mxu0 0.0
    %1122 = vmatpush1.msra.mxu0 %v41
    %1123 = vmatprep.subr.mxu0 0.0
    %1124 = vmatpush1.msra.mxu0 %v42
    %1125 = vmatprep.subr.mxu0 0.0
    %1126 = vmatpush1.msra.mxu0 0.0
    %1127 = vmatprep.subr.mxu0 0.0
    %1128 = vmatpush1.msra.mxu0 0.0
    %1129 = vmatprep.subr.mxu0 0.0
    %1130 = vmatpush1.msra.mxu0 0.0
    %1131 = vmatprep.subr.mxu0 0.0
    %1132 = vmatpush1.msra.mxu0 0.0
    %1133 = vmatprep.subr.mxu0 0.0
    %1134 = vmatpush1.msra.mxu0 0.0
    %1135 = vmatprep.subr.mxu0 0.0
    %1136 = vmatpush1.msra.mxu0 0.0
    %1137 = vmatprep.subr.mxu0 0.0
    %1138 = vmatpush1.msra.mxu0 0.0
    %1139 = vmatprep.subr.mxu0 0.0
    %1140 = vmatpush1.msra.mxu0 0.0
    %1141 = vmatprep.subr.mxu0 0.0
    %1142 = vmatpush1.msra.mxu0 0.0
    %1143 = vmatprep.subr.mxu0 0.0
    %1144 = vmatpush1.msra.mxu0 0.0
    %1145 = vmatprep.subr.mxu0 0.0
    %1146 = vmatpush1.msra.mxu0 0.0
    %1147 = vmatprep.subr.mxu0 0.0
    %1148 = vmatpush1.msra.mxu0 0.0
    %1149 = vmatprep.subr.mxu0 0.0
    %1150 = vmatpush1.msra.mxu0 0.0
    %1151 = vmatprep.subr.mxu0 0.0
    %1152 = vmatpush1.msra.mxu0 0.0
    %1153 = vmatprep.subr.mxu0 0.0
    %1154 = vmatpush1.msra.mxu0 0.0
    %1155 = vmatprep.subr.mxu0 0.0
    %1156 = vmatpush1.msra.mxu0 0.0
    %1157 = vmatprep.subr.mxu0 0.0
    %1158 = vmatpush1.msra.mxu0 0.0
    %1159 = vmatprep.subr.mxu0 0.0
    %1160 = vmatpush1.msra.mxu0 0.0
    %1161 = vmatprep.subr.mxu0 0.0
    %1162 = vmatpush1.msra.mxu0 0.0
    %1163 = vmatprep.subr.mxu0 0.0
    %1164 = vmatpush1.msra.mxu0 0.0
    %1165 = vmatprep.subr.mxu0 0.0
    %1166 = vmatpush1.msra.mxu0 0.0
    %1167 = vmatprep.subr.mxu0 0.0
    %1168 = vmatpush1.msra.mxu0 0.0
    %1169 = vmatprep.subr.mxu0 0.0
    %1170 = vmatpush1.msra.mxu0 0.0
    %1171 = vmatprep.subr.mxu0 0.0
    %1172 = vmatpush1.msra.mxu0 0.0
    %1173 = vmatprep.subr.mxu0 0.0
    %1174 = vmatpush1.msra.mxu0 0.0
    %1175 = vmatprep.subr.mxu0 0.0
    %1176 = vmatpush1.msra.mxu0 0.0
    %1177 = vmatprep.subr.mxu0 0.0
    %1178 = vmatpush1.msra.mxu0 0.0
    %1179 = vmatprep.subr.mxu0 0.0
    %1180 = vmatpush1.msra.mxu0 0.0
    %1181 = vmatprep.mubr.f32.mxu0 0.0
    %1182 = vmatmul.mubr.f32.gmra.mrb[0].mxu0 %v1112
    %v1183 = vpop.f32.mrb[0].mxu0
    %v1184 = vadd.f32 %v1110, %v1183
    %v1185 = vpop.f32.mrb[0].mxu0
    %1186 = vmatprep.mubr.f32.mxu0 0.0
    %1187 = vmatmul.mubr.f32.gmra.mrb[0].mxu0 %v1115
    %v1188 = vpop.f32.mrb[0].mxu0
    %v1189 = vadd.f32 %v1110, %v1188
    %v1190 = vpop.f32.mrb[0].mxu0
    %1191 = vdwg.mxu0
    %v1192 = vmax.f32 %v1184, 0.0
    %v1193 = vmax.f32 %v1189, 0.0
    %v1194 = vlaneseq
    %v1195 = vshrl.u32 %v1194, 7
    %v1196 = vsub.s32 4, %v1195
    %v1197 = vrot.slane %v59, %v1196
    %1198 = vmatprep.subr.mxu0 0.0
    %1199 = vmatpush1.msra.mxu0 %v43
    %1200 = vmatprep.subr.mxu0 0.0
    %1201 = vmatpush1.msra.mxu0 %v44
    %1202 = vmatprep.subr.mxu0 0.0
    %1203 = vmatpush1.msra.mxu0 %v45
    %1204 = vmatprep.subr.mxu0 0.0
    %1205 = vmatpush1.msra.mxu0 %v46
    %1206 = vmatprep.subr.mxu0 0.0
    %1207 = vmatpush1.msra.mxu0 %v47
    %1208 = vmatprep.subr.mxu0 0.0
    %1209 = vmatpush1.msra.mxu0 %v48
    %1210 = vmatprep.subr.mxu0 0.0
    %1211 = vmatpush1.msra.mxu0 %v49
    %1212 = vmatprep.subr.mxu0 0.0
    %1213 = vmatpush1.msra.mxu0 %v50
    %1214 = vmatprep.subr.mxu0 0.0
    %1215 = vmatpush1.msra.mxu0 %v51
    %1216 = vmatprep.subr.mxu0 0.0
    %1217 = vmatpush1.msra.mxu0 %v52
    %1218 = vmatprep.subr.mxu0 0.0
    %1219 = vmatpush1.msra.mxu0 %v53
    %1220 = vmatprep.subr.mxu0 0.0
    %1221 = vmatpush1.msra.mxu0 %v54
    %1222 = vmatprep.subr.mxu0 0.0
    %1223 = vmatpush1.msra.mxu0 %v55
    %1224 = vmatprep.subr.mxu0 0.0
    %1225 = vmatpush1.msra.mxu0 %v56
    %1226 = vmatprep.subr.mxu0 0.0
    %1227 = vmatpush1.msra.mxu0 %v57
    %1228 = vmatprep.subr.mxu0 0.0
    %1229 = vmatpush1.msra.mxu0 %v58
    %1230 = vmatprep.subr.mxu0 0.0
    %1231 = vmatpush1.msra.mxu0 0.0
    %1232 = vmatprep.subr.mxu0 0.0
    %1233 = vmatpush1.msra.mxu0 0.0
    %1234 = vmatprep.subr.mxu0 0.0
    %1235 = vmatpush1.msra.mxu0 0.0
    %1236 = vmatprep.subr.mxu0 0.0
    %1237 = vmatpush1.msra.mxu0 0.0
    %1238 = vmatprep.subr.mxu0 0.0
    %1239 = vmatpush1.msra.mxu0 0.0
    %1240 = vmatprep.subr.mxu0 0.0
    %1241 = vmatpush1.msra.mxu0 0.0
    %1242 = vmatprep.subr.mxu0 0.0
    %1243 = vmatpush1.msra.mxu0 0.0
    %1244 = vmatprep.subr.mxu0 0.0
    %1245 = vmatpush1.msra.mxu0 0.0
    %1246 = vmatprep.subr.mxu0 0.0
    %1247 = vmatpush1.msra.mxu0 0.0
    %1248 = vmatprep.subr.mxu0 0.0
    %1249 = vmatpush1.msra.mxu0 0.0
    %1250 = vmatprep.subr.mxu0 0.0
    %1251 = vmatpush1.msra.mxu0 0.0
    %1252 = vmatprep.subr.mxu0 0.0
    %1253 = vmatpush1.msra.mxu0 0.0
    %1254 = vmatprep.subr.mxu0 0.0
    %1255 = vmatpush1.msra.mxu0 0.0
    %1256 = vmatprep.subr.mxu0 0.0
    %1257 = vmatpush1.msra.mxu0 0.0
    %1258 = vmatprep.subr.mxu0 0.0
    %1259 = vmatpush1.msra.mxu0 0.0
    %1260 = vmatprep.subr.mxu0 0.0
    %1261 = vmatpush1.msra.mxu0 0.0
    %1262 = vmatprep.mubr.f32.mxu0 0.0
    %1263 = vmatmul.mubr.f32.gmra.mrb[0].mxu0 %v1192
    %v1264 = vpop.f32.mrb[0].mxu0
    %v1265 = vadd.f32 %v1197, %v1264
    %v1266 = vpop.f32.mrb[0].mxu0
    %1267 = vmatprep.mubr.f32.mxu0 0.0
    %1268 = vmatmul.mubr.f32.gmra.mrb[0].mxu0 %v1193
    %v1269 = vpop.f32.mrb[0].mxu0
    %v1270 = vadd.f32 %v1197, %v1269
    %v1271 = vpop.f32.mrb[0].mxu0
    %1272 = vdwg.mxu0
    %v1273 = vadd.f32 %v1265, %v1105
    %v1274 = vadd.f32 %v1270, %v1106
    %v1275 = vsel %vm60, %v1273, 0.0
    %1276 = vadd.xlane.f32.xlu0 %v1275
    %v1277 = vpop.xlane.xlu0 %1276
    %v1278 = vsel %vm60, %v1274, 0.0
    %1279 = vadd.xlane.f32.xlu0 %v1278
    %v1280 = vpop.xlane.xlu0 %1279
    %v1281 = vmul.f32 %v1277, %v1074
    %v1282 = vmul.f32 %v1280, %v1074
    %v1283 = vsub.f32 %v1273, %v1281
    %v1284 = vsub.f32 %v1274, %v1282
    %v1285 = vmul.f32 %v1283, %v1283
    %v1286 = vmul.f32 %v1284, %v1284
    %v1287 = vsel %vm60, %v1285, 0.0
    %1288 = vadd.xlane.f32.xlu0 %v1287
    %v1289 = vpop.xlane.xlu0 %1288
    %v1290 = vsel %vm60, %v1286, 0.0
    %1291 = vadd.xlane.f32.xlu0 %v1290
    %v1292 = vpop.xlane.xlu0 %1291
    %v1293 = vmul.f32 %v1289, %v1074
    %v1294 = vmul.f32 %v1292, %v1074
    %v1295 = vadd.f32 %v1293, 1e-05
    %v1296 = vadd.f32 %v1294, 1e-05
    %v1297 = vrsqrt.pop %v1295
    %v1298 = vrsqrt.pop %v1296
    %v1299 = vmul.f32 %v1283, %v1297
    %v1300 = vmul.f32 %v1284, %v1298
    %v1301 = vlaneseq
    %v1302 = vshrl.u32 %v1301, 7
    %v1303 = vsub.s32 5, %v1302
    %v1304 = vrot.slane %v59, %v1303
    %v1305 = vmul.f32 %v1299, %v1304
    %v1306 = vmul.f32 %v1300, %v1304
    %v1307 = vlaneseq
    %v1308 = vshrl.u32 %v1307, 7
    %v1309 = vsub.s32 6, %v1308
    %v1310 = vrot.slane %v59, %v1309
    %v1311 = vadd.f32 %v1305, %v1310
    %v1312 = vadd.f32 %v1306, %v1310
    %s1313 = scalar_lea.vmem %s2, 32
    %v1314 = vld [vmem:[%s1313] sm:$0xff]
    %v1315 = vld [vmem:[%s1313 + $0x8] sm:$0xff]
    %v1316 = vld [vmem:[%s1313 + $0x10] sm:$0xff]
    %v1317 = vld [vmem:[%s1313 + $0x18] sm:$0xff]
    %s1318 = scalar_lea.vmem %s3, 32
    %v1319 = vld [vmem:[%s1318] sm:$0xff]
    %v1320 = vld [vmem:[%s1318 + $0x8] sm:$0xff]
    %v1321 = vld [vmem:[%s1318 + $0x10] sm:$0xff]
    %v1322 = vld [vmem:[%s1318 + $0x18] sm:$0xff]
    %s1323 = scalar_lea.vmem %s4, 32
    %v1324 = vld [vmem:[%s1323] sm:$0xff]
    %v1325 = vld [vmem:[%s1323 + $0x8] sm:$0xff]
    %v1326 = vld [vmem:[%s1323 + $0x10] sm:$0xff]
    %v1327 = vld [vmem:[%s1323 + $0x18] sm:$0xff]
    %s1328 = scalar_lea.vmem %s5, 128
    %v1329 = vld [vmem:[%s1328] sm:$0xff]
    %v1330 = vld [vmem:[%s1328 + $0x8] sm:$0xff]
    %v1331 = vld [vmem:[%s1328 + $0x10] sm:$0xff]
    %v1332 = vld [vmem:[%s1328 + $0x18] sm:$0xff]
    %v1333 = vld [vmem:[%s1328 + $0x20] sm:$0xff]
    %v1334 = vld [vmem:[%s1328 + $0x28] sm:$0xff]
    %v1335 = vld [vmem:[%s1328 + $0x30] sm:$0xff]
    %v1336 = vld [vmem:[%s1328 + $0x38] sm:$0xff]
    %v1337 = vld [vmem:[%s1328 + $0x40] sm:$0xff]
    %v1338 = vld [vmem:[%s1328 + $0x48] sm:$0xff]
    %v1339 = vld [vmem:[%s1328 + $0x50] sm:$0xff]
    %v1340 = vld [vmem:[%s1328 + $0x58] sm:$0xff]
    %v1341 = vld [vmem:[%s1328 + $0x60] sm:$0xff]
    %v1342 = vld [vmem:[%s1328 + $0x68] sm:$0xff]
    %v1343 = vld [vmem:[%s1328 + $0x70] sm:$0xff]
    %v1344 = vld [vmem:[%s1328 + $0x78] sm:$0xff]
    %s1345 = scalar_lea.vmem %s6, 8
    %v1346 = vld [vmem:[%s1345] sm:$0xff]
    %v1348 = vsel %vm60, %v1311, 0
    %v1351 = vsel %vm60, %v1312, 0
    %1353 = vmatprep.subr.mxu0 0.0
    %1354 = vmatpush1.msra.mxu0 %v1314
    %1355 = vmatprep.subr.mxu0 0.0
    %1356 = vmatpush1.msra.mxu0 %v1315
    %1357 = vmatprep.subr.mxu0 0.0
    %1358 = vmatpush1.msra.mxu0 %v1316
    %1359 = vmatprep.subr.mxu0 0.0
    %1360 = vmatpush1.msra.mxu0 %v1317
    %1361 = vmatprep.subr.mxu0 0.0
    %1362 = vmatpush1.msra.mxu0 0.0
    %1363 = vmatprep.subr.mxu0 0.0
    %1364 = vmatpush1.msra.mxu0 0.0
    %1365 = vmatprep.subr.mxu0 0.0
    %1366 = vmatpush1.msra.mxu0 0.0
    %1367 = vmatprep.subr.mxu0 0.0
    %1368 = vmatpush1.msra.mxu0 0.0
    %1369 = vmatprep.subr.mxu0 0.0
    %1370 = vmatpush1.msra.mxu0 0.0
    %1371 = vmatprep.subr.mxu0 0.0
    %1372 = vmatpush1.msra.mxu0 0.0
    %1373 = vmatprep.subr.mxu0 0.0
    %1374 = vmatpush1.msra.mxu0 0.0
    %1375 = vmatprep.subr.mxu0 0.0
    %1376 = vmatpush1.msra.mxu0 0.0
    %1377 = vmatprep.subr.mxu0 0.0
    %1378 = vmatpush1.msra.mxu0 0.0
    %1379 = vmatprep.subr.mxu0 0.0
    %1380 = vmatpush1.msra.mxu0 0.0
    %1381 = vmatprep.subr.mxu0 0.0
    %1382 = vmatpush1.msra.mxu0 0.0
    %1383 = vmatprep.subr.mxu0 0.0
    %1384 = vmatpush1.msra.mxu0 0.0
    %1385 = vmatprep.subr.mxu0 0.0
    %1386 = vmatpush1.msra.mxu0 0.0
    %1387 = vmatprep.subr.mxu0 0.0
    %1388 = vmatpush1.msra.mxu0 0.0
    %1389 = vmatprep.subr.mxu0 0.0
    %1390 = vmatpush1.msra.mxu0 0.0
    %1391 = vmatprep.subr.mxu0 0.0
    %1392 = vmatpush1.msra.mxu0 0.0
    %1393 = vmatprep.subr.mxu0 0.0
    %1394 = vmatpush1.msra.mxu0 0.0
    %1395 = vmatprep.subr.mxu0 0.0
    %1396 = vmatpush1.msra.mxu0 0.0
    %1397 = vmatprep.subr.mxu0 0.0
    %1398 = vmatpush1.msra.mxu0 0.0
    %1399 = vmatprep.subr.mxu0 0.0
    %1400 = vmatpush1.msra.mxu0 0.0
    %1401 = vmatprep.subr.mxu0 0.0
    %1402 = vmatpush1.msra.mxu0 0.0
    %1403 = vmatprep.subr.mxu0 0.0
    %1404 = vmatpush1.msra.mxu0 0.0
    %1405 = vmatprep.subr.mxu0 0.0
    %1406 = vmatpush1.msra.mxu0 0.0
    %1407 = vmatprep.subr.mxu0 0.0
    %1408 = vmatpush1.msra.mxu0 0.0
    %1409 = vmatprep.subr.mxu0 0.0
    %1410 = vmatpush1.msra.mxu0 0.0
    %1411 = vmatprep.subr.mxu0 0.0
    %1412 = vmatpush1.msra.mxu0 0.0
    %1413 = vmatprep.subr.mxu0 0.0
    %1414 = vmatpush1.msra.mxu0 0.0
    %1415 = vmatprep.subr.mxu0 0.0
    %1416 = vmatpush1.msra.mxu0 0.0
    %1417 = vmatprep.mubr.f32.mxu0 0.0
    %1418 = vmatmul.mubr.f32.gmra.mrb[0].mxu0 %v1348
    %v1419 = vpop.f32.mrb[0].mxu0
    %v1420 = vadd.f32 0.0, %v1419
    %v1421 = vpop.f32.mrb[0].mxu0
    %1422 = vmatprep.mubr.f32.mxu0 0.0
    %1423 = vmatmul.mubr.f32.gmra.mrb[0].mxu0 %v1351
    %v1424 = vpop.f32.mrb[0].mxu0
    %v1425 = vadd.f32 0.0, %v1424
    %v1426 = vpop.f32.mrb[0].mxu0
    %1427 = vdwg.mxu0
    %1430 = vrot.lane.b32.xlu0 %v1420, 96
    %v1431 = vpop.permute.xlu0 %1430
    %1432 = vrot.lane.b32.xlu0 %v1425, 96
    %v1433 = vpop.permute.xlu0 %1432
    %v1434 = vsel %vm148, %v1420, 0
    %v1436 = vsel %vm148, %v1425, 0
    %v1438 = vsel %vm148, %v1431, 0
    %v1440 = vsel %vm148, %v1433, 0
    %1442 = vmatprep.subr.mxu0 0.0
    %1443 = vmatpush1.xpose.msra.mxu0 %v1438
    %1444 = vmatprep.subr.mxu0 0.0
    %1445 = vmatpush1.xpose.msra.mxu0 %v1440
    %1446 = vmatprep.subr.mxu0 0.0
    %1447 = vmatpush1.xpose.msra.mxu0 0.0
    %1448 = vmatprep.subr.mxu0 0.0
    %1449 = vmatpush1.xpose.msra.mxu0 0.0
    %1450 = vmatprep.subr.mxu0 0.0
    %1451 = vmatpush1.xpose.msra.mxu0 0.0
    %1452 = vmatprep.subr.mxu0 0.0
    %1453 = vmatpush1.xpose.msra.mxu0 0.0
    %1454 = vmatprep.subr.mxu0 0.0
    %1455 = vmatpush1.xpose.msra.mxu0 0.0
    %1456 = vmatprep.subr.mxu0 0.0
    %1457 = vmatpush1.xpose.msra.mxu0 0.0
    %1458 = vmatprep.subr.mxu0 0.0
    %1459 = vmatpush1.xpose.msra.mxu0 0.0
    %1460 = vmatprep.subr.mxu0 0.0
    %1461 = vmatpush1.xpose.msra.mxu0 0.0
    %1462 = vmatprep.subr.mxu0 0.0
    %1463 = vmatpush1.xpose.msra.mxu0 0.0
    %1464 = vmatprep.subr.mxu0 0.0
    %1465 = vmatpush1.xpose.msra.mxu0 0.0
    %1466 = vmatprep.subr.mxu0 0.0
    %1467 = vmatpush1.xpose.msra.mxu0 0.0
    %1468 = vmatprep.subr.mxu0 0.0
    %1469 = vmatpush1.xpose.msra.mxu0 0.0
    %1470 = vmatprep.subr.mxu0 0.0
    %1471 = vmatpush1.xpose.msra.mxu0 0.0
    %1472 = vmatprep.subr.mxu0 0.0
    %1473 = vmatpush1.xpose.msra.mxu0 0.0
    %1474 = vmatprep.subr.mxu0 0.0
    %1475 = vmatpush1.xpose.msra.mxu0 0.0
    %1476 = vmatprep.subr.mxu0 0.0
    %1477 = vmatpush1.xpose.msra.mxu0 0.0
    %1478 = vmatprep.subr.mxu0 0.0
    %1479 = vmatpush1.xpose.msra.mxu0 0.0
    %1480 = vmatprep.subr.mxu0 0.0
    %1481 = vmatpush1.xpose.msra.mxu0 0.0
    %1482 = vmatprep.subr.mxu0 0.0
    %1483 = vmatpush1.xpose.msra.mxu0 0.0
    %1484 = vmatprep.subr.mxu0 0.0
    %1485 = vmatpush1.xpose.msra.mxu0 0.0
    %1486 = vmatprep.subr.mxu0 0.0
    %1487 = vmatpush1.xpose.msra.mxu0 0.0
    %1488 = vmatprep.subr.mxu0 0.0
    %1489 = vmatpush1.xpose.msra.mxu0 0.0
    %1490 = vmatprep.subr.mxu0 0.0
    %1491 = vmatpush1.xpose.msra.mxu0 0.0
    %1492 = vmatprep.subr.mxu0 0.0
    %1493 = vmatpush1.xpose.msra.mxu0 0.0
    %1494 = vmatprep.subr.mxu0 0.0
    %1495 = vmatpush1.xpose.msra.mxu0 0.0
    %1496 = vmatprep.subr.mxu0 0.0
    %1497 = vmatpush1.xpose.msra.mxu0 0.0
    %1498 = vmatprep.subr.mxu0 0.0
    %1499 = vmatpush1.xpose.msra.mxu0 0.0
    %1500 = vmatprep.subr.mxu0 0.0
    %1501 = vmatpush1.xpose.msra.mxu0 0.0
    %1502 = vmatprep.subr.mxu0 0.0
    %1503 = vmatpush1.xpose.msra.mxu0 0.0
    %1504 = vmatprep.subr.mxu0 0.0
    %1505 = vmatpush1.xpose.msra.mxu0 0.0
    %1506 = vmatprep.mubr.f32.mxu0 0.0
    %1507 = vmatmul.mubr.f32.gmra.mrb[0].mxu0 %v1434
    %v1508 = vpop.f32.mrb[0].mxu0
    %v1509 = vadd.f32 %v29, %v1508
    %v1510 = vpop.f32.mrb[0].mxu0
    %1511 = vmatprep.mubr.f32.mxu0 0.0
    %1512 = vmatmul.mubr.f32.gmra.mrb[0].mxu0 %v1436
    %v1513 = vpop.f32.mrb[0].mxu0
    %v1514 = vadd.f32 %v30, %v1513
    %v1515 = vpop.f32.mrb[0].mxu0
    %1516 = vdwg.mxu0
    %v1517 = vmul.f32 %v1509, 0.17677669
    %v1518 = vmul.f32 %v1514, 0.17677669
    %v1519 = vsel %vm234, %v1517, -inf
    %1520 = vmax.xlane.f32.xlu0 %v1519
    %v1521 = vpop.xlane.xlu0 %1520
    %v1522 = vsel %vm234, %v1518, -inf
    %1523 = vmax.xlane.f32.xlu0 %v1522
    %v1524 = vpop.xlane.xlu0 %1523
    %v1525 = vsub.f32 %v1517, %v1521
    %v1526 = vsub.f32 %v1518, %v1524
    %v1527 = vmul.f32 %v1525, 1.442695
    %v1528 = vpow.pop %v1527
    %v1529 = vmul.f32 %v1526, 1.442695
    %v1530 = vpow.pop %v1529
    %v1531 = vsel %vm234, %v1528, 0.0
    %1532 = vadd.xlane.f32.xlu0 %v1531
    %v1533 = vpop.xlane.xlu0 %1532
    %v1534 = vsel %vm234, %v1530, 0.0
    %1535 = vadd.xlane.f32.xlu0 %v1534
    %v1536 = vpop.xlane.xlu0 %1535
    %v1537 = vrcp.pop %v1533
    %v1538 = vrcp.pop %v1536
    %v1539 = vmul.f32 %v1528, %v1537
    %v1540 = vmul.f32 %v1530, %v1538
    %1541 = vrot.lane.b32.xlu0 %v1420, 64
    %v1542 = vpop.permute.xlu0 %1541
    %1543 = vrot.lane.b32.xlu0 %v1425, 64
    %v1544 = vpop.permute.xlu0 %1543
    %v1548 = vsel %vm234, %v1539, 0
    %v1551 = vsel %vm234, %v1540, 0
    %1553 = vmatprep.subr.mxu0 0.0
    %1554 = vmatpush1.msra.mxu0 %v1542
    %1555 = vmatprep.subr.mxu0 0.0
    %1556 = vmatpush1.msra.mxu0 %v1544
    %1557 = vmatprep.subr.mxu0 0.0
    %1558 = vmatpush1.msra.mxu0 0.0
    %1559 = vmatprep.subr.mxu0 0.0
    %1560 = vmatpush1.msra.mxu0 0.0
    %1561 = vmatprep.subr.mxu0 0.0
    %1562 = vmatpush1.msra.mxu0 0.0
    %1563 = vmatprep.subr.mxu0 0.0
    %1564 = vmatpush1.msra.mxu0 0.0
    %1565 = vmatprep.subr.mxu0 0.0
    %1566 = vmatpush1.msra.mxu0 0.0
    %1567 = vmatprep.subr.mxu0 0.0
    %1568 = vmatpush1.msra.mxu0 0.0
    %1569 = vmatprep.subr.mxu0 0.0
    %1570 = vmatpush1.msra.mxu0 0.0
    %1571 = vmatprep.subr.mxu0 0.0
    %1572 = vmatpush1.msra.mxu0 0.0
    %1573 = vmatprep.subr.mxu0 0.0
    %1574 = vmatpush1.msra.mxu0 0.0
    %1575 = vmatprep.subr.mxu0 0.0
    %1576 = vmatpush1.msra.mxu0 0.0
    %1577 = vmatprep.subr.mxu0 0.0
    %1578 = vmatpush1.msra.mxu0 0.0
    %1579 = vmatprep.subr.mxu0 0.0
    %1580 = vmatpush1.msra.mxu0 0.0
    %1581 = vmatprep.subr.mxu0 0.0
    %1582 = vmatpush1.msra.mxu0 0.0
    %1583 = vmatprep.subr.mxu0 0.0
    %1584 = vmatpush1.msra.mxu0 0.0
    %1585 = vmatprep.subr.mxu0 0.0
    %1586 = vmatpush1.msra.mxu0 0.0
    %1587 = vmatprep.subr.mxu0 0.0
    %1588 = vmatpush1.msra.mxu0 0.0
    %1589 = vmatprep.subr.mxu0 0.0
    %1590 = vmatpush1.msra.mxu0 0.0
    %1591 = vmatprep.subr.mxu0 0.0
    %1592 = vmatpush1.msra.mxu0 0.0
    %1593 = vmatprep.subr.mxu0 0.0
    %1594 = vmatpush1.msra.mxu0 0.0
    %1595 = vmatprep.subr.mxu0 0.0
    %1596 = vmatpush1.msra.mxu0 0.0
    %1597 = vmatprep.subr.mxu0 0.0
    %1598 = vmatpush1.msra.mxu0 0.0
    %1599 = vmatprep.subr.mxu0 0.0
    %1600 = vmatpush1.msra.mxu0 0.0
    %1601 = vmatprep.subr.mxu0 0.0
    %1602 = vmatpush1.msra.mxu0 0.0
    %1603 = vmatprep.subr.mxu0 0.0
    %1604 = vmatpush1.msra.mxu0 0.0
    %1605 = vmatprep.subr.mxu0 0.0
    %1606 = vmatpush1.msra.mxu0 0.0
    %1607 = vmatprep.subr.mxu0 0.0
    %1608 = vmatpush1.msra.mxu0 0.0
    %1609 = vmatprep.subr.mxu0 0.0
    %1610 = vmatpush1.msra.mxu0 0.0
    %1611 = vmatprep.subr.mxu0 0.0
    %1612 = vmatpush1.msra.mxu0 0.0
    %1613 = vmatprep.subr.mxu0 0.0
    %1614 = vmatpush1.msra.mxu0 0.0
    %1615 = vmatprep.subr.mxu0 0.0
    %1616 = vmatpush1.msra.mxu0 0.0
    %1617 = vmatprep.mubr.f32.mxu0 0.0
    %1618 = vmatmul.mubr.f32.gmra.mrb[0].mxu0 %v1548
    %v1619 = vpop.f32.mrb[0].mxu0
    %v1620 = vadd.f32 0.0, %v1619
    %v1621 = vpop.f32.mrb[0].mxu0
    %1622 = vmatprep.mubr.f32.mxu0 0.0
    %1623 = vmatmul.mubr.f32.gmra.mrb[0].mxu0 %v1551
    %v1624 = vpop.f32.mrb[0].mxu0
    %v1625 = vadd.f32 0.0, %v1624
    %v1626 = vpop.f32.mrb[0].mxu0
    %1627 = vdwg.mxu0
    %1628 = vrot.lane.b32.xlu0 %v1420, 120
    %v1629 = vpop.permute.xlu0 %1628
    %1630 = vrot.lane.b32.xlu0 %v1425, 120
    %v1631 = vpop.permute.xlu0 %1630
    %1632 = vrot.lane.b32.xlu0 %v1420, 88
    %v1633 = vpop.permute.xlu0 %1632
    %1634 = vrot.lane.b32.xlu0 %v1425, 88
    %v1635 = vpop.permute.xlu0 %1634
    %v1636 = vsel %vm148, %v1629, 0
    %v1638 = vsel %vm148, %v1631, 0
    %v1640 = vsel %vm148, %v1633, 0
    %v1642 = vsel %vm148, %v1635, 0
    %1644 = vmatprep.subr.mxu0 0.0
    %1645 = vmatpush1.xpose.msra.mxu0 %v1640
    %1646 = vmatprep.subr.mxu0 0.0
    %1647 = vmatpush1.xpose.msra.mxu0 %v1642
    %1648 = vmatprep.subr.mxu0 0.0
    %1649 = vmatpush1.xpose.msra.mxu0 0.0
    %1650 = vmatprep.subr.mxu0 0.0
    %1651 = vmatpush1.xpose.msra.mxu0 0.0
    %1652 = vmatprep.subr.mxu0 0.0
    %1653 = vmatpush1.xpose.msra.mxu0 0.0
    %1654 = vmatprep.subr.mxu0 0.0
    %1655 = vmatpush1.xpose.msra.mxu0 0.0
    %1656 = vmatprep.subr.mxu0 0.0
    %1657 = vmatpush1.xpose.msra.mxu0 0.0
    %1658 = vmatprep.subr.mxu0 0.0
    %1659 = vmatpush1.xpose.msra.mxu0 0.0
    %1660 = vmatprep.subr.mxu0 0.0
    %1661 = vmatpush1.xpose.msra.mxu0 0.0
    %1662 = vmatprep.subr.mxu0 0.0
    %1663 = vmatpush1.xpose.msra.mxu0 0.0
    %1664 = vmatprep.subr.mxu0 0.0
    %1665 = vmatpush1.xpose.msra.mxu0 0.0
    %1666 = vmatprep.subr.mxu0 0.0
    %1667 = vmatpush1.xpose.msra.mxu0 0.0
    %1668 = vmatprep.subr.mxu0 0.0
    %1669 = vmatpush1.xpose.msra.mxu0 0.0
    %1670 = vmatprep.subr.mxu0 0.0
    %1671 = vmatpush1.xpose.msra.mxu0 0.0
    %1672 = vmatprep.subr.mxu0 0.0
    %1673 = vmatpush1.xpose.msra.mxu0 0.0
    %1674 = vmatprep.subr.mxu0 0.0
    %1675 = vmatpush1.xpose.msra.mxu0 0.0
    %1676 = vmatprep.subr.mxu0 0.0
    %1677 = vmatpush1.xpose.msra.mxu0 0.0
    %1678 = vmatprep.subr.mxu0 0.0
    %1679 = vmatpush1.xpose.msra.mxu0 0.0
    %1680 = vmatprep.subr.mxu0 0.0
    %1681 = vmatpush1.xpose.msra.mxu0 0.0
    %1682 = vmatprep.subr.mxu0 0.0
    %1683 = vmatpush1.xpose.msra.mxu0 0.0
    %1684 = vmatprep.subr.mxu0 0.0
    %1685 = vmatpush1.xpose.msra.mxu0 0.0
    %1686 = vmatprep.subr.mxu0 0.0
    %1687 = vmatpush1.xpose.msra.mxu0 0.0
    %1688 = vmatprep.subr.mxu0 0.0
    %1689 = vmatpush1.xpose.msra.mxu0 0.0
    %1690 = vmatprep.subr.mxu0 0.0
    %1691 = vmatpush1.xpose.msra.mxu0 0.0
    %1692 = vmatprep.subr.mxu0 0.0
    %1693 = vmatpush1.xpose.msra.mxu0 0.0
    %1694 = vmatprep.subr.mxu0 0.0
    %1695 = vmatpush1.xpose.msra.mxu0 0.0
    %1696 = vmatprep.subr.mxu0 0.0
    %1697 = vmatpush1.xpose.msra.mxu0 0.0
    %1698 = vmatprep.subr.mxu0 0.0
    %1699 = vmatpush1.xpose.msra.mxu0 0.0
    %1700 = vmatprep.subr.mxu0 0.0
    %1701 = vmatpush1.xpose.msra.mxu0 0.0
    %1702 = vmatprep.subr.mxu0 0.0
    %1703 = vmatpush1.xpose.msra.mxu0 0.0
    %1704 = vmatprep.subr.mxu0 0.0
    %1705 = vmatpush1.xpose.msra.mxu0 0.0
    %1706 = vmatprep.subr.mxu0 0.0
    %1707 = vmatpush1.xpose.msra.mxu0 0.0
    %1708 = vmatprep.mubr.f32.mxu0 0.0
    %1709 = vmatmul.mubr.f32.gmra.mrb[0].mxu0 %v1636
    %v1710 = vpop.f32.mrb[0].mxu0
    %v1711 = vadd.f32 %v29, %v1710
    %v1712 = vpop.f32.mrb[0].mxu0
    %1713 = vmatprep.mubr.f32.mxu0 0.0
    %1714 = vmatmul.mubr.f32.gmra.mrb[0].mxu0 %v1638
    %v1715 = vpop.f32.mrb[0].mxu0
    %v1716 = vadd.f32 %v30, %v1715
    %v1717 = vpop.f32.mrb[0].mxu0
    %1718 = vdwg.mxu0
    %v1719 = vmul.f32 %v1711, 0.17677669
    %v1720 = vmul.f32 %v1716, 0.17677669
    %v1721 = vsel %vm234, %v1719, -inf
    %1722 = vmax.xlane.f32.xlu0 %v1721
    %v1723 = vpop.xlane.xlu0 %1722
    %v1724 = vsel %vm234, %v1720, -inf
    %1725 = vmax.xlane.f32.xlu0 %v1724
    %v1726 = vpop.xlane.xlu0 %1725
    %v1727 = vsub.f32 %v1719, %v1723
    %v1728 = vsub.f32 %v1720, %v1726
    %v1729 = vmul.f32 %v1727, 1.442695
    %v1730 = vpow.pop %v1729
    %v1731 = vmul.f32 %v1728, 1.442695
    %v1732 = vpow.pop %v1731
    %v1733 = vsel %vm234, %v1730, 0.0
    %1734 = vadd.xlane.f32.xlu0 %v1733
    %v1735 = vpop.xlane.xlu0 %1734
    %v1736 = vsel %vm234, %v1732, 0.0
    %1737 = vadd.xlane.f32.xlu0 %v1736
    %v1738 = vpop.xlane.xlu0 %1737
    %v1739 = vrcp.pop %v1735
    %v1740 = vrcp.pop %v1738
    %v1741 = vmul.f32 %v1730, %v1739
    %v1742 = vmul.f32 %v1732, %v1740
    %1743 = vrot.lane.b32.xlu0 %v1420, 56
    %v1744 = vpop.permute.xlu0 %1743
    %1745 = vrot.lane.b32.xlu0 %v1425, 56
    %v1746 = vpop.permute.xlu0 %1745
    %v1750 = vsel %vm234, %v1741, 0
    %v1753 = vsel %vm234, %v1742, 0
    %1755 = vmatprep.subr.mxu0 0.0
    %1756 = vmatpush1.msra.mxu0 %v1744
    %1757 = vmatprep.subr.mxu0 0.0
    %1758 = vmatpush1.msra.mxu0 %v1746
    %1759 = vmatprep.subr.mxu0 0.0
    %1760 = vmatpush1.msra.mxu0 0.0
    %1761 = vmatprep.subr.mxu0 0.0
    %1762 = vmatpush1.msra.mxu0 0.0
    %1763 = vmatprep.subr.mxu0 0.0
    %1764 = vmatpush1.msra.mxu0 0.0
    %1765 = vmatprep.subr.mxu0 0.0
    %1766 = vmatpush1.msra.mxu0 0.0
    %1767 = vmatprep.subr.mxu0 0.0
    %1768 = vmatpush1.msra.mxu0 0.0
    %1769 = vmatprep.subr.mxu0 0.0
    %1770 = vmatpush1.msra.mxu0 0.0
    %1771 = vmatprep.subr.mxu0 0.0
    %1772 = vmatpush1.msra.mxu0 0.0
    %1773 = vmatprep.subr.mxu0 0.0
    %1774 = vmatpush1.msra.mxu0 0.0
    %1775 = vmatprep.subr.mxu0 0.0
    %1776 = vmatpush1.msra.mxu0 0.0
    %1777 = vmatprep.subr.mxu0 0.0
    %1778 = vmatpush1.msra.mxu0 0.0
    %1779 = vmatprep.subr.mxu0 0.0
    %1780 = vmatpush1.msra.mxu0 0.0
    %1781 = vmatprep.subr.mxu0 0.0
    %1782 = vmatpush1.msra.mxu0 0.0
    %1783 = vmatprep.subr.mxu0 0.0
    %1784 = vmatpush1.msra.mxu0 0.0
    %1785 = vmatprep.subr.mxu0 0.0
    %1786 = vmatpush1.msra.mxu0 0.0
    %1787 = vmatprep.subr.mxu0 0.0
    %1788 = vmatpush1.msra.mxu0 0.0
    %1789 = vmatprep.subr.mxu0 0.0
    %1790 = vmatpush1.msra.mxu0 0.0
    %1791 = vmatprep.subr.mxu0 0.0
    %1792 = vmatpush1.msra.mxu0 0.0
    %1793 = vmatprep.subr.mxu0 0.0
    %1794 = vmatpush1.msra.mxu0 0.0
    %1795 = vmatprep.subr.mxu0 0.0
    %1796 = vmatpush1.msra.mxu0 0.0
    %1797 = vmatprep.subr.mxu0 0.0
    %1798 = vmatpush1.msra.mxu0 0.0
    %1799 = vmatprep.subr.mxu0 0.0
    %1800 = vmatpush1.msra.mxu0 0.0
    %1801 = vmatprep.subr.mxu0 0.0
    %1802 = vmatpush1.msra.mxu0 0.0
    %1803 = vmatprep.subr.mxu0 0.0
    %1804 = vmatpush1.msra.mxu0 0.0
    %1805 = vmatprep.subr.mxu0 0.0
    %1806 = vmatpush1.msra.mxu0 0.0
    %1807 = vmatprep.subr.mxu0 0.0
    %1808 = vmatpush1.msra.mxu0 0.0
    %1809 = vmatprep.subr.mxu0 0.0
    %1810 = vmatpush1.msra.mxu0 0.0
    %1811 = vmatprep.subr.mxu0 0.0
    %1812 = vmatpush1.msra.mxu0 0.0
    %1813 = vmatprep.subr.mxu0 0.0
    %1814 = vmatpush1.msra.mxu0 0.0
    %1815 = vmatprep.subr.mxu0 0.0
    %1816 = vmatpush1.msra.mxu0 0.0
    %1817 = vmatprep.subr.mxu0 0.0
    %1818 = vmatpush1.msra.mxu0 0.0
    %1819 = vmatprep.mubr.f32.mxu0 0.0
    %1820 = vmatmul.mubr.f32.gmra.mrb[0].mxu0 %v1750
    %v1821 = vpop.f32.mrb[0].mxu0
    %v1822 = vadd.f32 0.0, %v1821
    %v1823 = vpop.f32.mrb[0].mxu0
    %1824 = vmatprep.mubr.f32.mxu0 0.0
    %1825 = vmatmul.mubr.f32.gmra.mrb[0].mxu0 %v1753
    %v1826 = vpop.f32.mrb[0].mxu0
    %v1827 = vadd.f32 0.0, %v1826
    %v1828 = vpop.f32.mrb[0].mxu0
    %1829 = vdwg.mxu0
    %1830 = vrot.lane.b32.xlu0 %v1420, 112
    %v1831 = vpop.permute.xlu0 %1830
    %1832 = vrot.lane.b32.xlu0 %v1425, 112
    %v1833 = vpop.permute.xlu0 %1832
    %1834 = vrot.lane.b32.xlu0 %v1420, 80
    %v1835 = vpop.permute.xlu0 %1834
    %1836 = vrot.lane.b32.xlu0 %v1425, 80
    %v1837 = vpop.permute.xlu0 %1836
    %v1838 = vsel %vm148, %v1831, 0
    %v1840 = vsel %vm148, %v1833, 0
    %v1842 = vsel %vm148, %v1835, 0
    %v1844 = vsel %vm148, %v1837, 0
    %1846 = vmatprep.subr.mxu0 0.0
    %1847 = vmatpush1.xpose.msra.mxu0 %v1842
    %1848 = vmatprep.subr.mxu0 0.0
    %1849 = vmatpush1.xpose.msra.mxu0 %v1844
    %1850 = vmatprep.subr.mxu0 0.0
    %1851 = vmatpush1.xpose.msra.mxu0 0.0
    %1852 = vmatprep.subr.mxu0 0.0
    %1853 = vmatpush1.xpose.msra.mxu0 0.0
    %1854 = vmatprep.subr.mxu0 0.0
    %1855 = vmatpush1.xpose.msra.mxu0 0.0
    %1856 = vmatprep.subr.mxu0 0.0
    %1857 = vmatpush1.xpose.msra.mxu0 0.0
    %1858 = vmatprep.subr.mxu0 0.0
    %1859 = vmatpush1.xpose.msra.mxu0 0.0
    %1860 = vmatprep.subr.mxu0 0.0
    %1861 = vmatpush1.xpose.msra.mxu0 0.0
    %1862 = vmatprep.subr.mxu0 0.0
    %1863 = vmatpush1.xpose.msra.mxu0 0.0
    %1864 = vmatprep.subr.mxu0 0.0
    %1865 = vmatpush1.xpose.msra.mxu0 0.0
    %1866 = vmatprep.subr.mxu0 0.0
    %1867 = vmatpush1.xpose.msra.mxu0 0.0
    %1868 = vmatprep.subr.mxu0 0.0
    %1869 = vmatpush1.xpose.msra.mxu0 0.0
    %1870 = vmatprep.subr.mxu0 0.0
    %1871 = vmatpush1.xpose.msra.mxu0 0.0
    %1872 = vmatprep.subr.mxu0 0.0
    %1873 = vmatpush1.xpose.msra.mxu0 0.0
    %1874 = vmatprep.subr.mxu0 0.0
    %1875 = vmatpush1.xpose.msra.mxu0 0.0
    %1876 = vmatprep.subr.mxu0 0.0
    %1877 = vmatpush1.xpose.msra.mxu0 0.0
    %1878 = vmatprep.subr.mxu0 0.0
    %1879 = vmatpush1.xpose.msra.mxu0 0.0
    %1880 = vmatprep.subr.mxu0 0.0
    %1881 = vmatpush1.xpose.msra.mxu0 0.0
    %1882 = vmatprep.subr.mxu0 0.0
    %1883 = vmatpush1.xpose.msra.mxu0 0.0
    %1884 = vmatprep.subr.mxu0 0.0
    %1885 = vmatpush1.xpose.msra.mxu0 0.0
    %1886 = vmatprep.subr.mxu0 0.0
    %1887 = vmatpush1.xpose.msra.mxu0 0.0
    %1888 = vmatprep.subr.mxu0 0.0
    %1889 = vmatpush1.xpose.msra.mxu0 0.0
    %1890 = vmatprep.subr.mxu0 0.0
    %1891 = vmatpush1.xpose.msra.mxu0 0.0
    %1892 = vmatprep.subr.mxu0 0.0
    %1893 = vmatpush1.xpose.msra.mxu0 0.0
    %1894 = vmatprep.subr.mxu0 0.0
    %1895 = vmatpush1.xpose.msra.mxu0 0.0
    %1896 = vmatprep.subr.mxu0 0.0
    %1897 = vmatpush1.xpose.msra.mxu0 0.0
    %1898 = vmatprep.subr.mxu0 0.0
    %1899 = vmatpush1.xpose.msra.mxu0 0.0
    %1900 = vmatprep.subr.mxu0 0.0
    %1901 = vmatpush1.xpose.msra.mxu0 0.0
    %1902 = vmatprep.subr.mxu0 0.0
    %1903 = vmatpush1.xpose.msra.mxu0 0.0
    %1904 = vmatprep.subr.mxu0 0.0
    %1905 = vmatpush1.xpose.msra.mxu0 0.0
    %1906 = vmatprep.subr.mxu0 0.0
    %1907 = vmatpush1.xpose.msra.mxu0 0.0
    %1908 = vmatprep.subr.mxu0 0.0
    %1909 = vmatpush1.xpose.msra.mxu0 0.0
    %1910 = vmatprep.mubr.f32.mxu0 0.0
    %1911 = vmatmul.mubr.f32.gmra.mrb[0].mxu0 %v1838
    %v1912 = vpop.f32.mrb[0].mxu0
    %v1913 = vadd.f32 %v29, %v1912
    %v1914 = vpop.f32.mrb[0].mxu0
    %1915 = vmatprep.mubr.f32.mxu0 0.0
    %1916 = vmatmul.mubr.f32.gmra.mrb[0].mxu0 %v1840
    %v1917 = vpop.f32.mrb[0].mxu0
    %v1918 = vadd.f32 %v30, %v1917
    %v1919 = vpop.f32.mrb[0].mxu0
    %1920 = vdwg.mxu0
    %v1921 = vmul.f32 %v1913, 0.17677669
    %v1922 = vmul.f32 %v1918, 0.17677669
    %v1923 = vsel %vm234, %v1921, -inf
    %1924 = vmax.xlane.f32.xlu0 %v1923
    %v1925 = vpop.xlane.xlu0 %1924
    %v1926 = vsel %vm234, %v1922, -inf
    %1927 = vmax.xlane.f32.xlu0 %v1926
    %v1928 = vpop.xlane.xlu0 %1927
    %v1929 = vsub.f32 %v1921, %v1925
    %v1930 = vsub.f32 %v1922, %v1928
    %v1931 = vmul.f32 %v1929, 1.442695
    %v1932 = vpow.pop %v1931
    %v1933 = vmul.f32 %v1930, 1.442695
    %v1934 = vpow.pop %v1933
    %v1935 = vsel %vm234, %v1932, 0.0
    %1936 = vadd.xlane.f32.xlu0 %v1935
    %v1937 = vpop.xlane.xlu0 %1936
    %v1938 = vsel %vm234, %v1934, 0.0
    %1939 = vadd.xlane.f32.xlu0 %v1938
    %v1940 = vpop.xlane.xlu0 %1939
    %v1941 = vrcp.pop %v1937
    %v1942 = vrcp.pop %v1940
    %v1943 = vmul.f32 %v1932, %v1941
    %v1944 = vmul.f32 %v1934, %v1942
    %1945 = vrot.lane.b32.xlu0 %v1420, 48
    %v1946 = vpop.permute.xlu0 %1945
    %1947 = vrot.lane.b32.xlu0 %v1425, 48
    %v1948 = vpop.permute.xlu0 %1947
    %v1952 = vsel %vm234, %v1943, 0
    %v1955 = vsel %vm234, %v1944, 0
    %1957 = vmatprep.subr.mxu0 0.0
    %1958 = vmatpush1.msra.mxu0 %v1946
    %1959 = vmatprep.subr.mxu0 0.0
    %1960 = vmatpush1.msra.mxu0 %v1948
    %1961 = vmatprep.subr.mxu0 0.0
    %1962 = vmatpush1.msra.mxu0 0.0
    %1963 = vmatprep.subr.mxu0 0.0
    %1964 = vmatpush1.msra.mxu0 0.0
    %1965 = vmatprep.subr.mxu0 0.0
    %1966 = vmatpush1.msra.mxu0 0.0
    %1967 = vmatprep.subr.mxu0 0.0
    %1968 = vmatpush1.msra.mxu0 0.0
    %1969 = vmatprep.subr.mxu0 0.0
    %1970 = vmatpush1.msra.mxu0 0.0
    %1971 = vmatprep.subr.mxu0 0.0
    %1972 = vmatpush1.msra.mxu0 0.0
    %1973 = vmatprep.subr.mxu0 0.0
    %1974 = vmatpush1.msra.mxu0 0.0
    %1975 = vmatprep.subr.mxu0 0.0
    %1976 = vmatpush1.msra.mxu0 0.0
    %1977 = vmatprep.subr.mxu0 0.0
    %1978 = vmatpush1.msra.mxu0 0.0
    %1979 = vmatprep.subr.mxu0 0.0
    %1980 = vmatpush1.msra.mxu0 0.0
    %1981 = vmatprep.subr.mxu0 0.0
    %1982 = vmatpush1.msra.mxu0 0.0
    %1983 = vmatprep.subr.mxu0 0.0
    %1984 = vmatpush1.msra.mxu0 0.0
    %1985 = vmatprep.subr.mxu0 0.0
    %1986 = vmatpush1.msra.mxu0 0.0
    %1987 = vmatprep.subr.mxu0 0.0
    %1988 = vmatpush1.msra.mxu0 0.0
    %1989 = vmatprep.subr.mxu0 0.0
    %1990 = vmatpush1.msra.mxu0 0.0
    %1991 = vmatprep.subr.mxu0 0.0
    %1992 = vmatpush1.msra.mxu0 0.0
    %1993 = vmatprep.subr.mxu0 0.0
    %1994 = vmatpush1.msra.mxu0 0.0
    %1995 = vmatprep.subr.mxu0 0.0
    %1996 = vmatpush1.msra.mxu0 0.0
    %1997 = vmatprep.subr.mxu0 0.0
    %1998 = vmatpush1.msra.mxu0 0.0
    %1999 = vmatprep.subr.mxu0 0.0
    %2000 = vmatpush1.msra.mxu0 0.0
    %2001 = vmatprep.subr.mxu0 0.0
    %2002 = vmatpush1.msra.mxu0 0.0
    %2003 = vmatprep.subr.mxu0 0.0
    %2004 = vmatpush1.msra.mxu0 0.0
    %2005 = vmatprep.subr.mxu0 0.0
    %2006 = vmatpush1.msra.mxu0 0.0
    %2007 = vmatprep.subr.mxu0 0.0
    %2008 = vmatpush1.msra.mxu0 0.0
    %2009 = vmatprep.subr.mxu0 0.0
    %2010 = vmatpush1.msra.mxu0 0.0
    %2011 = vmatprep.subr.mxu0 0.0
    %2012 = vmatpush1.msra.mxu0 0.0
    %2013 = vmatprep.subr.mxu0 0.0
    %2014 = vmatpush1.msra.mxu0 0.0
    %2015 = vmatprep.subr.mxu0 0.0
    %2016 = vmatpush1.msra.mxu0 0.0
    %2017 = vmatprep.subr.mxu0 0.0
    %2018 = vmatpush1.msra.mxu0 0.0
    %2019 = vmatprep.subr.mxu0 0.0
    %2020 = vmatpush1.msra.mxu0 0.0
    %2021 = vmatprep.mubr.f32.mxu0 0.0
    %2022 = vmatmul.mubr.f32.gmra.mrb[0].mxu0 %v1952
    %v2023 = vpop.f32.mrb[0].mxu0
    %v2024 = vadd.f32 0.0, %v2023
    %v2025 = vpop.f32.mrb[0].mxu0
    %2026 = vmatprep.mubr.f32.mxu0 0.0
    %2027 = vmatmul.mubr.f32.gmra.mrb[0].mxu0 %v1955
    %v2028 = vpop.f32.mrb[0].mxu0
    %v2029 = vadd.f32 0.0, %v2028
    %v2030 = vpop.f32.mrb[0].mxu0
    %2031 = vdwg.mxu0
    %2032 = vrot.lane.b32.xlu0 %v1420, 104
    %v2033 = vpop.permute.xlu0 %2032
    %2034 = vrot.lane.b32.xlu0 %v1425, 104
    %v2035 = vpop.permute.xlu0 %2034
    %2036 = vrot.lane.b32.xlu0 %v1420, 72
    %v2037 = vpop.permute.xlu0 %2036
    %2038 = vrot.lane.b32.xlu0 %v1425, 72
    %v2039 = vpop.permute.xlu0 %2038
    %v2040 = vsel %vm148, %v2033, 0
    %v2042 = vsel %vm148, %v2035, 0
    %v2044 = vsel %vm148, %v2037, 0
    %v2046 = vsel %vm148, %v2039, 0
    %2048 = vmatprep.subr.mxu0 0.0
    %2049 = vmatpush1.xpose.msra.mxu0 %v2044
    %2050 = vmatprep.subr.mxu0 0.0
    %2051 = vmatpush1.xpose.msra.mxu0 %v2046
    %2052 = vmatprep.subr.mxu0 0.0
    %2053 = vmatpush1.xpose.msra.mxu0 0.0
    %2054 = vmatprep.subr.mxu0 0.0
    %2055 = vmatpush1.xpose.msra.mxu0 0.0
    %2056 = vmatprep.subr.mxu0 0.0
    %2057 = vmatpush1.xpose.msra.mxu0 0.0
    %2058 = vmatprep.subr.mxu0 0.0
    %2059 = vmatpush1.xpose.msra.mxu0 0.0
    %2060 = vmatprep.subr.mxu0 0.0
    %2061 = vmatpush1.xpose.msra.mxu0 0.0
    %2062 = vmatprep.subr.mxu0 0.0
    %2063 = vmatpush1.xpose.msra.mxu0 0.0
    %2064 = vmatprep.subr.mxu0 0.0
    %2065 = vmatpush1.xpose.msra.mxu0 0.0
    %2066 = vmatprep.subr.mxu0 0.0
    %2067 = vmatpush1.xpose.msra.mxu0 0.0
    %2068 = vmatprep.subr.mxu0 0.0
    %2069 = vmatpush1.xpose.msra.mxu0 0.0
    %2070 = vmatprep.subr.mxu0 0.0
    %2071 = vmatpush1.xpose.msra.mxu0 0.0
    %2072 = vmatprep.subr.mxu0 0.0
    %2073 = vmatpush1.xpose.msra.mxu0 0.0
    %2074 = vmatprep.subr.mxu0 0.0
    %2075 = vmatpush1.xpose.msra.mxu0 0.0
    %2076 = vmatprep.subr.mxu0 0.0
    %2077 = vmatpush1.xpose.msra.mxu0 0.0
    %2078 = vmatprep.subr.mxu0 0.0
    %2079 = vmatpush1.xpose.msra.mxu0 0.0
    %2080 = vmatprep.subr.mxu0 0.0
    %2081 = vmatpush1.xpose.msra.mxu0 0.0
    %2082 = vmatprep.subr.mxu0 0.0
    %2083 = vmatpush1.xpose.msra.mxu0 0.0
    %2084 = vmatprep.subr.mxu0 0.0
    %2085 = vmatpush1.xpose.msra.mxu0 0.0
    %2086 = vmatprep.subr.mxu0 0.0
    %2087 = vmatpush1.xpose.msra.mxu0 0.0
    %2088 = vmatprep.subr.mxu0 0.0
    %2089 = vmatpush1.xpose.msra.mxu0 0.0
    %2090 = vmatprep.subr.mxu0 0.0
    %2091 = vmatpush1.xpose.msra.mxu0 0.0
    %2092 = vmatprep.subr.mxu0 0.0
    %2093 = vmatpush1.xpose.msra.mxu0 0.0
    %2094 = vmatprep.subr.mxu0 0.0
    %2095 = vmatpush1.xpose.msra.mxu0 0.0
    %2096 = vmatprep.subr.mxu0 0.0
    %2097 = vmatpush1.xpose.msra.mxu0 0.0
    %2098 = vmatprep.subr.mxu0 0.0
    %2099 = vmatpush1.xpose.msra.mxu0 0.0
    %2100 = vmatprep.subr.mxu0 0.0
    %2101 = vmatpush1.xpose.msra.mxu0 0.0
    %2102 = vmatprep.subr.mxu0 0.0
    %2103 = vmatpush1.xpose.msra.mxu0 0.0
    %2104 = vmatprep.subr.mxu0 0.0
    %2105 = vmatpush1.xpose.msra.mxu0 0.0
    %2106 = vmatprep.subr.mxu0 0.0
    %2107 = vmatpush1.xpose.msra.mxu0 0.0
    %2108 = vmatprep.subr.mxu0 0.0
    %2109 = vmatpush1.xpose.msra.mxu0 0.0
    %2110 = vmatprep.subr.mxu0 0.0
    %2111 = vmatpush1.xpose.msra.mxu0 0.0
    %2112 = vmatprep.mubr.f32.mxu0 0.0
    %2113 = vmatmul.mubr.f32.gmra.mrb[0].mxu0 %v2040
    %v2114 = vpop.f32.mrb[0].mxu0
    %v2115 = vadd.f32 %v29, %v2114
    %v2116 = vpop.f32.mrb[0].mxu0
    %2117 = vmatprep.mubr.f32.mxu0 0.0
    %2118 = vmatmul.mubr.f32.gmra.mrb[0].mxu0 %v2042
    %v2119 = vpop.f32.mrb[0].mxu0
    %v2120 = vadd.f32 %v30, %v2119
    %v2121 = vpop.f32.mrb[0].mxu0
    %2122 = vdwg.mxu0
    %v2123 = vmul.f32 %v2115, 0.17677669
    %v2124 = vmul.f32 %v2120, 0.17677669
    %v2125 = vsel %vm234, %v2123, -inf
    %2126 = vmax.xlane.f32.xlu0 %v2125
    %v2127 = vpop.xlane.xlu0 %2126
    %v2128 = vsel %vm234, %v2124, -inf
    %2129 = vmax.xlane.f32.xlu0 %v2128
    %v2130 = vpop.xlane.xlu0 %2129
    %v2131 = vsub.f32 %v2123, %v2127
    %v2132 = vsub.f32 %v2124, %v2130
    %v2133 = vmul.f32 %v2131, 1.442695
    %v2134 = vpow.pop %v2133
    %v2135 = vmul.f32 %v2132, 1.442695
    %v2136 = vpow.pop %v2135
    %v2137 = vsel %vm234, %v2134, 0.0
    %2138 = vadd.xlane.f32.xlu0 %v2137
    %v2139 = vpop.xlane.xlu0 %2138
    %v2140 = vsel %vm234, %v2136, 0.0
    %2141 = vadd.xlane.f32.xlu0 %v2140
    %v2142 = vpop.xlane.xlu0 %2141
    %v2143 = vrcp.pop %v2139
    %v2144 = vrcp.pop %v2142
    %v2145 = vmul.f32 %v2134, %v2143
    %v2146 = vmul.f32 %v2136, %v2144
    %2147 = vrot.lane.b32.xlu0 %v1420, 40
    %v2148 = vpop.permute.xlu0 %2147
    %2149 = vrot.lane.b32.xlu0 %v1425, 40
    %v2150 = vpop.permute.xlu0 %2149
    %v2154 = vsel %vm234, %v2145, 0
    %v2157 = vsel %vm234, %v2146, 0
    %2159 = vmatprep.subr.mxu0 0.0
    %2160 = vmatpush1.msra.mxu0 %v2148
    %2161 = vmatprep.subr.mxu0 0.0
    %2162 = vmatpush1.msra.mxu0 %v2150
    %2163 = vmatprep.subr.mxu0 0.0
    %2164 = vmatpush1.msra.mxu0 0.0
    %2165 = vmatprep.subr.mxu0 0.0
    %2166 = vmatpush1.msra.mxu0 0.0
    %2167 = vmatprep.subr.mxu0 0.0
    %2168 = vmatpush1.msra.mxu0 0.0
    %2169 = vmatprep.subr.mxu0 0.0
    %2170 = vmatpush1.msra.mxu0 0.0
    %2171 = vmatprep.subr.mxu0 0.0
    %2172 = vmatpush1.msra.mxu0 0.0
    %2173 = vmatprep.subr.mxu0 0.0
    %2174 = vmatpush1.msra.mxu0 0.0
    %2175 = vmatprep.subr.mxu0 0.0
    %2176 = vmatpush1.msra.mxu0 0.0
    %2177 = vmatprep.subr.mxu0 0.0
    %2178 = vmatpush1.msra.mxu0 0.0
    %2179 = vmatprep.subr.mxu0 0.0
    %2180 = vmatpush1.msra.mxu0 0.0
    %2181 = vmatprep.subr.mxu0 0.0
    %2182 = vmatpush1.msra.mxu0 0.0
    %2183 = vmatprep.subr.mxu0 0.0
    %2184 = vmatpush1.msra.mxu0 0.0
    %2185 = vmatprep.subr.mxu0 0.0
    %2186 = vmatpush1.msra.mxu0 0.0
    %2187 = vmatprep.subr.mxu0 0.0
    %2188 = vmatpush1.msra.mxu0 0.0
    %2189 = vmatprep.subr.mxu0 0.0
    %2190 = vmatpush1.msra.mxu0 0.0
    %2191 = vmatprep.subr.mxu0 0.0
    %2192 = vmatpush1.msra.mxu0 0.0
    %2193 = vmatprep.subr.mxu0 0.0
    %2194 = vmatpush1.msra.mxu0 0.0
    %2195 = vmatprep.subr.mxu0 0.0
    %2196 = vmatpush1.msra.mxu0 0.0
    %2197 = vmatprep.subr.mxu0 0.0
    %2198 = vmatpush1.msra.mxu0 0.0
    %2199 = vmatprep.subr.mxu0 0.0
    %2200 = vmatpush1.msra.mxu0 0.0
    %2201 = vmatprep.subr.mxu0 0.0
    %2202 = vmatpush1.msra.mxu0 0.0
    %2203 = vmatprep.subr.mxu0 0.0
    %2204 = vmatpush1.msra.mxu0 0.0
    %2205 = vmatprep.subr.mxu0 0.0
    %2206 = vmatpush1.msra.mxu0 0.0
    %2207 = vmatprep.subr.mxu0 0.0
    %2208 = vmatpush1.msra.mxu0 0.0
    %2209 = vmatprep.subr.mxu0 0.0
    %2210 = vmatpush1.msra.mxu0 0.0
    %2211 = vmatprep.subr.mxu0 0.0
    %2212 = vmatpush1.msra.mxu0 0.0
    %2213 = vmatprep.subr.mxu0 0.0
    %2214 = vmatpush1.msra.mxu0 0.0
    %2215 = vmatprep.subr.mxu0 0.0
    %2216 = vmatpush1.msra.mxu0 0.0
    %2217 = vmatprep.subr.mxu0 0.0
    %2218 = vmatpush1.msra.mxu0 0.0
    %2219 = vmatprep.subr.mxu0 0.0
    %2220 = vmatpush1.msra.mxu0 0.0
    %2221 = vmatprep.subr.mxu0 0.0
    %2222 = vmatpush1.msra.mxu0 0.0
    %2223 = vmatprep.mubr.f32.mxu0 0.0
    %2224 = vmatmul.mubr.f32.gmra.mrb[0].mxu0 %v2154
    %v2225 = vpop.f32.mrb[0].mxu0
    %v2226 = vadd.f32 0.0, %v2225
    %v2227 = vpop.f32.mrb[0].mxu0
    %2228 = vmatprep.mubr.f32.mxu0 0.0
    %2229 = vmatmul.mubr.f32.gmra.mrb[0].mxu0 %v2157
    %v2230 = vpop.f32.mrb[0].mxu0
    %v2231 = vadd.f32 0.0, %v2230
    %v2232 = vpop.f32.mrb[0].mxu0
    %2233 = vdwg.mxu0
    %2236 = vrot.lane.b32.xlu0 %v1822, 8
    %v2237 = vpop.permute.xlu0 %2236
    %2238 = vrot.lane.b32.xlu0 %v1827, 8
    %v2239 = vpop.permute.xlu0 %2238
    %2244 = vrot.lane.b32.xlu0 %v2024, 16
    %v2245 = vpop.permute.xlu0 %2244
    %2246 = vrot.lane.b32.xlu0 %v2029, 16
    %v2247 = vpop.permute.xlu0 %2246
    %2252 = vrot.lane.b32.xlu0 %v2226, 24
    %v2253 = vpop.permute.xlu0 %2252
    %2254 = vrot.lane.b32.xlu0 %v2231, 24
    %v2255 = vpop.permute.xlu0 %2254
    %v2258 = vsel %vm148, %v1620, %v2237
    %v2259 = vsel %vm148, %v1625, %v2239
    %v2260 = vsel %vm234, %v2258, %v2245
    %v2261 = vsel %vm234, %v2259, %v2247
    %v2262 = vsel %vm978, %v2260, %v2253
    %v2263 = vsel %vm978, %v2261, %v2255
    %v2264 = vlaneseq
    %v2265 = vshrl.u32 %v2264, 7
    %v2266 = vsub.s32 0, %v2265
    %v2267 = vrot.slane %v1346, %v2266
    %v2269 = vsel %vm60, %v2262, 0
    %v2272 = vsel %vm60, %v2263, 0
    %2274 = vmatprep.subr.mxu0 0.0
    %2275 = vmatpush1.msra.mxu0 %v1319
    %2276 = vmatprep.subr.mxu0 0.0
    %2277 = vmatpush1.msra.mxu0 %v1320
    %2278 = vmatprep.subr.mxu0 0.0
    %2279 = vmatpush1.msra.mxu0 %v1321
    %2280 = vmatprep.subr.mxu0 0.0
    %2281 = vmatpush1.msra.mxu0 %v1322
    %2282 = vmatprep.subr.mxu0 0.0
    %2283 = vmatpush1.msra.mxu0 0.0
    %2284 = vmatprep.subr.mxu0 0.0
    %2285 = vmatpush1.msra.mxu0 0.0
    %2286 = vmatprep.subr.mxu0 0.0
    %2287 = vmatpush1.msra.mxu0 0.0
    %2288 = vmatprep.subr.mxu0 0.0
    %2289 = vmatpush1.msra.mxu0 0.0
    %2290 = vmatprep.subr.mxu0 0.0
    %2291 = vmatpush1.msra.mxu0 0.0
    %2292 = vmatprep.subr.mxu0 0.0
    %2293 = vmatpush1.msra.mxu0 0.0
    %2294 = vmatprep.subr.mxu0 0.0
    %2295 = vmatpush1.msra.mxu0 0.0
    %2296 = vmatprep.subr.mxu0 0.0
    %2297 = vmatpush1.msra.mxu0 0.0
    %2298 = vmatprep.subr.mxu0 0.0
    %2299 = vmatpush1.msra.mxu0 0.0
    %2300 = vmatprep.subr.mxu0 0.0
    %2301 = vmatpush1.msra.mxu0 0.0
    %2302 = vmatprep.subr.mxu0 0.0
    %2303 = vmatpush1.msra.mxu0 0.0
    %2304 = vmatprep.subr.mxu0 0.0
    %2305 = vmatpush1.msra.mxu0 0.0
    %2306 = vmatprep.subr.mxu0 0.0
    %2307 = vmatpush1.msra.mxu0 0.0
    %2308 = vmatprep.subr.mxu0 0.0
    %2309 = vmatpush1.msra.mxu0 0.0
    %2310 = vmatprep.subr.mxu0 0.0
    %2311 = vmatpush1.msra.mxu0 0.0
    %2312 = vmatprep.subr.mxu0 0.0
    %2313 = vmatpush1.msra.mxu0 0.0
    %2314 = vmatprep.subr.mxu0 0.0
    %2315 = vmatpush1.msra.mxu0 0.0
    %2316 = vmatprep.subr.mxu0 0.0
    %2317 = vmatpush1.msra.mxu0 0.0
    %2318 = vmatprep.subr.mxu0 0.0
    %2319 = vmatpush1.msra.mxu0 0.0
    %2320 = vmatprep.subr.mxu0 0.0
    %2321 = vmatpush1.msra.mxu0 0.0
    %2322 = vmatprep.subr.mxu0 0.0
    %2323 = vmatpush1.msra.mxu0 0.0
    %2324 = vmatprep.subr.mxu0 0.0
    %2325 = vmatpush1.msra.mxu0 0.0
    %2326 = vmatprep.subr.mxu0 0.0
    %2327 = vmatpush1.msra.mxu0 0.0
    %2328 = vmatprep.subr.mxu0 0.0
    %2329 = vmatpush1.msra.mxu0 0.0
    %2330 = vmatprep.subr.mxu0 0.0
    %2331 = vmatpush1.msra.mxu0 0.0
    %2332 = vmatprep.subr.mxu0 0.0
    %2333 = vmatpush1.msra.mxu0 0.0
    %2334 = vmatprep.subr.mxu0 0.0
    %2335 = vmatpush1.msra.mxu0 0.0
    %2336 = vmatprep.subr.mxu0 0.0
    %2337 = vmatpush1.msra.mxu0 0.0
    %2338 = vmatprep.mubr.f32.mxu0 0.0
    %2339 = vmatmul.mubr.f32.gmra.mrb[0].mxu0 %v2269
    %v2340 = vpop.f32.mrb[0].mxu0
    %v2341 = vadd.f32 %v2267, %v2340
    %v2342 = vpop.f32.mrb[0].mxu0
    %2343 = vmatprep.mubr.f32.mxu0 0.0
    %2344 = vmatmul.mubr.f32.gmra.mrb[0].mxu0 %v2272
    %v2345 = vpop.f32.mrb[0].mxu0
    %v2346 = vadd.f32 %v2267, %v2345
    %v2347 = vpop.f32.mrb[0].mxu0
    %2348 = vdwg.mxu0
    %v2349 = vadd.f32 %v2341, %v1311
    %v2350 = vadd.f32 %v2346, %v1312
    %v2351 = vsel %vm60, %v2349, 0.0
    %2352 = vadd.xlane.f32.xlu0 %v2351
    %v2353 = vpop.xlane.xlu0 %2352
    %v2354 = vsel %vm60, %v2350, 0.0
    %2355 = vadd.xlane.f32.xlu0 %v2354
    %v2356 = vpop.xlane.xlu0 %2355
    %v2357 = vmul.f32 %v2353, %v1074
    %v2358 = vmul.f32 %v2356, %v1074
    %v2359 = vsub.f32 %v2349, %v2357
    %v2360 = vsub.f32 %v2350, %v2358
    %v2361 = vmul.f32 %v2359, %v2359
    %v2362 = vmul.f32 %v2360, %v2360
    %v2363 = vsel %vm60, %v2361, 0.0
    %2364 = vadd.xlane.f32.xlu0 %v2363
    %v2365 = vpop.xlane.xlu0 %2364
    %v2366 = vsel %vm60, %v2362, 0.0
    %2367 = vadd.xlane.f32.xlu0 %v2366
    %v2368 = vpop.xlane.xlu0 %2367
    %v2369 = vmul.f32 %v2365, %v1074
    %v2370 = vmul.f32 %v2368, %v1074
    %v2371 = vadd.f32 %v2369, 1e-05
    %v2372 = vadd.f32 %v2370, 1e-05
    %v2373 = vrsqrt.pop %v2371
    %v2374 = vrsqrt.pop %v2372
    %v2375 = vmul.f32 %v2359, %v2373
    %v2376 = vmul.f32 %v2360, %v2374
    %v2377 = vlaneseq
    %v2378 = vshrl.u32 %v2377, 7
    %v2379 = vsub.s32 1, %v2378
    %v2380 = vrot.slane %v1346, %v2379
    %v2381 = vmul.f32 %v2375, %v2380
    %v2382 = vmul.f32 %v2376, %v2380
    %v2383 = vlaneseq
    %v2384 = vshrl.u32 %v2383, 7
    %v2385 = vsub.s32 2, %v2384
    %v2386 = vrot.slane %v1346, %v2385
    %v2387 = vadd.f32 %v2381, %v2386
    %v2388 = vadd.f32 %v2382, %v2386
    %v2389 = vlaneseq
    %v2390 = vshrl.u32 %v2389, 7
    %v2391 = vsub.s32 3, %v2390
    %v2392 = vrot.slane %v1346, %v2391
    %v2394 = vsel %vm60, %v2387, 0
    %v2397 = vsel %vm60, %v2388, 0
    %2399 = vmatprep.subr.mxu0 0.0
    %2400 = vmatpush1.msra.mxu0 %v1324
    %2401 = vmatprep.subr.mxu0 0.0
    %2402 = vmatpush1.msra.mxu0 %v1325
    %2403 = vmatprep.subr.mxu0 0.0
    %2404 = vmatpush1.msra.mxu0 %v1326
    %2405 = vmatprep.subr.mxu0 0.0
    %2406 = vmatpush1.msra.mxu0 %v1327
    %2407 = vmatprep.subr.mxu0 0.0
    %2408 = vmatpush1.msra.mxu0 0.0
    %2409 = vmatprep.subr.mxu0 0.0
    %2410 = vmatpush1.msra.mxu0 0.0
    %2411 = vmatprep.subr.mxu0 0.0
    %2412 = vmatpush1.msra.mxu0 0.0
    %2413 = vmatprep.subr.mxu0 0.0
    %2414 = vmatpush1.msra.mxu0 0.0
    %2415 = vmatprep.subr.mxu0 0.0
    %2416 = vmatpush1.msra.mxu0 0.0
    %2417 = vmatprep.subr.mxu0 0.0
    %2418 = vmatpush1.msra.mxu0 0.0
    %2419 = vmatprep.subr.mxu0 0.0
    %2420 = vmatpush1.msra.mxu0 0.0
    %2421 = vmatprep.subr.mxu0 0.0
    %2422 = vmatpush1.msra.mxu0 0.0
    %2423 = vmatprep.subr.mxu0 0.0
    %2424 = vmatpush1.msra.mxu0 0.0
    %2425 = vmatprep.subr.mxu0 0.0
    %2426 = vmatpush1.msra.mxu0 0.0
    %2427 = vmatprep.subr.mxu0 0.0
    %2428 = vmatpush1.msra.mxu0 0.0
    %2429 = vmatprep.subr.mxu0 0.0
    %2430 = vmatpush1.msra.mxu0 0.0
    %2431 = vmatprep.subr.mxu0 0.0
    %2432 = vmatpush1.msra.mxu0 0.0
    %2433 = vmatprep.subr.mxu0 0.0
    %2434 = vmatpush1.msra.mxu0 0.0
    %2435 = vmatprep.subr.mxu0 0.0
    %2436 = vmatpush1.msra.mxu0 0.0
    %2437 = vmatprep.subr.mxu0 0.0
    %2438 = vmatpush1.msra.mxu0 0.0
    %2439 = vmatprep.subr.mxu0 0.0
    %2440 = vmatpush1.msra.mxu0 0.0
    %2441 = vmatprep.subr.mxu0 0.0
    %2442 = vmatpush1.msra.mxu0 0.0
    %2443 = vmatprep.subr.mxu0 0.0
    %2444 = vmatpush1.msra.mxu0 0.0
    %2445 = vmatprep.subr.mxu0 0.0
    %2446 = vmatpush1.msra.mxu0 0.0
    %2447 = vmatprep.subr.mxu0 0.0
    %2448 = vmatpush1.msra.mxu0 0.0
    %2449 = vmatprep.subr.mxu0 0.0
    %2450 = vmatpush1.msra.mxu0 0.0
    %2451 = vmatprep.subr.mxu0 0.0
    %2452 = vmatpush1.msra.mxu0 0.0
    %2453 = vmatprep.subr.mxu0 0.0
    %2454 = vmatpush1.msra.mxu0 0.0
    %2455 = vmatprep.subr.mxu0 0.0
    %2456 = vmatpush1.msra.mxu0 0.0
    %2457 = vmatprep.subr.mxu0 0.0
    %2458 = vmatpush1.msra.mxu0 0.0
    %2459 = vmatprep.subr.mxu0 0.0
    %2460 = vmatpush1.msra.mxu0 0.0
    %2461 = vmatprep.subr.mxu0 0.0
    %2462 = vmatpush1.msra.mxu0 0.0
    %2463 = vmatprep.mubr.f32.mxu0 0.0
    %2464 = vmatmul.mubr.f32.gmra.mrb[0].mxu0 %v2394
    %v2465 = vpop.f32.mrb[0].mxu0
    %v2466 = vadd.f32 %v2392, %v2465
    %v2467 = vpop.f32.mrb[0].mxu0
    %2468 = vmatprep.mubr.f32.mxu0 0.0
    %2469 = vmatmul.mubr.f32.gmra.mrb[0].mxu0 %v2397
    %v2470 = vpop.f32.mrb[0].mxu0
    %v2471 = vadd.f32 %v2392, %v2470
    %v2472 = vpop.f32.mrb[0].mxu0
    %2473 = vdwg.mxu0
    %v2474 = vmax.f32 %v2466, 0.0
    %v2475 = vmax.f32 %v2471, 0.0
    %v2476 = vlaneseq
    %v2477 = vshrl.u32 %v2476, 7
    %v2478 = vsub.s32 4, %v2477
    %v2479 = vrot.slane %v1346, %v2478
    %2480 = vmatprep.subr.mxu0 0.0
    %2481 = vmatpush1.msra.mxu0 %v1329
    %2482 = vmatprep.subr.mxu0 0.0
    %2483 = vmatpush1.msra.mxu0 %v1330
    %2484 = vmatprep.subr.mxu0 0.0
    %2485 = vmatpush1.msra.mxu0 %v1331
    %2486 = vmatprep.subr.mxu0 0.0
    %2487 = vmatpush1.msra.mxu0 %v1332
    %2488 = vmatprep.subr.mxu0 0.0
    %2489 = vmatpush1.msra.mxu0 %v1333
    %2490 = vmatprep.subr.mxu0 0.0
    %2491 = vmatpush1.msra.mxu0 %v1334
    %2492 = vmatprep.subr.mxu0 0.0
    %2493 = vmatpush1.msra.mxu0 %v1335
    %2494 = vmatprep.subr.mxu0 0.0
    %2495 = vmatpush1.msra.mxu0 %v1336
    %2496 = vmatprep.subr.mxu0 0.0
    %2497 = vmatpush1.msra.mxu0 %v1337
    %2498 = vmatprep.subr.mxu0 0.0
    %2499 = vmatpush1.msra.mxu0 %v1338
    %2500 = vmatprep.subr.mxu0 0.0
    %2501 = vmatpush1.msra.mxu0 %v1339
    %2502 = vmatprep.subr.mxu0 0.0
    %2503 = vmatpush1.msra.mxu0 %v1340
    %2504 = vmatprep.subr.mxu0 0.0
    %2505 = vmatpush1.msra.mxu0 %v1341
    %2506 = vmatprep.subr.mxu0 0.0
    %2507 = vmatpush1.msra.mxu0 %v1342
    %2508 = vmatprep.subr.mxu0 0.0
    %2509 = vmatpush1.msra.mxu0 %v1343
    %2510 = vmatprep.subr.mxu0 0.0
    %2511 = vmatpush1.msra.mxu0 %v1344
    %2512 = vmatprep.subr.mxu0 0.0
    %2513 = vmatpush1.msra.mxu0 0.0
    %2514 = vmatprep.subr.mxu0 0.0
    %2515 = vmatpush1.msra.mxu0 0.0
    %2516 = vmatprep.subr.mxu0 0.0
    %2517 = vmatpush1.msra.mxu0 0.0
    %2518 = vmatprep.subr.mxu0 0.0
    %2519 = vmatpush1.msra.mxu0 0.0
    %2520 = vmatprep.subr.mxu0 0.0
    %2521 = vmatpush1.msra.mxu0 0.0
    %2522 = vmatprep.subr.mxu0 0.0
    %2523 = vmatpush1.msra.mxu0 0.0
    %2524 = vmatprep.subr.mxu0 0.0
    %2525 = vmatpush1.msra.mxu0 0.0
    %2526 = vmatprep.subr.mxu0 0.0
    %2527 = vmatpush1.msra.mxu0 0.0
    %2528 = vmatprep.subr.mxu0 0.0
    %2529 = vmatpush1.msra.mxu0 0.0
    %2530 = vmatprep.subr.mxu0 0.0
    %2531 = vmatpush1.msra.mxu0 0.0
    %2532 = vmatprep.subr.mxu0 0.0
    %2533 = vmatpush1.msra.mxu0 0.0
    %2534 = vmatprep.subr.mxu0 0.0
    %2535 = vmatpush1.msra.mxu0 0.0
    %2536 = vmatprep.subr.mxu0 0.0
    %2537 = vmatpush1.msra.mxu0 0.0
    %2538 = vmatprep.subr.mxu0 0.0
    %2539 = vmatpush1.msra.mxu0 0.0
    %2540 = vmatprep.subr.mxu0 0.0
    %2541 = vmatpush1.msra.mxu0 0.0
    %2542 = vmatprep.subr.mxu0 0.0
    %2543 = vmatpush1.msra.mxu0 0.0
    %2544 = vmatprep.mubr.f32.mxu0 0.0
    %2545 = vmatmul.mubr.f32.gmra.mrb[0].mxu0 %v2474
    %v2546 = vpop.f32.mrb[0].mxu0
    %v2547 = vadd.f32 %v2479, %v2546
    %v2548 = vpop.f32.mrb[0].mxu0
    %2549 = vmatprep.mubr.f32.mxu0 0.0
    %2550 = vmatmul.mubr.f32.gmra.mrb[0].mxu0 %v2475
    %v2551 = vpop.f32.mrb[0].mxu0
    %v2552 = vadd.f32 %v2479, %v2551
    %v2553 = vpop.f32.mrb[0].mxu0
    %2554 = vdwg.mxu0
    %v2555 = vadd.f32 %v2547, %v2387
    %v2556 = vadd.f32 %v2552, %v2388
    %v2557 = vsel %vm60, %v2555, 0.0
    %2558 = vadd.xlane.f32.xlu0 %v2557
    %v2559 = vpop.xlane.xlu0 %2558
    %v2560 = vsel %vm60, %v2556, 0.0
    %2561 = vadd.xlane.f32.xlu0 %v2560
    %v2562 = vpop.xlane.xlu0 %2561
    %v2563 = vmul.f32 %v2559, %v1074
    %v2564 = vmul.f32 %v2562, %v1074
    %v2565 = vsub.f32 %v2555, %v2563
    %v2566 = vsub.f32 %v2556, %v2564
    %v2567 = vmul.f32 %v2565, %v2565
    %v2568 = vmul.f32 %v2566, %v2566
    %v2569 = vsel %vm60, %v2567, 0.0
    %2570 = vadd.xlane.f32.xlu0 %v2569
    %v2571 = vpop.xlane.xlu0 %2570
    %v2572 = vsel %vm60, %v2568, 0.0
    %2573 = vadd.xlane.f32.xlu0 %v2572
    %v2574 = vpop.xlane.xlu0 %2573
    %v2575 = vmul.f32 %v2571, %v1074
    %v2576 = vmul.f32 %v2574, %v1074
    %v2577 = vadd.f32 %v2575, 1e-05
    %v2578 = vadd.f32 %v2576, 1e-05
    %v2579 = vrsqrt.pop %v2577
    %v2580 = vrsqrt.pop %v2578
    %v2581 = vmul.f32 %v2565, %v2579
    %v2582 = vmul.f32 %v2566, %v2580
    %v2583 = vlaneseq
    %v2584 = vshrl.u32 %v2583, 7
    %v2585 = vsub.s32 5, %v2584
    %v2586 = vrot.slane %v1346, %v2585
    %v2587 = vmul.f32 %v2581, %v2586
    %v2588 = vmul.f32 %v2582, %v2586
    %v2589 = vlaneseq
    %v2590 = vshrl.u32 %v2589, 7
    %v2591 = vsub.s32 6, %v2590
    %v2592 = vrot.slane %v1346, %v2591
    %v2593 = vadd.f32 %v2587, %v2592
    %v2594 = vadd.f32 %v2588, %v2592
    %2595 = vst.msk [vmem:[#allocation2] sm:$0xff] %vm60, %v2593
    %2596 = vst.msk [vmem:[#allocation2 + $0x8] sm:$0xff] %vm60, %v2594
    // Predicated region
    $region30: #{encoder_forward.1} parent=1 // pred_check
      _
    $region31: #{encoder_forward.1} parent=1 // pred_check_branch
      %2598 = sbr.rel (0) target = $region33
    $region32: #{encoder_forward.1} parent=1 // pred_region
      %s2600 = ssub.s32 256, 256
      %2601 = vsyncadd [#allocation3], %s2600
      %s2602 = sshll.u32 [#allocation2], 4
      %s2603 = int_to_ptr.vmem [resolvable:$true] %s2602
      %2608 = dma.vmem_to_hbm [thread:$0]  %s2603, 256, %s7, [#allocation3], 128, 128, 8
    $region33: #{encoder_forward.1} parent=1 // pred_fallthru
      _
    // Predicated region
    $region34: #{encoder_forward.1} parent=1 // pred_check
      _
    $region35: #{encoder_forward.1} parent=1 // pred_check_branch
      %2610 = sbr.rel (0) target = $region37
    $region36: #{encoder_forward.1} parent=1 // pred_region
      %2611 = dma.done [#allocation3], 256
    $region37: #{encoder_forward.1} parent=1 // pred_fallthru
      _
    %2612 = vsyncpa [#allocation3], 1

</llo_original>
